<compile_context>
chip_gen: v5e
topology: v5e:2x2
jax: 0.10.0
libtpu: 0.0.40
codegen_flags: <defaults>
</compile_context>

<pallas_src>
import numpy as np
import jax
import jax.numpy as jnp
from jax.experimental import pallas as pl
from jax.experimental.pallas import tpu as pltpu


def lstm_kernel(x_ref, wih1_ref, b1_ref, wwave_ref, b2_ref, wfc_ref, bfc_ref,
                out_ref):
    """One batch-chunk; whole sequence + all weights resident in VMEM.

    x_ref    : (T, B, 1)    time-major input block
    wih1_ref : (1, 4*Hp)    layer-1 input weights (gate order i|f|g|o, lane-padded), f32
    b1_ref   : (1, 4*Hp)    layer-1 bias (b_ih + b_hh), f32
    wwave_ref: (2*Hp, 8*Hp) fused RHS [[W_ih2 | W_hh1], [W_hh2 | 0]], bf16
    b2_ref   : (1, 4*Hp)    layer-2 bias, f32
    wfc_ref  : (1, Hp)      final Linear weight (row vector, lane-padded), f32
    bfc_ref  : (1, 1)
    out_ref  : (B, 1)
    """
    B = out_ref.shape[0]
    T = x_ref.shape[0]
    Hp = wwave_ref.shape[0] // 2          # padded hidden dim (128)

    w_wave = wwave_ref[...]               # (2Hp, 8Hp) bf16
    b2 = b2_ref[...]                      # (1, 4Hp)   f32
    # Hoist sublane broadcasts of the layer-1 input weights/bias out of the
    # unrolled loop (JAX does not CSE broadcast_in_dim).
    wih1_b = jnp.broadcast_to(wih1_ref[...], (B, 4 * Hp))
    b1_b = jnp.broadcast_to(b1_ref[...], (B, 4 * Hp))

    def xw1(t):                           # layer-1 input projection, pure VPU
        return x_ref[t] * wih1_b + b1_b   # (B,1) * (B,4Hp) -> (B,4Hp)

    def sig(v):                           # one EUP tanh push + VPU fma per gate
        return 0.5 * jnp.tanh(0.5 * v) + 0.5

    def cell(pre, c):                     # PyTorch gate order: i | f | g | o
        i = sig(pre[:, 0 * Hp:1 * Hp])
        f = sig(pre[:, 1 * Hp:2 * Hp])
        g = jnp.tanh(pre[:, 2 * Hp:3 * Hp])
        o = sig(pre[:, 3 * Hp:4 * Hp])
        c_new = f * c + i * g
        return o * jnp.tanh(c_new), c_new

    def cell_first(pre):                  # c_prev == 0: drop f*c, skip f gate
        i = sig(pre[:, 0 * Hp:1 * Hp])
        g = jnp.tanh(pre[:, 2 * Hp:3 * Hp])
        o = sig(pre[:, 3 * Hp:4 * Hp])
        c_new = i * g
        return o * jnp.tanh(c_new), c_new

    # Skewed prologue (layer 1 at t = 0): h1(-1) = 0 -> no recurrent matmul.
    h1, c1 = cell_first(xw1(0))

    # Fully unrolled recurrence (T is static at trace time).  One fused MXU
    # matmul per step yields both pre2(t) and the recurrent part of pre1(t+1).
    for t in range(T):
        if t == 0:
            # h2(-1) == 0 -> only the h1 rows of W_wave contribute (half K).
            wave = jnp.dot(h1.astype(jnp.bfloat16), wwave_ref[:Hp, :],
                           preferred_element_type=jnp.float32)
        else:
            h12 = jnp.concatenate([h1, h2], axis=-1).astype(jnp.bfloat16)
            wave = jnp.dot(h12, w_wave, preferred_element_type=jnp.float32)

        # Layer 2 at step t.
        pre2 = wave[:, :4 * Hp] + b2
        if t == 0:
            h2, c2 = cell_first(pre2)
        else:
            h2, c2 = cell(pre2, c2)

        # Layer 1 at step t+1 (its recurrent term came out of the same wave).
        if t + 1 < T:
            pre1 = xw1(t + 1) + wave[:, 4 * Hp:]
            h1, c1 = cell(pre1, c1)

    # Final Linear head: VPU multiply + lane reduce (avoids an N=1 MXU matmul).
    # Padded lanes of h2 and wfc are zero, so the reduce over Hp is exact.
    out_ref[...] = (jnp.sum(h2 * wfc_ref[...], axis=-1, keepdims=True)
                    + bfc_ref[...])


def lstm_regressor_forward(x, kp, b_blk=8):
    """x: (B, T) float32  ->  (B,) float32 using the packed kernel params."""
    B, T = x.shape
    assert B % b_blk == 0, "batch must be a multiple of the batch block"
    x_tm = jnp.transpose(x)[:, :, None].astype(jnp.float32)   # (T, B, 1)

    def full(arr):   # whole-array block, resident across the batch grid axis
        return pl.BlockSpec(arr.shape, lambda i: (0,) * arr.ndim)

    out = pl.pallas_call(
        lstm_kernel,
        out_shape=jax.ShapeDtypeStruct((B, 1), jnp.float32),
        grid=(B // b_blk,),
        in_specs=[
            pl.BlockSpec((T, b_blk, 1), lambda i: (0, i, 0)),
            full(kp["wih1"]), full(kp["b1"]), full(kp["w_wave"]),
            full(kp["b2"]), full(kp["wfc"]), full(kp["bfc"]),
        ],
        out_specs=pl.BlockSpec((b_blk, 1), lambda i: (i, 0)),
        compiler_params=pltpu.CompilerParams(
            # Batch chunks are independent -> second TensorCore on v7x.
            dimension_semantics=("parallel",)),
    )(x_tm, kp["wih1"], kp["b1"], kp["w_wave"], kp["b2"], kp["wfc"], kp["bfc"])
    return out[:, 0]


def init_params(key, input_dim=1, hidden_dim=64, output_dim=1):
    """PyTorch-shaped parameters, uniform(-1/sqrt(H), 1/sqrt(H)) like nn.LSTM."""
    H = hidden_dim
    ks = jax.random.split(key, 10)
    s = 1.0 / np.sqrt(H)

    def u(k, shape):
        return jax.random.uniform(k, shape, jnp.float32, -s, s)

    return dict(
        w_ih1=u(ks[0], (4 * H, input_dim)), w_hh1=u(ks[1], (4 * H, H)),
        b_ih1=u(ks[2], (4 * H,)),           b_hh1=u(ks[3], (4 * H,)),
        w_ih2=u(ks[4], (4 * H, H)),         w_hh2=u(ks[5], (4 * H, H)),
        b_ih2=u(ks[6], (4 * H,)),           b_hh2=u(ks[7], (4 * H,)),
        w_fc=u(ks[8], (output_dim, H)),     b_fc=u(ks[9], (output_dim,)),
    )


def pack_params(p, hidden_pad=128):
    """Repack PyTorch-shaped params into the kernel layout.

    Each 64-wide gate is zero-padded to 128 lanes so gate slices land on vreg
    boundaries; padded weight rows/cols and bias lanes are zero so padded h/c
    lanes stay exactly 0 through the recurrence.  The two per-step matmuls are
    fused into one RHS:  W_wave = [[W_ih2 | W_hh1], [W_hh2 | 0]]  (2Hp, 8Hp).
    """
    H = p["w_hh1"].shape[1]
    Hp = hidden_pad

    def pack_w(w):        # (4H, K) -> (K, 4Hp): per-gate transpose + lane pad
        gates = [jnp.pad(w[k * H:(k + 1) * H, :].T, ((0, 0), (0, Hp - H)))
                 for k in range(4)]
        return jnp.concatenate(gates, axis=-1)

    def pack_b(b):        # (4H,) -> (1, 4Hp) with zero-padded gate lanes
        gates = [jnp.pad(b[k * H:(k + 1) * H], (0, Hp - H)) for k in range(4)]
        return jnp.concatenate(gates)[None, :]

    def pad_rows(w):      # (H, 4Hp) -> (Hp, 4Hp), zero rows for padded h lanes
        return jnp.pad(w, ((0, Hp - H), (0, 0)))

    wih1 = pack_w(p["w_ih1"])                                     # (1, 4Hp) f32
    b1 = pack_b(p["b_ih1"] + p["b_hh1"])                          # (1, 4Hp) f32
    # Fused wave RHS: cols [0:4Hp] -> layer-2 pre-activations for [h1|h2];
    # cols [4Hp:8Hp] -> layer-1 recurrent pre-activations (h1 rows only).
    w2_block = jnp.concatenate([pad_rows(pack_w(p["w_ih2"])),
                                pad_rows(pack_w(p["w_hh2"]))], axis=0)
    whh1_block = jnp.concatenate([pad_rows(pack_w(p["w_hh1"])),
                                  jnp.zeros((Hp, 4 * Hp), jnp.float32)], axis=0)
    w_wave = jnp.concatenate([w2_block, whh1_block],
                             axis=-1).astype(jnp.bfloat16)        # (2Hp, 8Hp)
    b2 = pack_b(p["b_ih2"] + p["b_hh2"])                          # (1, 4Hp) f32
    wfc = jnp.pad(p["w_fc"], ((0, 0), (0, Hp - H)))               # (1, Hp)  f32
    bfc = p["b_fc"][None, :]                                      # (1, 1)
    return dict(wih1=wih1, b1=b1, w_wave=w_wave, b2=b2, wfc=wfc, bfc=bfc)


def reference_forward(x, p, matmul_dtype=jnp.float32):
    """Pure-JAX reference. matmul_dtype=bf16 mirrors the kernel's MXU precision."""
    B, T = x.shape
    H = p["w_hh1"].shape[1]
    md = matmul_dtype
    hp = jax.lax.Precision.HIGHEST

    wih1 = p["w_ih1"].T                      # (1, 4H) f32 (VPU path in kernel)
    whh1 = p["w_hh1"].T.astype(md)
    wih2 = p["w_ih2"].T.astype(md)
    whh2 = p["w_hh2"].T.astype(md)
    b1 = (p["b_ih1"] + p["b_hh1"])[None, :]
    b2 = (p["b_ih2"] + p["b_hh2"])[None, :]

    def cell(pre, c):
        i = jax.nn.sigmoid(pre[:, 0 * H:1 * H])
        f = jax.nn.sigmoid(pre[:, 1 * H:2 * H])
        g = jnp.tanh(pre[:, 2 * H:3 * H])
        o = jax.nn.sigmoid(pre[:, 3 * H:4 * H])
        c_new = f * c + i * g
        return o * jnp.tanh(c_new), c_new

    h1 = c1 = h2 = c2 = jnp.zeros((B, H), jnp.float32)
    for t in range(T):
        x_t = x[:, t:t + 1]                  # (B, 1); input_dim == 1
        pre1 = (x_t * wih1
                + jnp.dot(h1.astype(md), whh1,
                          preferred_element_type=jnp.float32, precision=hp)
                + b1)
        h1, c1 = cell(pre1, c1)
        pre2 = (jnp.dot(h1.astype(md), wih2,
                        preferred_element_type=jnp.float32, precision=hp)
                + jnp.dot(h2.astype(md), whh2,
                          preferred_element_type=jnp.float32, precision=hp)
                + b2)
        h2, c2 = cell(pre2, c2)

    out = h2 @ p["w_fc"].T + p["b_fc"][None, :]
    return out[:, 0]


if __name__ == "__main__":
    key = jax.random.PRNGKey(0)
    k_param, k_x = jax.random.split(key)

    B, T, H = 16, 12, 64         # batch, sequence length, hidden_dim (module default)
    params = init_params(k_param, input_dim=1, hidden_dim=H, output_dim=1)
    kparams = pack_params(params, hidden_pad=128)
    x = jax.random.normal(k_x, (B, T), dtype=jnp.float32)

    y = jax.block_until_ready(lstm_regressor_forward(x, kparams, b_blk=8))

    # Tight check against a reference using the same bf16-operand / f32-accumulate
    # MXU precision as the kernel.
    y_ref_bf16 = reference_forward(x, params, matmul_dtype=jnp.bfloat16)
    np.testing.assert_allclose(np.asarray(y), np.asarray(y_ref_bf16),
                               rtol=1e-2, atol=1e-2)

    # Looser check against the full-f32 semantics of the original module
    # (bf16 MXU operands accumulate small rounding over the 12-step recurrence).
    y_ref_f32 = reference_forward(x, params, matmul_dtype=jnp.float32)
    np.testing.assert_allclose(np.asarray(y), np.asarray(y_ref_f32),
                               rtol=5e-2, atol=5e-2)

    assert y.shape == (B,)
    print("KERNEL_OK")
</pallas_src>

<mosaic_0001>
module attributes {stable_mosaic.version = 11 : i64} {
  func.func @lstm_kernel(%arg0: i32, %arg1: memref<12x8x1xf32, #tpu.memory_space<vmem>>, %arg2: memref<1x512xf32, #tpu.memory_space<vmem>>, %arg3: memref<1x512xf32, #tpu.memory_space<vmem>>, %arg4: memref<256x1024xbf16, #tpu.memory_space<vmem>>, %arg5: memref<1x512xf32, #tpu.memory_space<vmem>>, %arg6: memref<1x128xf32, #tpu.memory_space<vmem>>, %arg7: memref<1x1xf32, #tpu.memory_space<vmem>>, %arg8: memref<8x1xf32, #tpu.memory_space<vmem>>) attributes {dimension_semantics = [#tpu.dimension_semantics<parallel>], iteration_bounds = array<i64: 2>, scalar_prefetch = 0 : i64, scratch_operands = 0 : i64, tpu.core_type = #tpu.core_type<tc>, window_params = [{transform_indices = @transform_0, window_bounds = array<i64: 12, 8, 1>}, {pipeline_mode = #tpu.pipeline_mode<synchronous>, transform_indices = @transform_1, window_bounds = array<i64: 1, 512>}, {pipeline_mode = #tpu.pipeline_mode<synchronous>, transform_indices = @transform_2, window_bounds = array<i64: 1, 512>}, {pipeline_mode = #tpu.pipeline_mode<synchronous>, transform_indices = @transform_3, window_bounds = array<i64: 256, 1024>}, {pipeline_mode = #tpu.pipeline_mode<synchronous>, transform_indices = @transform_4, window_bounds = array<i64: 1, 512>}, {pipeline_mode = #tpu.pipeline_mode<synchronous>, transform_indices = @transform_5, window_bounds = array<i64: 1, 128>}, {pipeline_mode = #tpu.pipeline_mode<synchronous>, transform_indices = @transform_6, window_bounds = array<i64: 1, 1>}, {transform_indices = @transform_7, window_bounds = array<i64: 8, 1>}]} {
    %c0 = arith.constant 0 : index
    %c0_0 = arith.constant 0 : index
    %0 = vector.load %arg4[%c0, %c0_0] : memref<256x1024xbf16, #tpu.memory_space<vmem>>, vector<256x1024xbf16>
    %c0_1 = arith.constant 0 : index
    %c0_2 = arith.constant 0 : index
    %1 = vector.load %arg5[%c0_1, %c0_2] : memref<1x512xf32, #tpu.memory_space<vmem>>, vector<1x512xf32>
    %c0_3 = arith.constant 0 : index
    %c0_4 = arith.constant 0 : index
    %2 = vector.load %arg2[%c0_3, %c0_4] : memref<1x512xf32, #tpu.memory_space<vmem>>, vector<1x512xf32>
    %3 = vector.shape_cast %2 : vector<1x512xf32> to vector<1x512xf32>
    %4 = vector.broadcast %3 : vector<1x512xf32> to vector<8x512xf32>
    %c0_5 = arith.constant 0 : index
    %c0_6 = arith.constant 0 : index
    %5 = vector.load %arg3[%c0_5, %c0_6] : memref<1x512xf32, #tpu.memory_space<vmem>>, vector<1x512xf32>
    %6 = vector.shape_cast %5 : vector<1x512xf32> to vector<1x512xf32>
    %7 = vector.broadcast %6 : vector<1x512xf32> to vector<8x512xf32>
    %c0_7 = arith.constant 0 : index
    %c0_8 = arith.constant 0 : index
    %c0_9 = arith.constant 0 : index
    %8 = vector.load %arg1[%c0_7, %c0_8, %c0_9] : memref<12x8x1xf32, #tpu.memory_space<vmem>>, vector<1x8x1xf32>
    %9 = vector.shape_cast %8 : vector<1x8x1xf32> to vector<8x1xf32>
    %10 = vector.broadcast %9 : vector<8x1xf32> to vector<8x512xf32>
    %11 = arith.mulf %10, %4 : vector<8x512xf32>
    %12 = arith.addf %11, %7 : vector<8x512xf32>
    %13 = vector.extract_strided_slice %12 {offsets = [0, 0], sizes = [8, 128], strides = [1, 1]} : vector<8x512xf32> to vector<8x128xf32>
    %cst = arith.constant 5.000000e-01 : f32
    %14 = vector.broadcast %cst : f32 to vector<8x128xf32>
    %15 = arith.mulf %14, %13 : vector<8x128xf32>
    %16 = math.tanh %15 : vector<8x128xf32>
    %cst_10 = arith.constant 5.000000e-01 : f32
    %17 = vector.broadcast %cst_10 : f32 to vector<8x128xf32>
    %18 = arith.mulf %17, %16 : vector<8x128xf32>
    %cst_11 = arith.constant 5.000000e-01 : f32
    %19 = vector.broadcast %cst_11 : f32 to vector<8x128xf32>
    %20 = arith.addf %18, %19 : vector<8x128xf32>
    %21 = vector.extract_strided_slice %12 {offsets = [0, 256], sizes = [8, 128], strides = [1, 1]} : vector<8x512xf32> to vector<8x128xf32>
    %22 = math.tanh %21 : vector<8x128xf32>
    %23 = vector.extract_strided_slice %12 {offsets = [0, 384], sizes = [8, 128], strides = [1, 1]} : vector<8x512xf32> to vector<8x128xf32>
    %cst_12 = arith.constant 5.000000e-01 : f32
    %24 = vector.broadcast %cst_12 : f32 to vector<8x128xf32>
    %25 = arith.mulf %24, %23 : vector<8x128xf32>
    %26 = math.tanh %25 : vector<8x128xf32>
    %cst_13 = arith.constant 5.000000e-01 : f32
    %27 = vector.broadcast %cst_13 : f32 to vector<8x128xf32>
    %28 = arith.mulf %27, %26 : vector<8x128xf32>
    %cst_14 = arith.constant 5.000000e-01 : f32
    %29 = vector.broadcast %cst_14 : f32 to vector<8x128xf32>
    %30 = arith.addf %28, %29 : vector<8x128xf32>
    %31 = arith.mulf %20, %22 : vector<8x128xf32>
    %32 = math.tanh %31 : vector<8x128xf32>
    %33 = arith.mulf %30, %32 : vector<8x128xf32>
    %34 = arith.truncf %33 : vector<8x128xf32> to vector<8x128xbf16>
    %c0_15 = arith.constant 0 : index
    %c0_16 = arith.constant 0 : index
    %35 = vector.load %arg4[%c0_15, %c0_16] : memref<256x1024xbf16, #tpu.memory_space<vmem>>, vector<128x1024xbf16>
    %cst_17 = arith.constant dense<0.000000e+00> : vector<8x1024xf32>
    %36 = tpu.matmul %34, %35, %cst_17 {dimension_numbers = #tpu.dot_dimension_numbers<[1], [0], [0], [1], [0, 0, 1, 1], [], []>} : vector<8x128xbf16>, vector<128x1024xbf16>, vector<8x1024xf32> -> vector<8x1024xf32>
    %37 = vector.extract_strided_slice %36 {offsets = [0, 0], sizes = [8, 512], strides = [1, 1]} : vector<8x1024xf32> to vector<8x512xf32>
    %38 = vector.broadcast %1 : vector<1x512xf32> to vector<8x512xf32>
    %39 = arith.addf %37, %38 : vector<8x512xf32>
    %40 = vector.extract_strided_slice %39 {offsets = [0, 0], sizes = [8, 128], strides = [1, 1]} : vector<8x512xf32> to vector<8x128xf32>
    %cst_18 = arith.constant 5.000000e-01 : f32
    %41 = vector.broadcast %cst_18 : f32 to vector<8x128xf32>
    %42 = arith.mulf %41, %40 : vector<8x128xf32>
    %43 = math.tanh %42 : vector<8x128xf32>
    %cst_19 = arith.constant 5.000000e-01 : f32
    %44 = vector.broadcast %cst_19 : f32 to vector<8x128xf32>
    %45 = arith.mulf %44, %43 : vector<8x128xf32>
    %cst_20 = arith.constant 5.000000e-01 : f32
    %46 = vector.broadcast %cst_20 : f32 to vector<8x128xf32>
    %47 = arith.addf %45, %46 : vector<8x128xf32>
    %48 = vector.extract_strided_slice %39 {offsets = [0, 256], sizes = [8, 128], strides = [1, 1]} : vector<8x512xf32> to vector<8x128xf32>
    %49 = math.tanh %48 : vector<8x128xf32>
    %50 = vector.extract_strided_slice %39 {offsets = [0, 384], sizes = [8, 128], strides = [1, 1]} : vector<8x512xf32> to vector<8x128xf32>
    %cst_21 = arith.constant 5.000000e-01 : f32
    %51 = vector.broadcast %cst_21 : f32 to vector<8x128xf32>
    %52 = arith.mulf %51, %50 : vector<8x128xf32>
    %53 = math.tanh %52 : vector<8x128xf32>
    %cst_22 = arith.constant 5.000000e-01 : f32
    %54 = vector.broadcast %cst_22 : f32 to vector<8x128xf32>
    %55 = arith.mulf %54, %53 : vector<8x128xf32>
    %cst_23 = arith.constant 5.000000e-01 : f32
    %56 = vector.broadcast %cst_23 : f32 to vector<8x128xf32>
    %57 = arith.addf %55, %56 : vector<8x128xf32>
    %58 = arith.mulf %47, %49 : vector<8x128xf32>
    %59 = math.tanh %58 : vector<8x128xf32>
    %60 = arith.mulf %57, %59 : vector<8x128xf32>
    %c1 = arith.constant 1 : index
    %c0_24 = arith.constant 0 : index
    %c0_25 = arith.constant 0 : index
    %61 = vector.load %arg1[%c1, %c0_24, %c0_25] : memref<12x8x1xf32, #tpu.memory_space<vmem>>, vector<1x8x1xf32>
    %62 = vector.shape_cast %61 : vector<1x8x1xf32> to vector<8x1xf32>
    %63 = vector.broadcast %62 : vector<8x1xf32> to vector<8x512xf32>
    %64 = arith.mulf %63, %4 : vector<8x512xf32>
    %65 = arith.addf %64, %7 : vector<8x512xf32>
    %66 = vector.extract_strided_slice %36 {offsets = [0, 512], sizes = [8, 512], strides = [1, 1]} : vector<8x1024xf32> to vector<8x512xf32>
    %67 = arith.addf %65, %66 : vector<8x512xf32>
    %68 = vector.extract_strided_slice %67 {offsets = [0, 0], sizes = [8, 128], strides = [1, 1]} : vector<8x512xf32> to vector<8x128xf32>
    %cst_26 = arith.constant 5.000000e-01 : f32
    %69 = vector.broadcast %cst_26 : f32 to vector<8x128xf32>
    %70 = arith.mulf %69, %68 : vector<8x128xf32>
    %71 = math.tanh %70 : vector<8x128xf32>
    %cst_27 = arith.constant 5.000000e-01 : f32
    %72 = vector.broadcast %cst_27 : f32 to vector<8x128xf32>
    %73 = arith.mulf %72, %71 : vector<8x128xf32>
    %cst_28 = arith.constant 5.000000e-01 : f32
    %74 = vector.broadcast %cst_28 : f32 to vector<8x128xf32>
    %75 = arith.addf %73, %74 : vector<8x128xf32>
    %76 = vector.extract_strided_slice %67 {offsets = [0, 128], sizes = [8, 128], strides = [1, 1]} : vector<8x512xf32> to vector<8x128xf32>
    %cst_29 = arith.constant 5.000000e-01 : f32
    %77 = vector.broadcast %cst_29 : f32 to vector<8x128xf32>
    %78 = arith.mulf %77, %76 : vector<8x128xf32>
    %79 = math.tanh %78 : vector<8x128xf32>
    %cst_30 = arith.constant 5.000000e-01 : f32
    %80 = vector.broadcast %cst_30 : f32 to vector<8x128xf32>
    %81 = arith.mulf %80, %79 : vector<8x128xf32>
    %cst_31 = arith.constant 5.000000e-01 : f32
    %82 = vector.broadcast %cst_31 : f32 to vector<8x128xf32>
    %83 = arith.addf %81, %82 : vector<8x128xf32>
    %84 = vector.extract_strided_slice %67 {offsets = [0, 256], sizes = [8, 128], strides = [1, 1]} : vector<8x512xf32> to vector<8x128xf32>
    %85 = math.tanh %84 : vector<8x128xf32>
    %86 = vector.extract_strided_slice %67 {offsets = [0, 384], sizes = [8, 128], strides = [1, 1]} : vector<8x512xf32> to vector<8x128xf32>
    %cst_32 = arith.constant 5.000000e-01 : f32
    %87 = vector.broadcast %cst_32 : f32 to vector<8x128xf32>
    %88 = arith.mulf %87, %86 : vector<8x128xf32>
    %89 = math.tanh %88 : vector<8x128xf32>
    %cst_33 = arith.constant 5.000000e-01 : f32
    %90 = vector.broadcast %cst_33 : f32 to vector<8x128xf32>
    %91 = arith.mulf %90, %89 : vector<8x128xf32>
    %cst_34 = arith.constant 5.000000e-01 : f32
    %92 = vector.broadcast %cst_34 : f32 to vector<8x128xf32>
    %93 = arith.addf %91, %92 : vector<8x128xf32>
    %94 = arith.mulf %83, %31 : vector<8x128xf32>
    %95 = arith.mulf %75, %85 : vector<8x128xf32>
    %96 = arith.addf %94, %95 : vector<8x128xf32>
    %97 = math.tanh %96 : vector<8x128xf32>
    %98 = arith.mulf %93, %97 : vector<8x128xf32>
    %99 = tpu.concatenate %98, %60 in 1 : vector<8x128xf32>, vector<8x128xf32> -> vector<8x256xf32>
    %100 = arith.truncf %99 : vector<8x256xf32> to vector<8x256xbf16>
    %cst_35 = arith.constant dense<0.000000e+00> : vector<8x1024xf32>
    %101 = tpu.matmul %100, %0, %cst_35 {dimension_numbers = #tpu.dot_dimension_numbers<[1], [0], [0], [1], [0, 0, 1, 1], [], []>} : vector<8x256xbf16>, vector<256x1024xbf16>, vector<8x1024xf32> -> vector<8x1024xf32>
    %102 = vector.extract_strided_slice %101 {offsets = [0, 0], sizes = [8, 512], strides = [1, 1]} : vector<8x1024xf32> to vector<8x512xf32>
    %103 = vector.broadcast %1 : vector<1x512xf32> to vector<8x512xf32>
    %104 = arith.addf %102, %103 : vector<8x512xf32>
    %105 = vector.extract_strided_slice %104 {offsets = [0, 0], sizes = [8, 128], strides = [1, 1]} : vector<8x512xf32> to vector<8x128xf32>
    %cst_36 = arith.constant 5.000000e-01 : f32
    %106 = vector.broadcast %cst_36 : f32 to vector<8x128xf32>
    %107 = arith.mulf %106, %105 : vector<8x128xf32>
    %108 = math.tanh %107 : vector<8x128xf32>
    %cst_37 = arith.constant 5.000000e-01 : f32
    %109 = vector.broadcast %cst_37 : f32 to vector<8x128xf32>
    %110 = arith.mulf %109, %108 : vector<8x128xf32>
    %cst_38 = arith.constant 5.000000e-01 : f32
    %111 = vector.broadcast %cst_38 : f32 to vector<8x128xf32>
    %112 = arith.addf %110, %111 : vector<8x128xf32>
    %113 = vector.extract_strided_slice %104 {offsets = [0, 128], sizes = [8, 128], strides = [1, 1]} : vector<8x512xf32> to vector<8x128xf32>
    %cst_39 = arith.constant 5.000000e-01 : f32
    %114 = vector.broadcast %cst_39 : f32 to vector<8x128xf32>
    %115 = arith.mulf %114, %113 : vector<8x128xf32>
    %116 = math.tanh %115 : vector<8x128xf32>
    %cst_40 = arith.constant 5.000000e-01 : f32
    %117 = vector.broadcast %cst_40 : f32 to vector<8x128xf32>
    %118 = arith.mulf %117, %116 : vector<8x128xf32>
    %cst_41 = arith.constant 5.000000e-01 : f32
    %119 = vector.broadcast %cst_41 : f32 to vector<8x128xf32>
    %120 = arith.addf %118, %119 : vector<8x128xf32>
    %121 = vector.extract_strided_slice %104 {offsets = [0, 256], sizes = [8, 128], strides = [1, 1]} : vector<8x512xf32> to vector<8x128xf32>
    %122 = math.tanh %121 : vector<8x128xf32>
    %123 = vector.extract_strided_slice %104 {offsets = [0, 384], sizes = [8, 128], strides = [1, 1]} : vector<8x512xf32> to vector<8x128xf32>
    %cst_42 = arith.constant 5.000000e-01 : f32
    %124 = vector.broadcast %cst_42 : f32 to vector<8x128xf32>
    %125 = arith.mulf %124, %123 : vector<8x128xf32>
    %126 = math.tanh %125 : vector<8x128xf32>
    %cst_43 = arith.constant 5.000000e-01 : f32
    %127 = vector.broadcast %cst_43 : f32 to vector<8x128xf32>
    %128 = arith.mulf %127, %126 : vector<8x128xf32>
    %cst_44 = arith.constant 5.000000e-01 : f32
    %129 = vector.broadcast %cst_44 : f32 to vector<8x128xf32>
    %130 = arith.addf %128, %129 : vector<8x128xf32>
    %131 = arith.mulf %120, %58 : vector<8x128xf32>
    %132 = arith.mulf %112, %122 : vector<8x128xf32>
    %133 = arith.addf %131, %132 : vector<8x128xf32>
    %134 = math.tanh %133 : vector<8x128xf32>
    %135 = arith.mulf %130, %134 : vector<8x128xf32>
    %c2 = arith.constant 2 : index
    %c0_45 = arith.constant 0 : index
    %c0_46 = arith.constant 0 : index
    %136 = vector.load %arg1[%c2, %c0_45, %c0_46] : memref<12x8x1xf32, #tpu.memory_space<vmem>>, vector<1x8x1xf32>
    %137 = vector.shape_cast %136 : vector<1x8x1xf32> to vector<8x1xf32>
    %138 = vector.broadcast %137 : vector<8x1xf32> to vector<8x512xf32>
    %139 = arith.mulf %138, %4 : vector<8x512xf32>
    %140 = arith.addf %139, %7 : vector<8x512xf32>
    %141 = vector.extract_strided_slice %101 {offsets = [0, 512], sizes = [8, 512], strides = [1, 1]} : vector<8x1024xf32> to vector<8x512xf32>
    %142 = arith.addf %140, %141 : vector<8x512xf32>
    %143 = vector.extract_strided_slice %142 {offsets = [0, 0], sizes = [8, 128], strides = [1, 1]} : vector<8x512xf32> to vector<8x128xf32>
    %cst_47 = arith.constant 5.000000e-01 : f32
    %144 = vector.broadcast %cst_47 : f32 to vector<8x128xf32>
    %145 = arith.mulf %144, %143 : vector<8x128xf32>
    %146 = math.tanh %145 : vector<8x128xf32>
    %cst_48 = arith.constant 5.000000e-01 : f32
    %147 = vector.broadcast %cst_48 : f32 to vector<8x128xf32>
    %148 = arith.mulf %147, %146 : vector<8x128xf32>
    %cst_49 = arith.constant 5.000000e-01 : f32
    %149 = vector.broadcast %cst_49 : f32 to vector<8x128xf32>
    %150 = arith.addf %148, %149 : vector<8x128xf32>
    %151 = vector.extract_strided_slice %142 {offsets = [0, 128], sizes = [8, 128], strides = [1, 1]} : vector<8x512xf32> to vector<8x128xf32>
    %cst_50 = arith.constant 5.000000e-01 : f32
    %152 = vector.broadcast %cst_50 : f32 to vector<8x128xf32>
    %153 = arith.mulf %152, %151 : vector<8x128xf32>
    %154 = math.tanh %153 : vector<8x128xf32>
    %cst_51 = arith.constant 5.000000e-01 : f32
    %155 = vector.broadcast %cst_51 : f32 to vector<8x128xf32>
    %156 = arith.mulf %155, %154 : vector<8x128xf32>
    %cst_52 = arith.constant 5.000000e-01 : f32
    %157 = vector.broadcast %cst_52 : f32 to vector<8x128xf32>
    %158 = arith.addf %156, %157 : vector<8x128xf32>
    %159 = vector.extract_strided_slice %142 {offsets = [0, 256], sizes = [8, 128], strides = [1, 1]} : vector<8x512xf32> to vector<8x128xf32>
    %160 = math.tanh %159 : vector<8x128xf32>
    %161 = vector.extract_strided_slice %142 {offsets = [0, 384], sizes = [8, 128], strides = [1, 1]} : vector<8x512xf32> to vector<8x128xf32>
    %cst_53 = arith.constant 5.000000e-01 : f32
    %162 = vector.broadcast %cst_53 : f32 to vector<8x128xf32>
    %163 = arith.mulf %162, %161 : vector<8x128xf32>
    %164 = math.tanh %163 : vector<8x128xf32>
    %cst_54 = arith.constant 5.000000e-01 : f32
    %165 = vector.broadcast %cst_54 : f32 to vector<8x128xf32>
    %166 = arith.mulf %165, %164 : vector<8x128xf32>
    %cst_55 = arith.constant 5.000000e-01 : f32
    %167 = vector.broadcast %cst_55 : f32 to vector<8x128xf32>
    %168 = arith.addf %166, %167 : vector<8x128xf32>
    %169 = arith.mulf %158, %96 : vector<8x128xf32>
    %170 = arith.mulf %150, %160 : vector<8x128xf32>
    %171 = arith.addf %169, %170 : vector<8x128xf32>
    %172 = math.tanh %171 : vector<8x128xf32>
    %173 = arith.mulf %168, %172 : vector<8x128xf32>
    %174 = tpu.concatenate %173, %135 in 1 : vector<8x128xf32>, vector<8x128xf32> -> vector<8x256xf32>
    %175 = arith.truncf %174 : vector<8x256xf32> to vector<8x256xbf16>
    %cst_56 = arith.constant dense<0.000000e+00> : vector<8x1024xf32>
    %176 = tpu.matmul %175, %0, %cst_56 {dimension_numbers = #tpu.dot_dimension_numbers<[1], [0], [0], [1], [0, 0, 1, 1], [], []>} : vector<8x256xbf16>, vector<256x1024xbf16>, vector<8x1024xf32> -> vector<8x1024xf32>
    %177 = vector.extract_strided_slice %176 {offsets = [0, 0], sizes = [8, 512], strides = [1, 1]} : vector<8x1024xf32> to vector<8x512xf32>
    %178 = vector.broadcast %1 : vector<1x512xf32> to vector<8x512xf32>
    %179 = arith.addf %177, %178 : vector<8x512xf32>
    %180 = vector.extract_strided_slice %179 {offsets = [0, 0], sizes = [8, 128], strides = [1, 1]} : vector<8x512xf32> to vector<8x128xf32>
    %cst_57 = arith.constant 5.000000e-01 : f32
    %181 = vector.broadcast %cst_57 : f32 to vector<8x128xf32>
    %182 = arith.mulf %181, %180 : vector<8x128xf32>
    %183 = math.tanh %182 : vector<8x128xf32>
    %cst_58 = arith.constant 5.000000e-01 : f32
    %184 = vector.broadcast %cst_58 : f32 to vector<8x128xf32>
    %185 = arith.mulf %184, %183 : vector<8x128xf32>
    %cst_59 = arith.constant 5.000000e-01 : f32
    %186 = vector.broadcast %cst_59 : f32 to vector<8x128xf32>
    %187 = arith.addf %185, %186 : vector<8x128xf32>
    %188 = vector.extract_strided_slice %179 {offsets = [0, 128], sizes = [8, 128], strides = [1, 1]} : vector<8x512xf32> to vector<8x128xf32>
    %cst_60 = arith.constant 5.000000e-01 : f32
    %189 = vector.broadcast %cst_60 : f32 to vector<8x128xf32>
    %190 = arith.mulf %189, %188 : vector<8x128xf32>
    %191 = math.tanh %190 : vector<8x128xf32>
    %cst_61 = arith.constant 5.000000e-01 : f32
    %192 = vector.broadcast %cst_61 : f32 to vector<8x128xf32>
    %193 = arith.mulf %192, %191 : vector<8x128xf32>
    %cst_62 = arith.constant 5.000000e-01 : f32
    %194 = vector.broadcast %cst_62 : f32 to vector<8x128xf32>
    %195 = arith.addf %193, %194 : vector<8x128xf32>
    %196 = vector.extract_strided_slice %179 {offsets = [0, 256], sizes = [8, 128], strides = [1, 1]} : vector<8x512xf32> to vector<8x128xf32>
    %197 = math.tanh %196 : vector<8x128xf32>
    %198 = vector.extract_strided_slice %179 {offsets = [0, 384], sizes = [8, 128], strides = [1, 1]} : vector<8x512xf32> to vector<8x128xf32>
    %cst_63 = arith.constant 5.000000e-01 : f32
    %199 = vector.broadcast %cst_63 : f32 to vector<8x128xf32>
    %200 = arith.mulf %199, %198 : vector<8x128xf32>
    %201 = math.tanh %200 : vector<8x128xf32>
    %cst_64 = arith.constant 5.000000e-01 : f32
    %202 = vector.broadcast %cst_64 : f32 to vector<8x128xf32>
    %203 = arith.mulf %202, %201 : vector<8x128xf32>
    %cst_65 = arith.constant 5.000000e-01 : f32
    %204 = vector.broadcast %cst_65 : f32 to vector<8x128xf32>
    %205 = arith.addf %203, %204 : vector<8x128xf32>
    %206 = arith.mulf %195, %133 : vector<8x128xf32>
    %207 = arith.mulf %187, %197 : vector<8x128xf32>
    %208 = arith.addf %206, %207 : vector<8x128xf32>
    %209 = math.tanh %208 : vector<8x128xf32>
    %210 = arith.mulf %205, %209 : vector<8x128xf32>
    %c3 = arith.constant 3 : index
    %c0_66 = arith.constant 0 : index
    %c0_67 = arith.constant 0 : index
    %211 = vector.load %arg1[%c3, %c0_66, %c0_67] : memref<12x8x1xf32, #tpu.memory_space<vmem>>, vector<1x8x1xf32>
    %212 = vector.shape_cast %211 : vector<1x8x1xf32> to vector<8x1xf32>
    %213 = vector.broadcast %212 : vector<8x1xf32> to vector<8x512xf32>
    %214 = arith.mulf %213, %4 : vector<8x512xf32>
    %215 = arith.addf %214, %7 : vector<8x512xf32>
    %216 = vector.extract_strided_slice %176 {offsets = [0, 512], sizes = [8, 512], strides = [1, 1]} : vector<8x1024xf32> to vector<8x512xf32>
    %217 = arith.addf %215, %216 : vector<8x512xf32>
    %218 = vector.extract_strided_slice %217 {offsets = [0, 0], sizes = [8, 128], strides = [1, 1]} : vector<8x512xf32> to vector<8x128xf32>
    %cst_68 = arith.constant 5.000000e-01 : f32
    %219 = vector.broadcast %cst_68 : f32 to vector<8x128xf32>
    %220 = arith.mulf %219, %218 : vector<8x128xf32>
    %221 = math.tanh %220 : vector<8x128xf32>
    %cst_69 = arith.constant 5.000000e-01 : f32
    %222 = vector.broadcast %cst_69 : f32 to vector<8x128xf32>
    %223 = arith.mulf %222, %221 : vector<8x128xf32>
    %cst_70 = arith.constant 5.000000e-01 : f32
    %224 = vector.broadcast %cst_70 : f32 to vector<8x128xf32>
    %225 = arith.addf %223, %224 : vector<8x128xf32>
    %226 = vector.extract_strided_slice %217 {offsets = [0, 128], sizes = [8, 128], strides = [1, 1]} : vector<8x512xf32> to vector<8x128xf32>
    %cst_71 = arith.constant 5.000000e-01 : f32
    %227 = vector.broadcast %cst_71 : f32 to vector<8x128xf32>
    %228 = arith.mulf %227, %226 : vector<8x128xf32>
    %229 = math.tanh %228 : vector<8x128xf32>
    %cst_72 = arith.constant 5.000000e-01 : f32
    %230 = vector.broadcast %cst_72 : f32 to vector<8x128xf32>
    %231 = arith.mulf %230, %229 : vector<8x128xf32>
    %cst_73 = arith.constant 5.000000e-01 : f32
    %232 = vector.broadcast %cst_73 : f32 to vector<8x128xf32>
    %233 = arith.addf %231, %232 : vector<8x128xf32>
    %234 = vector.extract_strided_slice %217 {offsets = [0, 256], sizes = [8, 128], strides = [1, 1]} : vector<8x512xf32> to vector<8x128xf32>
    %235 = math.tanh %234 : vector<8x128xf32>
    %236 = vector.extract_strided_slice %217 {offsets = [0, 384], sizes = [8, 128], strides = [1, 1]} : vector<8x512xf32> to vector<8x128xf32>
    %cst_74 = arith.constant 5.000000e-01 : f32
    %237 = vector.broadcast %cst_74 : f32 to vector<8x128xf32>
    %238 = arith.mulf %237, %236 : vector<8x128xf32>
    %239 = math.tanh %238 : vector<8x128xf32>
    %cst_75 = arith.constant 5.000000e-01 : f32
    %240 = vector.broadcast %cst_75 : f32 to vector<8x128xf32>
    %241 = arith.mulf %240, %239 : vector<8x128xf32>
    %cst_76 = arith.constant 5.000000e-01 : f32
    %242 = vector.broadcast %cst_76 : f32 to vector<8x128xf32>
    %243 = arith.addf %241, %242 : vector<8x128xf32>
    %244 = arith.mulf %233, %171 : vector<8x128xf32>
    %245 = arith.mulf %225, %235 : vector<8x128xf32>
    %246 = arith.addf %244, %245 : vector<8x128xf32>
    %247 = math.tanh %246 : vector<8x128xf32>
    %248 = arith.mulf %243, %247 : vector<8x128xf32>
    %249 = tpu.concatenate %248, %210 in 1 : vector<8x128xf32>, vector<8x128xf32> -> vector<8x256xf32>
    %250 = arith.truncf %249 : vector<8x256xf32> to vector<8x256xbf16>
    %cst_77 = arith.constant dense<0.000000e+00> : vector<8x1024xf32>
    %251 = tpu.matmul %250, %0, %cst_77 {dimension_numbers = #tpu.dot_dimension_numbers<[1], [0], [0], [1], [0, 0, 1, 1], [], []>} : vector<8x256xbf16>, vector<256x1024xbf16>, vector<8x1024xf32> -> vector<8x1024xf32>
    %252 = vector.extract_strided_slice %251 {offsets = [0, 0], sizes = [8, 512], strides = [1, 1]} : vector<8x1024xf32> to vector<8x512xf32>
    %253 = vector.broadcast %1 : vector<1x512xf32> to vector<8x512xf32>
    %254 = arith.addf %252, %253 : vector<8x512xf32>
    %255 = vector.extract_strided_slice %254 {offsets = [0, 0], sizes = [8, 128], strides = [1, 1]} : vector<8x512xf32> to vector<8x128xf32>
    %cst_78 = arith.constant 5.000000e-01 : f32
    %256 = vector.broadcast %cst_78 : f32 to vector<8x128xf32>
    %257 = arith.mulf %256, %255 : vector<8x128xf32>
    %258 = math.tanh %257 : vector<8x128xf32>
    %cst_79 = arith.constant 5.000000e-01 : f32
    %259 = vector.broadcast %cst_79 : f32 to vector<8x128xf32>
    %260 = arith.mulf %259, %258 : vector<8x128xf32>
    %cst_80 = arith.constant 5.000000e-01 : f32
    %261 = vector.broadcast %cst_80 : f32 to vector<8x128xf32>
    %262 = arith.addf %260, %261 : vector<8x128xf32>
    %263 = vector.extract_strided_slice %254 {offsets = [0, 128], sizes = [8, 128], strides = [1, 1]} : vector<8x512xf32> to vector<8x128xf32>
    %cst_81 = arith.constant 5.000000e-01 : f32
    %264 = vector.broadcast %cst_81 : f32 to vector<8x128xf32>
    %265 = arith.mulf %264, %263 : vector<8x128xf32>
    %266 = math.tanh %265 : vector<8x128xf32>
    %cst_82 = arith.constant 5.000000e-01 : f32
    %267 = vector.broadcast %cst_82 : f32 to vector<8x128xf32>
    %268 = arith.mulf %267, %266 : vector<8x128xf32>
    %cst_83 = arith.constant 5.000000e-01 : f32
    %269 = vector.broadcast %cst_83 : f32 to vector<8x128xf32>
    %270 = arith.addf %268, %269 : vector<8x128xf32>
    %271 = vector.extract_strided_slice %254 {offsets = [0, 256], sizes = [8, 128], strides = [1, 1]} : vector<8x512xf32> to vector<8x128xf32>
    %272 = math.tanh %271 : vector<8x128xf32>
    %273 = vector.extract_strided_slice %254 {offsets = [0, 384], sizes = [8, 128], strides = [1, 1]} : vector<8x512xf32> to vector<8x128xf32>
    %cst_84 = arith.constant 5.000000e-01 : f32
    %274 = vector.broadcast %cst_84 : f32 to vector<8x128xf32>
    %275 = arith.mulf %274, %273 : vector<8x128xf32>
    %276 = math.tanh %275 : vector<8x128xf32>
    %cst_85 = arith.constant 5.000000e-01 : f32
    %277 = vector.broadcast %cst_85 : f32 to vector<8x128xf32>
    %278 = arith.mulf %277, %276 : vector<8x128xf32>
    %cst_86 = arith.constant 5.000000e-01 : f32
    %279 = vector.broadcast %cst_86 : f32 to vector<8x128xf32>
    %280 = arith.addf %278, %279 : vector<8x128xf32>
    %281 = arith.mulf %270, %208 : vector<8x128xf32>
    %282 = arith.mulf %262, %272 : vector<8x128xf32>
    %283 = arith.addf %281, %282 : vector<8x128xf32>
    %284 = math.tanh %283 : vector<8x128xf32>
    %285 = arith.mulf %280, %284 : vector<8x128xf32>
    %c4 = arith.constant 4 : index
    %c0_87 = arith.constant 0 : index
    %c0_88 = arith.constant 0 : index
    %286 = vector.load %arg1[%c4, %c0_87, %c0_88] : memref<12x8x1xf32, #tpu.memory_space<vmem>>, vector<1x8x1xf32>
    %287 = vector.shape_cast %286 : vector<1x8x1xf32> to vector<8x1xf32>
    %288 = vector.broadcast %287 : vector<8x1xf32> to vector<8x512xf32>
    %289 = arith.mulf %288, %4 : vector<8x512xf32>
    %290 = arith.addf %289, %7 : vector<8x512xf32>
    %291 = vector.extract_strided_slice %251 {offsets = [0, 512], sizes = [8, 512], strides = [1, 1]} : vector<8x1024xf32> to vector<8x512xf32>
    %292 = arith.addf %290, %291 : vector<8x512xf32>
    %293 = vector.extract_strided_slice %292 {offsets = [0, 0], sizes = [8, 128], strides = [1, 1]} : vector<8x512xf32> to vector<8x128xf32>
    %cst_89 = arith.constant 5.000000e-01 : f32
    %294 = vector.broadcast %cst_89 : f32 to vector<8x128xf32>
    %295 = arith.mulf %294, %293 : vector<8x128xf32>
    %296 = math.tanh %295 : vector<8x128xf32>
    %cst_90 = arith.constant 5.000000e-01 : f32
    %297 = vector.broadcast %cst_90 : f32 to vector<8x128xf32>
    %298 = arith.mulf %297, %296 : vector<8x128xf32>
    %cst_91 = arith.constant 5.000000e-01 : f32
    %299 = vector.broadcast %cst_91 : f32 to vector<8x128xf32>
    %300 = arith.addf %298, %299 : vector<8x128xf32>
    %301 = vector.extract_strided_slice %292 {offsets = [0, 128], sizes = [8, 128], strides = [1, 1]} : vector<8x512xf32> to vector<8x128xf32>
    %cst_92 = arith.constant 5.000000e-01 : f32
    %302 = vector.broadcast %cst_92 : f32 to vector<8x128xf32>
    %303 = arith.mulf %302, %301 : vector<8x128xf32>
    %304 = math.tanh %303 : vector<8x128xf32>
    %cst_93 = arith.constant 5.000000e-01 : f32
    %305 = vector.broadcast %cst_93 : f32 to vector<8x128xf32>
    %306 = arith.mulf %305, %304 : vector<8x128xf32>
    %cst_94 = arith.constant 5.000000e-01 : f32
    %307 = vector.broadcast %cst_94 : f32 to vector<8x128xf32>
    %308 = arith.addf %306, %307 : vector<8x128xf32>
    %309 = vector.extract_strided_slice %292 {offsets = [0, 256], sizes = [8, 128], strides = [1, 1]} : vector<8x512xf32> to vector<8x128xf32>
    %310 = math.tanh %309 : vector<8x128xf32>
    %311 = vector.extract_strided_slice %292 {offsets = [0, 384], sizes = [8, 128], strides = [1, 1]} : vector<8x512xf32> to vector<8x128xf32>
    %cst_95 = arith.constant 5.000000e-01 : f32
    %312 = vector.broadcast %cst_95 : f32 to vector<8x128xf32>
    %313 = arith.mulf %312, %311 : vector<8x128xf32>
    %314 = math.tanh %313 : vector<8x128xf32>
    %cst_96 = arith.constant 5.000000e-01 : f32
    %315 = vector.broadcast %cst_96 : f32 to vector<8x128xf32>
    %316 = arith.mulf %315, %314 : vector<8x128xf32>
    %cst_97 = arith.constant 5.000000e-01 : f32
    %317 = vector.broadcast %cst_97 : f32 to vector<8x128xf32>
    %318 = arith.addf %316, %317 : vector<8x128xf32>
    %319 = arith.mulf %308, %246 : vector<8x128xf32>
    %320 = arith.mulf %300, %310 : vector<8x128xf32>
    %321 = arith.addf %319, %320 : vector<8x128xf32>
    %322 = math.tanh %321 : vector<8x128xf32>
    %323 = arith.mulf %318, %322 : vector<8x128xf32>
    %324 = tpu.concatenate %323, %285 in 1 : vector<8x128xf32>, vector<8x128xf32> -> vector<8x256xf32>
    %325 = arith.truncf %324 : vector<8x256xf32> to vector<8x256xbf16>
    %cst_98 = arith.constant dense<0.000000e+00> : vector<8x1024xf32>
    %326 = tpu.matmul %325, %0, %cst_98 {dimension_numbers = #tpu.dot_dimension_numbers<[1], [0], [0], [1], [0, 0, 1, 1], [], []>} : vector<8x256xbf16>, vector<256x1024xbf16>, vector<8x1024xf32> -> vector<8x1024xf32>
    %327 = vector.extract_strided_slice %326 {offsets = [0, 0], sizes = [8, 512], strides = [1, 1]} : vector<8x1024xf32> to vector<8x512xf32>
    %328 = vector.broadcast %1 : vector<1x512xf32> to vector<8x512xf32>
    %329 = arith.addf %327, %328 : vector<8x512xf32>
    %330 = vector.extract_strided_slice %329 {offsets = [0, 0], sizes = [8, 128], strides = [1, 1]} : vector<8x512xf32> to vector<8x128xf32>
    %cst_99 = arith.constant 5.000000e-01 : f32
    %331 = vector.broadcast %cst_99 : f32 to vector<8x128xf32>
    %332 = arith.mulf %331, %330 : vector<8x128xf32>
    %333 = math.tanh %332 : vector<8x128xf32>
    %cst_100 = arith.constant 5.000000e-01 : f32
    %334 = vector.broadcast %cst_100 : f32 to vector<8x128xf32>
    %335 = arith.mulf %334, %333 : vector<8x128xf32>
    %cst_101 = arith.constant 5.000000e-01 : f32
    %336 = vector.broadcast %cst_101 : f32 to vector<8x128xf32>
    %337 = arith.addf %335, %336 : vector<8x128xf32>
    %338 = vector.extract_strided_slice %329 {offsets = [0, 128], sizes = [8, 128], strides = [1, 1]} : vector<8x512xf32> to vector<8x128xf32>
    %cst_102 = arith.constant 5.000000e-01 : f32
    %339 = vector.broadcast %cst_102 : f32 to vector<8x128xf32>
    %340 = arith.mulf %339, %338 : vector<8x128xf32>
    %341 = math.tanh %340 : vector<8x128xf32>
    %cst_103 = arith.constant 5.000000e-01 : f32
    %342 = vector.broadcast %cst_103 : f32 to vector<8x128xf32>
    %343 = arith.mulf %342, %341 : vector<8x128xf32>
    %cst_104 = arith.constant 5.000000e-01 : f32
    %344 = vector.broadcast %cst_104 : f32 to vector<8x128xf32>
    %345 = arith.addf %343, %344 : vector<8x128xf32>
    %346 = vector.extract_strided_slice %329 {offsets = [0, 256], sizes = [8, 128], strides = [1, 1]} : vector<8x512xf32> to vector<8x128xf32>
    %347 = math.tanh %346 : vector<8x128xf32>
    %348 = vector.extract_strided_slice %329 {offsets = [0, 384], sizes = [8, 128], strides = [1, 1]} : vector<8x512xf32> to vector<8x128xf32>
    %cst_105 = arith.constant 5.000000e-01 : f32
    %349 = vector.broadcast %cst_105 : f32 to vector<8x128xf32>
    %350 = arith.mulf %349, %348 : vector<8x128xf32>
    %351 = math.tanh %350 : vector<8x128xf32>
    %cst_106 = arith.constant 5.000000e-01 : f32
    %352 = vector.broadcast %cst_106 : f32 to vector<8x128xf32>
    %353 = arith.mulf %352, %351 : vector<8x128xf32>
    %cst_107 = arith.constant 5.000000e-01 : f32
    %354 = vector.broadcast %cst_107 : f32 to vector<8x128xf32>
    %355 = arith.addf %353, %354 : vector<8x128xf32>
    %356 = arith.mulf %345, %283 : vector<8x128xf32>
    %357 = arith.mulf %337, %347 : vector<8x128xf32>
    %358 = arith.addf %356, %357 : vector<8x128xf32>
    %359 = math.tanh %358 : vector<8x128xf32>
    %360 = arith.mulf %355, %359 : vector<8x128xf32>
    %c5 = arith.constant 5 : index
    %c0_108 = arith.constant 0 : index
    %c0_109 = arith.constant 0 : index
    %361 = vector.load %arg1[%c5, %c0_108, %c0_109] : memref<12x8x1xf32, #tpu.memory_space<vmem>>, vector<1x8x1xf32>
    %362 = vector.shape_cast %361 : vector<1x8x1xf32> to vector<8x1xf32>
    %363 = vector.broadcast %362 : vector<8x1xf32> to vector<8x512xf32>
    %364 = arith.mulf %363, %4 : vector<8x512xf32>
    %365 = arith.addf %364, %7 : vector<8x512xf32>
    %366 = vector.extract_strided_slice %326 {offsets = [0, 512], sizes = [8, 512], strides = [1, 1]} : vector<8x1024xf32> to vector<8x512xf32>
    %367 = arith.addf %365, %366 : vector<8x512xf32>
    %368 = vector.extract_strided_slice %367 {offsets = [0, 0], sizes = [8, 128], strides = [1, 1]} : vector<8x512xf32> to vector<8x128xf32>
    %cst_110 = arith.constant 5.000000e-01 : f32
    %369 = vector.broadcast %cst_110 : f32 to vector<8x128xf32>
    %370 = arith.mulf %369, %368 : vector<8x128xf32>
    %371 = math.tanh %370 : vector<8x128xf32>
    %cst_111 = arith.constant 5.000000e-01 : f32
    %372 = vector.broadcast %cst_111 : f32 to vector<8x128xf32>
    %373 = arith.mulf %372, %371 : vector<8x128xf32>
    %cst_112 = arith.constant 5.000000e-01 : f32
    %374 = vector.broadcast %cst_112 : f32 to vector<8x128xf32>
    %375 = arith.addf %373, %374 : vector<8x128xf32>
    %376 = vector.extract_strided_slice %367 {offsets = [0, 128], sizes = [8, 128], strides = [1, 1]} : vector<8x512xf32> to vector<8x128xf32>
    %cst_113 = arith.constant 5.000000e-01 : f32
    %377 = vector.broadcast %cst_113 : f32 to vector<8x128xf32>
    %378 = arith.mulf %377, %376 : vector<8x128xf32>
    %379 = math.tanh %378 : vector<8x128xf32>
    %cst_114 = arith.constant 5.000000e-01 : f32
    %380 = vector.broadcast %cst_114 : f32 to vector<8x128xf32>
    %381 = arith.mulf %380, %379 : vector<8x128xf32>
    %cst_115 = arith.constant 5.000000e-01 : f32
    %382 = vector.broadcast %cst_115 : f32 to vector<8x128xf32>
    %383 = arith.addf %381, %382 : vector<8x128xf32>
    %384 = vector.extract_strided_slice %367 {offsets = [0, 256], sizes = [8, 128], strides = [1, 1]} : vector<8x512xf32> to vector<8x128xf32>
    %385 = math.tanh %384 : vector<8x128xf32>
    %386 = vector.extract_strided_slice %367 {offsets = [0, 384], sizes = [8, 128], strides = [1, 1]} : vector<8x512xf32> to vector<8x128xf32>
    %cst_116 = arith.constant 5.000000e-01 : f32
    %387 = vector.broadcast %cst_116 : f32 to vector<8x128xf32>
    %388 = arith.mulf %387, %386 : vector<8x128xf32>
    %389 = math.tanh %388 : vector<8x128xf32>
    %cst_117 = arith.constant 5.000000e-01 : f32
    %390 = vector.broadcast %cst_117 : f32 to vector<8x128xf32>
    %391 = arith.mulf %390, %389 : vector<8x128xf32>
    %cst_118 = arith.constant 5.000000e-01 : f32
    %392 = vector.broadcast %cst_118 : f32 to vector<8x128xf32>
    %393 = arith.addf %391, %392 : vector<8x128xf32>
    %394 = arith.mulf %383, %321 : vector<8x128xf32>
    %395 = arith.mulf %375, %385 : vector<8x128xf32>
    %396 = arith.addf %394, %395 : vector<8x128xf32>
    %397 = math.tanh %396 : vector<8x128xf32>
    %398 = arith.mulf %393, %397 : vector<8x128xf32>
    %399 = tpu.concatenate %398, %360 in 1 : vector<8x128xf32>, vector<8x128xf32> -> vector<8x256xf32>
    %400 = arith.truncf %399 : vector<8x256xf32> to vector<8x256xbf16>
    %cst_119 = arith.constant dense<0.000000e+00> : vector<8x1024xf32>
    %401 = tpu.matmul %400, %0, %cst_119 {dimension_numbers = #tpu.dot_dimension_numbers<[1], [0], [0], [1], [0, 0, 1, 1], [], []>} : vector<8x256xbf16>, vector<256x1024xbf16>, vector<8x1024xf32> -> vector<8x1024xf32>
    %402 = vector.extract_strided_slice %401 {offsets = [0, 0], sizes = [8, 512], strides = [1, 1]} : vector<8x1024xf32> to vector<8x512xf32>
    %403 = vector.broadcast %1 : vector<1x512xf32> to vector<8x512xf32>
    %404 = arith.addf %402, %403 : vector<8x512xf32>
    %405 = vector.extract_strided_slice %404 {offsets = [0, 0], sizes = [8, 128], strides = [1, 1]} : vector<8x512xf32> to vector<8x128xf32>
    %cst_120 = arith.constant 5.000000e-01 : f32
    %406 = vector.broadcast %cst_120 : f32 to vector<8x128xf32>
    %407 = arith.mulf %406, %405 : vector<8x128xf32>
    %408 = math.tanh %407 : vector<8x128xf32>
    %cst_121 = arith.constant 5.000000e-01 : f32
    %409 = vector.broadcast %cst_121 : f32 to vector<8x128xf32>
    %410 = arith.mulf %409, %408 : vector<8x128xf32>
    %cst_122 = arith.constant 5.000000e-01 : f32
    %411 = vector.broadcast %cst_122 : f32 to vector<8x128xf32>
    %412 = arith.addf %410, %411 : vector<8x128xf32>
    %413 = vector.extract_strided_slice %404 {offsets = [0, 128], sizes = [8, 128], strides = [1, 1]} : vector<8x512xf32> to vector<8x128xf32>
    %cst_123 = arith.constant 5.000000e-01 : f32
    %414 = vector.broadcast %cst_123 : f32 to vector<8x128xf32>
    %415 = arith.mulf %414, %413 : vector<8x128xf32>
    %416 = math.tanh %415 : vector<8x128xf32>
    %cst_124 = arith.constant 5.000000e-01 : f32
    %417 = vector.broadcast %cst_124 : f32 to vector<8x128xf32>
    %418 = arith.mulf %417, %416 : vector<8x128xf32>
    %cst_125 = arith.constant 5.000000e-01 : f32
    %419 = vector.broadcast %cst_125 : f32 to vector<8x128xf32>
    %420 = arith.addf %418, %419 : vector<8x128xf32>
    %421 = vector.extract_strided_slice %404 {offsets = [0, 256], sizes = [8, 128], strides = [1, 1]} : vector<8x512xf32> to vector<8x128xf32>
    %422 = math.tanh %421 : vector<8x128xf32>
    %423 = vector.extract_strided_slice %404 {offsets = [0, 384], sizes = [8, 128], strides = [1, 1]} : vector<8x512xf32> to vector<8x128xf32>
    %cst_126 = arith.constant 5.000000e-01 : f32
    %424 = vector.broadcast %cst_126 : f32 to vector<8x128xf32>
    %425 = arith.mulf %424, %423 : vector<8x128xf32>
    %426 = math.tanh %425 : vector<8x128xf32>
    %cst_127 = arith.constant 5.000000e-01 : f32
    %427 = vector.broadcast %cst_127 : f32 to vector<8x128xf32>
    %428 = arith.mulf %427, %426 : vector<8x128xf32>
    %cst_128 = arith.constant 5.000000e-01 : f32
    %429 = vector.broadcast %cst_128 : f32 to vector<8x128xf32>
    %430 = arith.addf %428, %429 : vector<8x128xf32>
    %431 = arith.mulf %420, %358 : vector<8x128xf32>
    %432 = arith.mulf %412, %422 : vector<8x128xf32>
    %433 = arith.addf %431, %432 : vector<8x128xf32>
    %434 = math.tanh %433 : vector<8x128xf32>
    %435 = arith.mulf %430, %434 : vector<8x128xf32>
    %c6 = arith.constant 6 : index
    %c0_129 = arith.constant 0 : index
    %c0_130 = arith.constant 0 : index
    %436 = vector.load %arg1[%c6, %c0_129, %c0_130] : memref<12x8x1xf32, #tpu.memory_space<vmem>>, vector<1x8x1xf32>
    %437 = vector.shape_cast %436 : vector<1x8x1xf32> to vector<8x1xf32>
    %438 = vector.broadcast %437 : vector<8x1xf32> to vector<8x512xf32>
    %439 = arith.mulf %438, %4 : vector<8x512xf32>
    %440 = arith.addf %439, %7 : vector<8x512xf32>
    %441 = vector.extract_strided_slice %401 {offsets = [0, 512], sizes = [8, 512], strides = [1, 1]} : vector<8x1024xf32> to vector<8x512xf32>
    %442 = arith.addf %440, %441 : vector<8x512xf32>
    %443 = vector.extract_strided_slice %442 {offsets = [0, 0], sizes = [8, 128], strides = [1, 1]} : vector<8x512xf32> to vector<8x128xf32>
    %cst_131 = arith.constant 5.000000e-01 : f32
    %444 = vector.broadcast %cst_131 : f32 to vector<8x128xf32>
    %445 = arith.mulf %444, %443 : vector<8x128xf32>
    %446 = math.tanh %445 : vector<8x128xf32>
    %cst_132 = arith.constant 5.000000e-01 : f32
    %447 = vector.broadcast %cst_132 : f32 to vector<8x128xf32>
    %448 = arith.mulf %447, %446 : vector<8x128xf32>
    %cst_133 = arith.constant 5.000000e-01 : f32
    %449 = vector.broadcast %cst_133 : f32 to vector<8x128xf32>
    %450 = arith.addf %448, %449 : vector<8x128xf32>
    %451 = vector.extract_strided_slice %442 {offsets = [0, 128], sizes = [8, 128], strides = [1, 1]} : vector<8x512xf32> to vector<8x128xf32>
    %cst_134 = arith.constant 5.000000e-01 : f32
    %452 = vector.broadcast %cst_134 : f32 to vector<8x128xf32>
    %453 = arith.mulf %452, %451 : vector<8x128xf32>
    %454 = math.tanh %453 : vector<8x128xf32>
    %cst_135 = arith.constant 5.000000e-01 : f32
    %455 = vector.broadcast %cst_135 : f32 to vector<8x128xf32>
    %456 = arith.mulf %455, %454 : vector<8x128xf32>
    %cst_136 = arith.constant 5.000000e-01 : f32
    %457 = vector.broadcast %cst_136 : f32 to vector<8x128xf32>
    %458 = arith.addf %456, %457 : vector<8x128xf32>
    %459 = vector.extract_strided_slice %442 {offsets = [0, 256], sizes = [8, 128], strides = [1, 1]} : vector<8x512xf32> to vector<8x128xf32>
    %460 = math.tanh %459 : vector<8x128xf32>
    %461 = vector.extract_strided_slice %442 {offsets = [0, 384], sizes = [8, 128], strides = [1, 1]} : vector<8x512xf32> to vector<8x128xf32>
    %cst_137 = arith.constant 5.000000e-01 : f32
    %462 = vector.broadcast %cst_137 : f32 to vector<8x128xf32>
    %463 = arith.mulf %462, %461 : vector<8x128xf32>
    %464 = math.tanh %463 : vector<8x128xf32>
    %cst_138 = arith.constant 5.000000e-01 : f32
    %465 = vector.broadcast %cst_138 : f32 to vector<8x128xf32>
    %466 = arith.mulf %465, %464 : vector<8x128xf32>
    %cst_139 = arith.constant 5.000000e-01 : f32
    %467 = vector.broadcast %cst_139 : f32 to vector<8x128xf32>
    %468 = arith.addf %466, %467 : vector<8x128xf32>
    %469 = arith.mulf %458, %396 : vector<8x128xf32>
    %470 = arith.mulf %450, %460 : vector<8x128xf32>
    %471 = arith.addf %469, %470 : vector<8x128xf32>
    %472 = math.tanh %471 : vector<8x128xf32>
    %473 = arith.mulf %468, %472 : vector<8x128xf32>
    %474 = tpu.concatenate %473, %435 in 1 : vector<8x128xf32>, vector<8x128xf32> -> vector<8x256xf32>
    %475 = arith.truncf %474 : vector<8x256xf32> to vector<8x256xbf16>
    %cst_140 = arith.constant dense<0.000000e+00> : vector<8x1024xf32>
    %476 = tpu.matmul %475, %0, %cst_140 {dimension_numbers = #tpu.dot_dimension_numbers<[1], [0], [0], [1], [0, 0, 1, 1], [], []>} : vector<8x256xbf16>, vector<256x1024xbf16>, vector<8x1024xf32> -> vector<8x1024xf32>
    %477 = vector.extract_strided_slice %476 {offsets = [0, 0], sizes = [8, 512], strides = [1, 1]} : vector<8x1024xf32> to vector<8x512xf32>
    %478 = vector.broadcast %1 : vector<1x512xf32> to vector<8x512xf32>
    %479 = arith.addf %477, %478 : vector<8x512xf32>
    %480 = vector.extract_strided_slice %479 {offsets = [0, 0], sizes = [8, 128], strides = [1, 1]} : vector<8x512xf32> to vector<8x128xf32>
    %cst_141 = arith.constant 5.000000e-01 : f32
    %481 = vector.broadcast %cst_141 : f32 to vector<8x128xf32>
    %482 = arith.mulf %481, %480 : vector<8x128xf32>
    %483 = math.tanh %482 : vector<8x128xf32>
    %cst_142 = arith.constant 5.000000e-01 : f32
    %484 = vector.broadcast %cst_142 : f32 to vector<8x128xf32>
    %485 = arith.mulf %484, %483 : vector<8x128xf32>
    %cst_143 = arith.constant 5.000000e-01 : f32
    %486 = vector.broadcast %cst_143 : f32 to vector<8x128xf32>
    %487 = arith.addf %485, %486 : vector<8x128xf32>
    %488 = vector.extract_strided_slice %479 {offsets = [0, 128], sizes = [8, 128], strides = [1, 1]} : vector<8x512xf32> to vector<8x128xf32>
    %cst_144 = arith.constant 5.000000e-01 : f32
    %489 = vector.broadcast %cst_144 : f32 to vector<8x128xf32>
    %490 = arith.mulf %489, %488 : vector<8x128xf32>
    %491 = math.tanh %490 : vector<8x128xf32>
    %cst_145 = arith.constant 5.000000e-01 : f32
    %492 = vector.broadcast %cst_145 : f32 to vector<8x128xf32>
    %493 = arith.mulf %492, %491 : vector<8x128xf32>
    %cst_146 = arith.constant 5.000000e-01 : f32
    %494 = vector.broadcast %cst_146 : f32 to vector<8x128xf32>
    %495 = arith.addf %493, %494 : vector<8x128xf32>
    %496 = vector.extract_strided_slice %479 {offsets = [0, 256], sizes = [8, 128], strides = [1, 1]} : vector<8x512xf32> to vector<8x128xf32>
    %497 = math.tanh %496 : vector<8x128xf32>
    %498 = vector.extract_strided_slice %479 {offsets = [0, 384], sizes = [8, 128], strides = [1, 1]} : vector<8x512xf32> to vector<8x128xf32>
    %cst_147 = arith.constant 5.000000e-01 : f32
    %499 = vector.broadcast %cst_147 : f32 to vector<8x128xf32>
    %500 = arith.mulf %499, %498 : vector<8x128xf32>
    %501 = math.tanh %500 : vector<8x128xf32>
    %cst_148 = arith.constant 5.000000e-01 : f32
    %502 = vector.broadcast %cst_148 : f32 to vector<8x128xf32>
    %503 = arith.mulf %502, %501 : vector<8x128xf32>
    %cst_149 = arith.constant 5.000000e-01 : f32
    %504 = vector.broadcast %cst_149 : f32 to vector<8x128xf32>
    %505 = arith.addf %503, %504 : vector<8x128xf32>
    %506 = arith.mulf %495, %433 : vector<8x128xf32>
    %507 = arith.mulf %487, %497 : vector<8x128xf32>
    %508 = arith.addf %506, %507 : vector<8x128xf32>
    %509 = math.tanh %508 : vector<8x128xf32>
    %510 = arith.mulf %505, %509 : vector<8x128xf32>
    %c7 = arith.constant 7 : index
    %c0_150 = arith.constant 0 : index
    %c0_151 = arith.constant 0 : index
    %511 = vector.load %arg1[%c7, %c0_150, %c0_151] : memref<12x8x1xf32, #tpu.memory_space<vmem>>, vector<1x8x1xf32>
    %512 = vector.shape_cast %511 : vector<1x8x1xf32> to vector<8x1xf32>
    %513 = vector.broadcast %512 : vector<8x1xf32> to vector<8x512xf32>
    %514 = arith.mulf %513, %4 : vector<8x512xf32>
    %515 = arith.addf %514, %7 : vector<8x512xf32>
    %516 = vector.extract_strided_slice %476 {offsets = [0, 512], sizes = [8, 512], strides = [1, 1]} : vector<8x1024xf32> to vector<8x512xf32>
    %517 = arith.addf %515, %516 : vector<8x512xf32>
    %518 = vector.extract_strided_slice %517 {offsets = [0, 0], sizes = [8, 128], strides = [1, 1]} : vector<8x512xf32> to vector<8x128xf32>
    %cst_152 = arith.constant 5.000000e-01 : f32
    %519 = vector.broadcast %cst_152 : f32 to vector<8x128xf32>
    %520 = arith.mulf %519, %518 : vector<8x128xf32>
    %521 = math.tanh %520 : vector<8x128xf32>
    %cst_153 = arith.constant 5.000000e-01 : f32
    %522 = vector.broadcast %cst_153 : f32 to vector<8x128xf32>
    %523 = arith.mulf %522, %521 : vector<8x128xf32>
    %cst_154 = arith.constant 5.000000e-01 : f32
    %524 = vector.broadcast %cst_154 : f32 to vector<8x128xf32>
    %525 = arith.addf %523, %524 : vector<8x128xf32>
    %526 = vector.extract_strided_slice %517 {offsets = [0, 128], sizes = [8, 128], strides = [1, 1]} : vector<8x512xf32> to vector<8x128xf32>
    %cst_155 = arith.constant 5.000000e-01 : f32
    %527 = vector.broadcast %cst_155 : f32 to vector<8x128xf32>
    %528 = arith.mulf %527, %526 : vector<8x128xf32>
    %529 = math.tanh %528 : vector<8x128xf32>
    %cst_156 = arith.constant 5.000000e-01 : f32
    %530 = vector.broadcast %cst_156 : f32 to vector<8x128xf32>
    %531 = arith.mulf %530, %529 : vector<8x128xf32>
    %cst_157 = arith.constant 5.000000e-01 : f32
    %532 = vector.broadcast %cst_157 : f32 to vector<8x128xf32>
    %533 = arith.addf %531, %532 : vector<8x128xf32>
    %534 = vector.extract_strided_slice %517 {offsets = [0, 256], sizes = [8, 128], strides = [1, 1]} : vector<8x512xf32> to vector<8x128xf32>
    %535 = math.tanh %534 : vector<8x128xf32>
    %536 = vector.extract_strided_slice %517 {offsets = [0, 384], sizes = [8, 128], strides = [1, 1]} : vector<8x512xf32> to vector<8x128xf32>
    %cst_158 = arith.constant 5.000000e-01 : f32
    %537 = vector.broadcast %cst_158 : f32 to vector<8x128xf32>
    %538 = arith.mulf %537, %536 : vector<8x128xf32>
    %539 = math.tanh %538 : vector<8x128xf32>
    %cst_159 = arith.constant 5.000000e-01 : f32
    %540 = vector.broadcast %cst_159 : f32 to vector<8x128xf32>
    %541 = arith.mulf %540, %539 : vector<8x128xf32>
    %cst_160 = arith.constant 5.000000e-01 : f32
    %542 = vector.broadcast %cst_160 : f32 to vector<8x128xf32>
    %543 = arith.addf %541, %542 : vector<8x128xf32>
    %544 = arith.mulf %533, %471 : vector<8x128xf32>
    %545 = arith.mulf %525, %535 : vector<8x128xf32>
    %546 = arith.addf %544, %545 : vector<8x128xf32>
    %547 = math.tanh %546 : vector<8x128xf32>
    %548 = arith.mulf %543, %547 : vector<8x128xf32>
    %549 = tpu.concatenate %548, %510 in 1 : vector<8x128xf32>, vector<8x128xf32> -> vector<8x256xf32>
    %550 = arith.truncf %549 : vector<8x256xf32> to vector<8x256xbf16>
    %cst_161 = arith.constant dense<0.000000e+00> : vector<8x1024xf32>
    %551 = tpu.matmul %550, %0, %cst_161 {dimension_numbers = #tpu.dot_dimension_numbers<[1], [0], [0], [1], [0, 0, 1, 1], [], []>} : vector<8x256xbf16>, vector<256x1024xbf16>, vector<8x1024xf32> -> vector<8x1024xf32>
    %552 = vector.extract_strided_slice %551 {offsets = [0, 0], sizes = [8, 512], strides = [1, 1]} : vector<8x1024xf32> to vector<8x512xf32>
    %553 = vector.broadcast %1 : vector<1x512xf32> to vector<8x512xf32>
    %554 = arith.addf %552, %553 : vector<8x512xf32>
    %555 = vector.extract_strided_slice %554 {offsets = [0, 0], sizes = [8, 128], strides = [1, 1]} : vector<8x512xf32> to vector<8x128xf32>
    %cst_162 = arith.constant 5.000000e-01 : f32
    %556 = vector.broadcast %cst_162 : f32 to vector<8x128xf32>
    %557 = arith.mulf %556, %555 : vector<8x128xf32>
    %558 = math.tanh %557 : vector<8x128xf32>
    %cst_163 = arith.constant 5.000000e-01 : f32
    %559 = vector.broadcast %cst_163 : f32 to vector<8x128xf32>
    %560 = arith.mulf %559, %558 : vector<8x128xf32>
    %cst_164 = arith.constant 5.000000e-01 : f32
    %561 = vector.broadcast %cst_164 : f32 to vector<8x128xf32>
    %562 = arith.addf %560, %561 : vector<8x128xf32>
    %563 = vector.extract_strided_slice %554 {offsets = [0, 128], sizes = [8, 128], strides = [1, 1]} : vector<8x512xf32> to vector<8x128xf32>
    %cst_165 = arith.constant 5.000000e-01 : f32
    %564 = vector.broadcast %cst_165 : f32 to vector<8x128xf32>
    %565 = arith.mulf %564, %563 : vector<8x128xf32>
    %566 = math.tanh %565 : vector<8x128xf32>
    %cst_166 = arith.constant 5.000000e-01 : f32
    %567 = vector.broadcast %cst_166 : f32 to vector<8x128xf32>
    %568 = arith.mulf %567, %566 : vector<8x128xf32>
    %cst_167 = arith.constant 5.000000e-01 : f32
    %569 = vector.broadcast %cst_167 : f32 to vector<8x128xf32>
    %570 = arith.addf %568, %569 : vector<8x128xf32>
    %571 = vector.extract_strided_slice %554 {offsets = [0, 256], sizes = [8, 128], strides = [1, 1]} : vector<8x512xf32> to vector<8x128xf32>
    %572 = math.tanh %571 : vector<8x128xf32>
    %573 = vector.extract_strided_slice %554 {offsets = [0, 384], sizes = [8, 128], strides = [1, 1]} : vector<8x512xf32> to vector<8x128xf32>
    %cst_168 = arith.constant 5.000000e-01 : f32
    %574 = vector.broadcast %cst_168 : f32 to vector<8x128xf32>
    %575 = arith.mulf %574, %573 : vector<8x128xf32>
    %576 = math.tanh %575 : vector<8x128xf32>
    %cst_169 = arith.constant 5.000000e-01 : f32
    %577 = vector.broadcast %cst_169 : f32 to vector<8x128xf32>
    %578 = arith.mulf %577, %576 : vector<8x128xf32>
    %cst_170 = arith.constant 5.000000e-01 : f32
    %579 = vector.broadcast %cst_170 : f32 to vector<8x128xf32>
    %580 = arith.addf %578, %579 : vector<8x128xf32>
    %581 = arith.mulf %570, %508 : vector<8x128xf32>
    %582 = arith.mulf %562, %572 : vector<8x128xf32>
    %583 = arith.addf %581, %582 : vector<8x128xf32>
    %584 = math.tanh %583 : vector<8x128xf32>
    %585 = arith.mulf %580, %584 : vector<8x128xf32>
    %c8 = arith.constant 8 : index
    %c0_171 = arith.constant 0 : index
    %c0_172 = arith.constant 0 : index
    %586 = vector.load %arg1[%c8, %c0_171, %c0_172] : memref<12x8x1xf32, #tpu.memory_space<vmem>>, vector<1x8x1xf32>
    %587 = vector.shape_cast %586 : vector<1x8x1xf32> to vector<8x1xf32>
    %588 = vector.broadcast %587 : vector<8x1xf32> to vector<8x512xf32>
    %589 = arith.mulf %588, %4 : vector<8x512xf32>
    %590 = arith.addf %589, %7 : vector<8x512xf32>
    %591 = vector.extract_strided_slice %551 {offsets = [0, 512], sizes = [8, 512], strides = [1, 1]} : vector<8x1024xf32> to vector<8x512xf32>
    %592 = arith.addf %590, %591 : vector<8x512xf32>
    %593 = vector.extract_strided_slice %592 {offsets = [0, 0], sizes = [8, 128], strides = [1, 1]} : vector<8x512xf32> to vector<8x128xf32>
    %cst_173 = arith.constant 5.000000e-01 : f32
    %594 = vector.broadcast %cst_173 : f32 to vector<8x128xf32>
    %595 = arith.mulf %594, %593 : vector<8x128xf32>
    %596 = math.tanh %595 : vector<8x128xf32>
    %cst_174 = arith.constant 5.000000e-01 : f32
    %597 = vector.broadcast %cst_174 : f32 to vector<8x128xf32>
    %598 = arith.mulf %597, %596 : vector<8x128xf32>
    %cst_175 = arith.constant 5.000000e-01 : f32
    %599 = vector.broadcast %cst_175 : f32 to vector<8x128xf32>
    %600 = arith.addf %598, %599 : vector<8x128xf32>
    %601 = vector.extract_strided_slice %592 {offsets = [0, 128], sizes = [8, 128], strides = [1, 1]} : vector<8x512xf32> to vector<8x128xf32>
    %cst_176 = arith.constant 5.000000e-01 : f32
    %602 = vector.broadcast %cst_176 : f32 to vector<8x128xf32>
    %603 = arith.mulf %602, %601 : vector<8x128xf32>
    %604 = math.tanh %603 : vector<8x128xf32>
    %cst_177 = arith.constant 5.000000e-01 : f32
    %605 = vector.broadcast %cst_177 : f32 to vector<8x128xf32>
    %606 = arith.mulf %605, %604 : vector<8x128xf32>
    %cst_178 = arith.constant 5.000000e-01 : f32
    %607 = vector.broadcast %cst_178 : f32 to vector<8x128xf32>
    %608 = arith.addf %606, %607 : vector<8x128xf32>
    %609 = vector.extract_strided_slice %592 {offsets = [0, 256], sizes = [8, 128], strides = [1, 1]} : vector<8x512xf32> to vector<8x128xf32>
    %610 = math.tanh %609 : vector<8x128xf32>
    %611 = vector.extract_strided_slice %592 {offsets = [0, 384], sizes = [8, 128], strides = [1, 1]} : vector<8x512xf32> to vector<8x128xf32>
    %cst_179 = arith.constant 5.000000e-01 : f32
    %612 = vector.broadcast %cst_179 : f32 to vector<8x128xf32>
    %613 = arith.mulf %612, %611 : vector<8x128xf32>
    %614 = math.tanh %613 : vector<8x128xf32>
    %cst_180 = arith.constant 5.000000e-01 : f32
    %615 = vector.broadcast %cst_180 : f32 to vector<8x128xf32>
    %616 = arith.mulf %615, %614 : vector<8x128xf32>
    %cst_181 = arith.constant 5.000000e-01 : f32
    %617 = vector.broadcast %cst_181 : f32 to vector<8x128xf32>
    %618 = arith.addf %616, %617 : vector<8x128xf32>
    %619 = arith.mulf %608, %546 : vector<8x128xf32>
    %620 = arith.mulf %600, %610 : vector<8x128xf32>
    %621 = arith.addf %619, %620 : vector<8x128xf32>
    %622 = math.tanh %621 : vector<8x128xf32>
    %623 = arith.mulf %618, %622 : vector<8x128xf32>
    %624 = tpu.concatenate %623, %585 in 1 : vector<8x128xf32>, vector<8x128xf32> -> vector<8x256xf32>
    %625 = arith.truncf %624 : vector<8x256xf32> to vector<8x256xbf16>
    %cst_182 = arith.constant dense<0.000000e+00> : vector<8x1024xf32>
    %626 = tpu.matmul %625, %0, %cst_182 {dimension_numbers = #tpu.dot_dimension_numbers<[1], [0], [0], [1], [0, 0, 1, 1], [], []>} : vector<8x256xbf16>, vector<256x1024xbf16>, vector<8x1024xf32> -> vector<8x1024xf32>
    %627 = vector.extract_strided_slice %626 {offsets = [0, 0], sizes = [8, 512], strides = [1, 1]} : vector<8x1024xf32> to vector<8x512xf32>
    %628 = vector.broadcast %1 : vector<1x512xf32> to vector<8x512xf32>
    %629 = arith.addf %627, %628 : vector<8x512xf32>
    %630 = vector.extract_strided_slice %629 {offsets = [0, 0], sizes = [8, 128], strides = [1, 1]} : vector<8x512xf32> to vector<8x128xf32>
    %cst_183 = arith.constant 5.000000e-01 : f32
    %631 = vector.broadcast %cst_183 : f32 to vector<8x128xf32>
    %632 = arith.mulf %631, %630 : vector<8x128xf32>
    %633 = math.tanh %632 : vector<8x128xf32>
    %cst_184 = arith.constant 5.000000e-01 : f32
    %634 = vector.broadcast %cst_184 : f32 to vector<8x128xf32>
    %635 = arith.mulf %634, %633 : vector<8x128xf32>
    %cst_185 = arith.constant 5.000000e-01 : f32
    %636 = vector.broadcast %cst_185 : f32 to vector<8x128xf32>
    %637 = arith.addf %635, %636 : vector<8x128xf32>
    %638 = vector.extract_strided_slice %629 {offsets = [0, 128], sizes = [8, 128], strides = [1, 1]} : vector<8x512xf32> to vector<8x128xf32>
    %cst_186 = arith.constant 5.000000e-01 : f32
    %639 = vector.broadcast %cst_186 : f32 to vector<8x128xf32>
    %640 = arith.mulf %639, %638 : vector<8x128xf32>
    %641 = math.tanh %640 : vector<8x128xf32>
    %cst_187 = arith.constant 5.000000e-01 : f32
    %642 = vector.broadcast %cst_187 : f32 to vector<8x128xf32>
    %643 = arith.mulf %642, %641 : vector<8x128xf32>
    %cst_188 = arith.constant 5.000000e-01 : f32
    %644 = vector.broadcast %cst_188 : f32 to vector<8x128xf32>
    %645 = arith.addf %643, %644 : vector<8x128xf32>
    %646 = vector.extract_strided_slice %629 {offsets = [0, 256], sizes = [8, 128], strides = [1, 1]} : vector<8x512xf32> to vector<8x128xf32>
    %647 = math.tanh %646 : vector<8x128xf32>
    %648 = vector.extract_strided_slice %629 {offsets = [0, 384], sizes = [8, 128], strides = [1, 1]} : vector<8x512xf32> to vector<8x128xf32>
    %cst_189 = arith.constant 5.000000e-01 : f32
    %649 = vector.broadcast %cst_189 : f32 to vector<8x128xf32>
    %650 = arith.mulf %649, %648 : vector<8x128xf32>
    %651 = math.tanh %650 : vector<8x128xf32>
    %cst_190 = arith.constant 5.000000e-01 : f32
    %652 = vector.broadcast %cst_190 : f32 to vector<8x128xf32>
    %653 = arith.mulf %652, %651 : vector<8x128xf32>
    %cst_191 = arith.constant 5.000000e-01 : f32
    %654 = vector.broadcast %cst_191 : f32 to vector<8x128xf32>
    %655 = arith.addf %653, %654 : vector<8x128xf32>
    %656 = arith.mulf %645, %583 : vector<8x128xf32>
    %657 = arith.mulf %637, %647 : vector<8x128xf32>
    %658 = arith.addf %656, %657 : vector<8x128xf32>
    %659 = math.tanh %658 : vector<8x128xf32>
    %660 = arith.mulf %655, %659 : vector<8x128xf32>
    %c9 = arith.constant 9 : index
    %c0_192 = arith.constant 0 : index
    %c0_193 = arith.constant 0 : index
    %661 = vector.load %arg1[%c9, %c0_192, %c0_193] : memref<12x8x1xf32, #tpu.memory_space<vmem>>, vector<1x8x1xf32>
    %662 = vector.shape_cast %661 : vector<1x8x1xf32> to vector<8x1xf32>
    %663 = vector.broadcast %662 : vector<8x1xf32> to vector<8x512xf32>
    %664 = arith.mulf %663, %4 : vector<8x512xf32>
    %665 = arith.addf %664, %7 : vector<8x512xf32>
    %666 = vector.extract_strided_slice %626 {offsets = [0, 512], sizes = [8, 512], strides = [1, 1]} : vector<8x1024xf32> to vector<8x512xf32>
    %667 = arith.addf %665, %666 : vector<8x512xf32>
    %668 = vector.extract_strided_slice %667 {offsets = [0, 0], sizes = [8, 128], strides = [1, 1]} : vector<8x512xf32> to vector<8x128xf32>
    %cst_194 = arith.constant 5.000000e-01 : f32
    %669 = vector.broadcast %cst_194 : f32 to vector<8x128xf32>
    %670 = arith.mulf %669, %668 : vector<8x128xf32>
    %671 = math.tanh %670 : vector<8x128xf32>
    %cst_195 = arith.constant 5.000000e-01 : f32
    %672 = vector.broadcast %cst_195 : f32 to vector<8x128xf32>
    %673 = arith.mulf %672, %671 : vector<8x128xf32>
    %cst_196 = arith.constant 5.000000e-01 : f32
    %674 = vector.broadcast %cst_196 : f32 to vector<8x128xf32>
    %675 = arith.addf %673, %674 : vector<8x128xf32>
    %676 = vector.extract_strided_slice %667 {offsets = [0, 128], sizes = [8, 128], strides = [1, 1]} : vector<8x512xf32> to vector<8x128xf32>
    %cst_197 = arith.constant 5.000000e-01 : f32
    %677 = vector.broadcast %cst_197 : f32 to vector<8x128xf32>
    %678 = arith.mulf %677, %676 : vector<8x128xf32>
    %679 = math.tanh %678 : vector<8x128xf32>
    %cst_198 = arith.constant 5.000000e-01 : f32
    %680 = vector.broadcast %cst_198 : f32 to vector<8x128xf32>
    %681 = arith.mulf %680, %679 : vector<8x128xf32>
    %cst_199 = arith.constant 5.000000e-01 : f32
    %682 = vector.broadcast %cst_199 : f32 to vector<8x128xf32>
    %683 = arith.addf %681, %682 : vector<8x128xf32>
    %684 = vector.extract_strided_slice %667 {offsets = [0, 256], sizes = [8, 128], strides = [1, 1]} : vector<8x512xf32> to vector<8x128xf32>
    %685 = math.tanh %684 : vector<8x128xf32>
    %686 = vector.extract_strided_slice %667 {offsets = [0, 384], sizes = [8, 128], strides = [1, 1]} : vector<8x512xf32> to vector<8x128xf32>
    %cst_200 = arith.constant 5.000000e-01 : f32
    %687 = vector.broadcast %cst_200 : f32 to vector<8x128xf32>
    %688 = arith.mulf %687, %686 : vector<8x128xf32>
    %689 = math.tanh %688 : vector<8x128xf32>
    %cst_201 = arith.constant 5.000000e-01 : f32
    %690 = vector.broadcast %cst_201 : f32 to vector<8x128xf32>
    %691 = arith.mulf %690, %689 : vector<8x128xf32>
    %cst_202 = arith.constant 5.000000e-01 : f32
    %692 = vector.broadcast %cst_202 : f32 to vector<8x128xf32>
    %693 = arith.addf %691, %692 : vector<8x128xf32>
    %694 = arith.mulf %683, %621 : vector<8x128xf32>
    %695 = arith.mulf %675, %685 : vector<8x128xf32>
    %696 = arith.addf %694, %695 : vector<8x128xf32>
    %697 = math.tanh %696 : vector<8x128xf32>
    %698 = arith.mulf %693, %697 : vector<8x128xf32>
    %699 = tpu.concatenate %698, %660 in 1 : vector<8x128xf32>, vector<8x128xf32> -> vector<8x256xf32>
    %700 = arith.truncf %699 : vector<8x256xf32> to vector<8x256xbf16>
    %cst_203 = arith.constant dense<0.000000e+00> : vector<8x1024xf32>
    %701 = tpu.matmul %700, %0, %cst_203 {dimension_numbers = #tpu.dot_dimension_numbers<[1], [0], [0], [1], [0, 0, 1, 1], [], []>} : vector<8x256xbf16>, vector<256x1024xbf16>, vector<8x1024xf32> -> vector<8x1024xf32>
    %702 = vector.extract_strided_slice %701 {offsets = [0, 0], sizes = [8, 512], strides = [1, 1]} : vector<8x1024xf32> to vector<8x512xf32>
    %703 = vector.broadcast %1 : vector<1x512xf32> to vector<8x512xf32>
    %704 = arith.addf %702, %703 : vector<8x512xf32>
    %705 = vector.extract_strided_slice %704 {offsets = [0, 0], sizes = [8, 128], strides = [1, 1]} : vector<8x512xf32> to vector<8x128xf32>
    %cst_204 = arith.constant 5.000000e-01 : f32
    %706 = vector.broadcast %cst_204 : f32 to vector<8x128xf32>
    %707 = arith.mulf %706, %705 : vector<8x128xf32>
    %708 = math.tanh %707 : vector<8x128xf32>
    %cst_205 = arith.constant 5.000000e-01 : f32
    %709 = vector.broadcast %cst_205 : f32 to vector<8x128xf32>
    %710 = arith.mulf %709, %708 : vector<8x128xf32>
    %cst_206 = arith.constant 5.000000e-01 : f32
    %711 = vector.broadcast %cst_206 : f32 to vector<8x128xf32>
    %712 = arith.addf %710, %711 : vector<8x128xf32>
    %713 = vector.extract_strided_slice %704 {offsets = [0, 128], sizes = [8, 128], strides = [1, 1]} : vector<8x512xf32> to vector<8x128xf32>
    %cst_207 = arith.constant 5.000000e-01 : f32
    %714 = vector.broadcast %cst_207 : f32 to vector<8x128xf32>
    %715 = arith.mulf %714, %713 : vector<8x128xf32>
    %716 = math.tanh %715 : vector<8x128xf32>
    %cst_208 = arith.constant 5.000000e-01 : f32
    %717 = vector.broadcast %cst_208 : f32 to vector<8x128xf32>
    %718 = arith.mulf %717, %716 : vector<8x128xf32>
    %cst_209 = arith.constant 5.000000e-01 : f32
    %719 = vector.broadcast %cst_209 : f32 to vector<8x128xf32>
    %720 = arith.addf %718, %719 : vector<8x128xf32>
    %721 = vector.extract_strided_slice %704 {offsets = [0, 256], sizes = [8, 128], strides = [1, 1]} : vector<8x512xf32> to vector<8x128xf32>
    %722 = math.tanh %721 : vector<8x128xf32>
    %723 = vector.extract_strided_slice %704 {offsets = [0, 384], sizes = [8, 128], strides = [1, 1]} : vector<8x512xf32> to vector<8x128xf32>
    %cst_210 = arith.constant 5.000000e-01 : f32
    %724 = vector.broadcast %cst_210 : f32 to vector<8x128xf32>
    %725 = arith.mulf %724, %723 : vector<8x128xf32>
    %726 = math.tanh %725 : vector<8x128xf32>
    %cst_211 = arith.constant 5.000000e-01 : f32
    %727 = vector.broadcast %cst_211 : f32 to vector<8x128xf32>
    %728 = arith.mulf %727, %726 : vector<8x128xf32>
    %cst_212 = arith.constant 5.000000e-01 : f32
    %729 = vector.broadcast %cst_212 : f32 to vector<8x128xf32>
    %730 = arith.addf %728, %729 : vector<8x128xf32>
    %731 = arith.mulf %720, %658 : vector<8x128xf32>
    %732 = arith.mulf %712, %722 : vector<8x128xf32>
    %733 = arith.addf %731, %732 : vector<8x128xf32>
    %734 = math.tanh %733 : vector<8x128xf32>
    %735 = arith.mulf %730, %734 : vector<8x128xf32>
    %c10 = arith.constant 10 : index
    %c0_213 = arith.constant 0 : index
    %c0_214 = arith.constant 0 : index
    %736 = vector.load %arg1[%c10, %c0_213, %c0_214] : memref<12x8x1xf32, #tpu.memory_space<vmem>>, vector<1x8x1xf32>
    %737 = vector.shape_cast %736 : vector<1x8x1xf32> to vector<8x1xf32>
    %738 = vector.broadcast %737 : vector<8x1xf32> to vector<8x512xf32>
    %739 = arith.mulf %738, %4 : vector<8x512xf32>
    %740 = arith.addf %739, %7 : vector<8x512xf32>
    %741 = vector.extract_strided_slice %701 {offsets = [0, 512], sizes = [8, 512], strides = [1, 1]} : vector<8x1024xf32> to vector<8x512xf32>
    %742 = arith.addf %740, %741 : vector<8x512xf32>
    %743 = vector.extract_strided_slice %742 {offsets = [0, 0], sizes = [8, 128], strides = [1, 1]} : vector<8x512xf32> to vector<8x128xf32>
    %cst_215 = arith.constant 5.000000e-01 : f32
    %744 = vector.broadcast %cst_215 : f32 to vector<8x128xf32>
    %745 = arith.mulf %744, %743 : vector<8x128xf32>
    %746 = math.tanh %745 : vector<8x128xf32>
    %cst_216 = arith.constant 5.000000e-01 : f32
    %747 = vector.broadcast %cst_216 : f32 to vector<8x128xf32>
    %748 = arith.mulf %747, %746 : vector<8x128xf32>
    %cst_217 = arith.constant 5.000000e-01 : f32
    %749 = vector.broadcast %cst_217 : f32 to vector<8x128xf32>
    %750 = arith.addf %748, %749 : vector<8x128xf32>
    %751 = vector.extract_strided_slice %742 {offsets = [0, 128], sizes = [8, 128], strides = [1, 1]} : vector<8x512xf32> to vector<8x128xf32>
    %cst_218 = arith.constant 5.000000e-01 : f32
    %752 = vector.broadcast %cst_218 : f32 to vector<8x128xf32>
    %753 = arith.mulf %752, %751 : vector<8x128xf32>
    %754 = math.tanh %753 : vector<8x128xf32>
    %cst_219 = arith.constant 5.000000e-01 : f32
    %755 = vector.broadcast %cst_219 : f32 to vector<8x128xf32>
    %756 = arith.mulf %755, %754 : vector<8x128xf32>
    %cst_220 = arith.constant 5.000000e-01 : f32
    %757 = vector.broadcast %cst_220 : f32 to vector<8x128xf32>
    %758 = arith.addf %756, %757 : vector<8x128xf32>
    %759 = vector.extract_strided_slice %742 {offsets = [0, 256], sizes = [8, 128], strides = [1, 1]} : vector<8x512xf32> to vector<8x128xf32>
    %760 = math.tanh %759 : vector<8x128xf32>
    %761 = vector.extract_strided_slice %742 {offsets = [0, 384], sizes = [8, 128], strides = [1, 1]} : vector<8x512xf32> to vector<8x128xf32>
    %cst_221 = arith.constant 5.000000e-01 : f32
    %762 = vector.broadcast %cst_221 : f32 to vector<8x128xf32>
    %763 = arith.mulf %762, %761 : vector<8x128xf32>
    %764 = math.tanh %763 : vector<8x128xf32>
    %cst_222 = arith.constant 5.000000e-01 : f32
    %765 = vector.broadcast %cst_222 : f32 to vector<8x128xf32>
    %766 = arith.mulf %765, %764 : vector<8x128xf32>
    %cst_223 = arith.constant 5.000000e-01 : f32
    %767 = vector.broadcast %cst_223 : f32 to vector<8x128xf32>
    %768 = arith.addf %766, %767 : vector<8x128xf32>
    %769 = arith.mulf %758, %696 : vector<8x128xf32>
    %770 = arith.mulf %750, %760 : vector<8x128xf32>
    %771 = arith.addf %769, %770 : vector<8x128xf32>
    %772 = math.tanh %771 : vector<8x128xf32>
    %773 = arith.mulf %768, %772 : vector<8x128xf32>
    %774 = tpu.concatenate %773, %735 in 1 : vector<8x128xf32>, vector<8x128xf32> -> vector<8x256xf32>
    %775 = arith.truncf %774 : vector<8x256xf32> to vector<8x256xbf16>
    %cst_224 = arith.constant dense<0.000000e+00> : vector<8x1024xf32>
    %776 = tpu.matmul %775, %0, %cst_224 {dimension_numbers = #tpu.dot_dimension_numbers<[1], [0], [0], [1], [0, 0, 1, 1], [], []>} : vector<8x256xbf16>, vector<256x1024xbf16>, vector<8x1024xf32> -> vector<8x1024xf32>
    %777 = vector.extract_strided_slice %776 {offsets = [0, 0], sizes = [8, 512], strides = [1, 1]} : vector<8x1024xf32> to vector<8x512xf32>
    %778 = vector.broadcast %1 : vector<1x512xf32> to vector<8x512xf32>
    %779 = arith.addf %777, %778 : vector<8x512xf32>
    %780 = vector.extract_strided_slice %779 {offsets = [0, 0], sizes = [8, 128], strides = [1, 1]} : vector<8x512xf32> to vector<8x128xf32>
    %cst_225 = arith.constant 5.000000e-01 : f32
    %781 = vector.broadcast %cst_225 : f32 to vector<8x128xf32>
    %782 = arith.mulf %781, %780 : vector<8x128xf32>
    %783 = math.tanh %782 : vector<8x128xf32>
    %cst_226 = arith.constant 5.000000e-01 : f32
    %784 = vector.broadcast %cst_226 : f32 to vector<8x128xf32>
    %785 = arith.mulf %784, %783 : vector<8x128xf32>
    %cst_227 = arith.constant 5.000000e-01 : f32
    %786 = vector.broadcast %cst_227 : f32 to vector<8x128xf32>
    %787 = arith.addf %785, %786 : vector<8x128xf32>
    %788 = vector.extract_strided_slice %779 {offsets = [0, 128], sizes = [8, 128], strides = [1, 1]} : vector<8x512xf32> to vector<8x128xf32>
    %cst_228 = arith.constant 5.000000e-01 : f32
    %789 = vector.broadcast %cst_228 : f32 to vector<8x128xf32>
    %790 = arith.mulf %789, %788 : vector<8x128xf32>
    %791 = math.tanh %790 : vector<8x128xf32>
    %cst_229 = arith.constant 5.000000e-01 : f32
    %792 = vector.broadcast %cst_229 : f32 to vector<8x128xf32>
    %793 = arith.mulf %792, %791 : vector<8x128xf32>
    %cst_230 = arith.constant 5.000000e-01 : f32
    %794 = vector.broadcast %cst_230 : f32 to vector<8x128xf32>
    %795 = arith.addf %793, %794 : vector<8x128xf32>
    %796 = vector.extract_strided_slice %779 {offsets = [0, 256], sizes = [8, 128], strides = [1, 1]} : vector<8x512xf32> to vector<8x128xf32>
    %797 = math.tanh %796 : vector<8x128xf32>
    %798 = vector.extract_strided_slice %779 {offsets = [0, 384], sizes = [8, 128], strides = [1, 1]} : vector<8x512xf32> to vector<8x128xf32>
    %cst_231 = arith.constant 5.000000e-01 : f32
    %799 = vector.broadcast %cst_231 : f32 to vector<8x128xf32>
    %800 = arith.mulf %799, %798 : vector<8x128xf32>
    %801 = math.tanh %800 : vector<8x128xf32>
    %cst_232 = arith.constant 5.000000e-01 : f32
    %802 = vector.broadcast %cst_232 : f32 to vector<8x128xf32>
    %803 = arith.mulf %802, %801 : vector<8x128xf32>
    %cst_233 = arith.constant 5.000000e-01 : f32
    %804 = vector.broadcast %cst_233 : f32 to vector<8x128xf32>
    %805 = arith.addf %803, %804 : vector<8x128xf32>
    %806 = arith.mulf %795, %733 : vector<8x128xf32>
    %807 = arith.mulf %787, %797 : vector<8x128xf32>
    %808 = arith.addf %806, %807 : vector<8x128xf32>
    %809 = math.tanh %808 : vector<8x128xf32>
    %810 = arith.mulf %805, %809 : vector<8x128xf32>
    %c11 = arith.constant 11 : index
    %c0_234 = arith.constant 0 : index
    %c0_235 = arith.constant 0 : index
    %811 = vector.load %arg1[%c11, %c0_234, %c0_235] : memref<12x8x1xf32, #tpu.memory_space<vmem>>, vector<1x8x1xf32>
    %812 = vector.shape_cast %811 : vector<1x8x1xf32> to vector<8x1xf32>
    %813 = vector.broadcast %812 : vector<8x1xf32> to vector<8x512xf32>
    %814 = arith.mulf %813, %4 : vector<8x512xf32>
    %815 = arith.addf %814, %7 : vector<8x512xf32>
    %816 = vector.extract_strided_slice %776 {offsets = [0, 512], sizes = [8, 512], strides = [1, 1]} : vector<8x1024xf32> to vector<8x512xf32>
    %817 = arith.addf %815, %816 : vector<8x512xf32>
    %818 = vector.extract_strided_slice %817 {offsets = [0, 0], sizes = [8, 128], strides = [1, 1]} : vector<8x512xf32> to vector<8x128xf32>
    %cst_236 = arith.constant 5.000000e-01 : f32
    %819 = vector.broadcast %cst_236 : f32 to vector<8x128xf32>
    %820 = arith.mulf %819, %818 : vector<8x128xf32>
    %821 = math.tanh %820 : vector<8x128xf32>
    %cst_237 = arith.constant 5.000000e-01 : f32
    %822 = vector.broadcast %cst_237 : f32 to vector<8x128xf32>
    %823 = arith.mulf %822, %821 : vector<8x128xf32>
    %cst_238 = arith.constant 5.000000e-01 : f32
    %824 = vector.broadcast %cst_238 : f32 to vector<8x128xf32>
    %825 = arith.addf %823, %824 : vector<8x128xf32>
    %826 = vector.extract_strided_slice %817 {offsets = [0, 128], sizes = [8, 128], strides = [1, 1]} : vector<8x512xf32> to vector<8x128xf32>
    %cst_239 = arith.constant 5.000000e-01 : f32
    %827 = vector.broadcast %cst_239 : f32 to vector<8x128xf32>
    %828 = arith.mulf %827, %826 : vector<8x128xf32>
    %829 = math.tanh %828 : vector<8x128xf32>
    %cst_240 = arith.constant 5.000000e-01 : f32
    %830 = vector.broadcast %cst_240 : f32 to vector<8x128xf32>
    %831 = arith.mulf %830, %829 : vector<8x128xf32>
    %cst_241 = arith.constant 5.000000e-01 : f32
    %832 = vector.broadcast %cst_241 : f32 to vector<8x128xf32>
    %833 = arith.addf %831, %832 : vector<8x128xf32>
    %834 = vector.extract_strided_slice %817 {offsets = [0, 256], sizes = [8, 128], strides = [1, 1]} : vector<8x512xf32> to vector<8x128xf32>
    %835 = math.tanh %834 : vector<8x128xf32>
    %836 = vector.extract_strided_slice %817 {offsets = [0, 384], sizes = [8, 128], strides = [1, 1]} : vector<8x512xf32> to vector<8x128xf32>
    %cst_242 = arith.constant 5.000000e-01 : f32
    %837 = vector.broadcast %cst_242 : f32 to vector<8x128xf32>
    %838 = arith.mulf %837, %836 : vector<8x128xf32>
    %839 = math.tanh %838 : vector<8x128xf32>
    %cst_243 = arith.constant 5.000000e-01 : f32
    %840 = vector.broadcast %cst_243 : f32 to vector<8x128xf32>
    %841 = arith.mulf %840, %839 : vector<8x128xf32>
    %cst_244 = arith.constant 5.000000e-01 : f32
    %842 = vector.broadcast %cst_244 : f32 to vector<8x128xf32>
    %843 = arith.addf %841, %842 : vector<8x128xf32>
    %844 = arith.mulf %833, %771 : vector<8x128xf32>
    %845 = arith.mulf %825, %835 : vector<8x128xf32>
    %846 = arith.addf %844, %845 : vector<8x128xf32>
    %847 = math.tanh %846 : vector<8x128xf32>
    %848 = arith.mulf %843, %847 : vector<8x128xf32>
    %849 = tpu.concatenate %848, %810 in 1 : vector<8x128xf32>, vector<8x128xf32> -> vector<8x256xf32>
    %850 = arith.truncf %849 : vector<8x256xf32> to vector<8x256xbf16>
    %cst_245 = arith.constant dense<0.000000e+00> : vector<8x1024xf32>
    %851 = tpu.matmul %850, %0, %cst_245 {dimension_numbers = #tpu.dot_dimension_numbers<[1], [0], [0], [1], [0, 0, 1, 1], [], []>} : vector<8x256xbf16>, vector<256x1024xbf16>, vector<8x1024xf32> -> vector<8x1024xf32>
    %852 = vector.extract_strided_slice %851 {offsets = [0, 0], sizes = [8, 512], strides = [1, 1]} : vector<8x1024xf32> to vector<8x512xf32>
    %853 = vector.broadcast %1 : vector<1x512xf32> to vector<8x512xf32>
    %854 = arith.addf %852, %853 : vector<8x512xf32>
    %855 = vector.extract_strided_slice %854 {offsets = [0, 0], sizes = [8, 128], strides = [1, 1]} : vector<8x512xf32> to vector<8x128xf32>
    %cst_246 = arith.constant 5.000000e-01 : f32
    %856 = vector.broadcast %cst_246 : f32 to vector<8x128xf32>
    %857 = arith.mulf %856, %855 : vector<8x128xf32>
    %858 = math.tanh %857 : vector<8x128xf32>
    %cst_247 = arith.constant 5.000000e-01 : f32
    %859 = vector.broadcast %cst_247 : f32 to vector<8x128xf32>
    %860 = arith.mulf %859, %858 : vector<8x128xf32>
    %cst_248 = arith.constant 5.000000e-01 : f32
    %861 = vector.broadcast %cst_248 : f32 to vector<8x128xf32>
    %862 = arith.addf %860, %861 : vector<8x128xf32>
    %863 = vector.extract_strided_slice %854 {offsets = [0, 128], sizes = [8, 128], strides = [1, 1]} : vector<8x512xf32> to vector<8x128xf32>
    %cst_249 = arith.constant 5.000000e-01 : f32
    %864 = vector.broadcast %cst_249 : f32 to vector<8x128xf32>
    %865 = arith.mulf %864, %863 : vector<8x128xf32>
    %866 = math.tanh %865 : vector<8x128xf32>
    %cst_250 = arith.constant 5.000000e-01 : f32
    %867 = vector.broadcast %cst_250 : f32 to vector<8x128xf32>
    %868 = arith.mulf %867, %866 : vector<8x128xf32>
    %cst_251 = arith.constant 5.000000e-01 : f32
    %869 = vector.broadcast %cst_251 : f32 to vector<8x128xf32>
    %870 = arith.addf %868, %869 : vector<8x128xf32>
    %871 = vector.extract_strided_slice %854 {offsets = [0, 256], sizes = [8, 128], strides = [1, 1]} : vector<8x512xf32> to vector<8x128xf32>
    %872 = math.tanh %871 : vector<8x128xf32>
    %873 = vector.extract_strided_slice %854 {offsets = [0, 384], sizes = [8, 128], strides = [1, 1]} : vector<8x512xf32> to vector<8x128xf32>
    %cst_252 = arith.constant 5.000000e-01 : f32
    %874 = vector.broadcast %cst_252 : f32 to vector<8x128xf32>
    %875 = arith.mulf %874, %873 : vector<8x128xf32>
    %876 = math.tanh %875 : vector<8x128xf32>
    %cst_253 = arith.constant 5.000000e-01 : f32
    %877 = vector.broadcast %cst_253 : f32 to vector<8x128xf32>
    %878 = arith.mulf %877, %876 : vector<8x128xf32>
    %cst_254 = arith.constant 5.000000e-01 : f32
    %879 = vector.broadcast %cst_254 : f32 to vector<8x128xf32>
    %880 = arith.addf %878, %879 : vector<8x128xf32>
    %881 = arith.mulf %870, %808 : vector<8x128xf32>
    %882 = arith.mulf %862, %872 : vector<8x128xf32>
    %883 = arith.addf %881, %882 : vector<8x128xf32>
    %884 = math.tanh %883 : vector<8x128xf32>
    %885 = arith.mulf %880, %884 : vector<8x128xf32>
    %c0_255 = arith.constant 0 : index
    %c0_256 = arith.constant 0 : index
    %886 = vector.load %arg6[%c0_255, %c0_256] : memref<1x128xf32, #tpu.memory_space<vmem>>, vector<1x128xf32>
    %887 = vector.broadcast %886 : vector<1x128xf32> to vector<8x128xf32>
    %888 = arith.mulf %885, %887 : vector<8x128xf32>
    %cst_257 = arith.constant dense<0.000000e+00> : vector<8xf32>
    %889 = vector.multi_reduction <add>, %888, %cst_257 [1] : vector<8x128xf32> to vector<8xf32>
    %890 = vector.shape_cast %889 : vector<8xf32> to vector<8x1xf32>
    %c0_258 = arith.constant 0 : index
    %c0_259 = arith.constant 0 : index
    %891 = vector.load %arg7[%c0_258, %c0_259] : memref<1x1xf32, #tpu.memory_space<vmem>>, vector<1x1xf32>
    %892 = vector.broadcast %891 : vector<1x1xf32> to vector<8x1xf32>
    %893 = arith.addf %890, %892 : vector<8x1xf32>
    %c0_260 = arith.constant 0 : index
    %c0_261 = arith.constant 0 : index
    %894 = vector.load %arg8[%c0_260, %c0_261] : memref<8x1xf32, #tpu.memory_space<vmem>>, vector<8x1xf32>
    tpu.vector_store %arg8[%c0_260, %c0_261], %893 {strides = array<i32>} : memref<8x1xf32, #tpu.memory_space<vmem>>, vector<8x1xf32>,
    return
  }
  func.func @transform_0(%arg0: i32) -> (i32, i32, i32) {
    %c0_i32 = arith.constant 0 : i32
    %c0_i32_0 = arith.constant 0 : i32
    %c0_i32_1 = arith.constant 0 : i32
    return %c0_i32, %arg0, %c0_i32_0 : i32, i32, i32
  }
  func.func @transform_1(%arg0: i32) -> (i32, i32) {
    %c0_i32 = arith.constant 0 : i32
    %c0_i32_0 = arith.constant 0 : i32
    %c0_i32_1 = arith.constant 0 : i32
    return %c0_i32, %c0_i32_0 : i32, i32
  }
  func.func @transform_2(%arg0: i32) -> (i32, i32) {
    %c0_i32 = arith.constant 0 : i32
    %c0_i32_0 = arith.constant 0 : i32
    %c0_i32_1 = arith.constant 0 : i32
    return %c0_i32, %c0_i32_0 : i32, i32
  }
  func.func @transform_3(%arg0: i32) -> (i32, i32) {
    %c0_i32 = arith.constant 0 : i32
    %c0_i32_0 = arith.constant 0 : i32
    %c0_i32_1 = arith.constant 0 : i32
    return %c0_i32, %c0_i32_0 : i32, i32
  }
  func.func @transform_4(%arg0: i32) -> (i32, i32) {
    %c0_i32 = arith.constant 0 : i32
    %c0_i32_0 = arith.constant 0 : i32
    %c0_i32_1 = arith.constant 0 : i32
    return %c0_i32, %c0_i32_0 : i32, i32
  }
  func.func @transform_5(%arg0: i32) -> (i32, i32) {
    %c0_i32 = arith.constant 0 : i32
    %c0_i32_0 = arith.constant 0 : i32
    %c0_i32_1 = arith.constant 0 : i32
    return %c0_i32, %c0_i32_0 : i32, i32
  }
  func.func @transform_6(%arg0: i32) -> (i32, i32) {
    %c0_i32 = arith.constant 0 : i32
    %c0_i32_0 = arith.constant 0 : i32
    %c0_i32_1 = arith.constant 0 : i32
    return %c0_i32, %c0_i32_0 : i32, i32
  }
  func.func @transform_7(%arg0: i32) -> (i32, i32) {
    %c0_i32 = arith.constant 0 : i32
    %c0_i32_0 = arith.constant 0 : i32
    return %arg0, %c0_i32 : i32, i32
  }
}

</mosaic_0001>

<llo_original>
// kernel: tpu_custom_call.1
$region0: #{tpu_custom_call.1}
  #allocation0 [shape = 'u32[]', space=smem, size = 0x4, offset = 0x4, fixed_abs, tag = 'smem constant byte address 0x4 - core index']
  #allocation1 [shape = 'u32[72,128]{1,0:T(1,128)}', space=vmem, size = 0x9000, scoped, tag = 'internal scratch']
  #allocation2 [shape = 'f32[1,1]{1,0:T(1,128)S(1)}', space=vmem, size = 0x200, scoped, tag = 'scoped memory for tpu_custom_call.1']
  %s0 = inlined_call_operand.vmem [shape: f32[12,16,1], index: 0, kind: input, shape index: {}]
  %s1 = inlined_call_operand.vmem [shape: f32[1,512], index: 1, kind: input, shape index: {}]
  %s2 = inlined_call_operand.vmem [shape: f32[1,512], index: 2, kind: input, shape index: {}]
  %s3 = inlined_call_operand.hbm [shape: bf16[256,1024], index: 3, kind: input, shape index: {}]
  %s4 = inlined_call_operand.vmem [shape: f32[1,512], index: 4, kind: input, shape index: {}]
  %s5 = inlined_call_operand.vmem [shape: f32[1,128], index: 5, kind: input, shape index: {}]
  %s6 = inlined_call_operand.<no memory space> [shape: f32[1,1], index: 6, kind: input, shape index: {}]
  %s7 = inlined_call_operand.vmem [shape: f32[16,1], index: 7, kind: output, shape index: {}]
  %s8 = sld [smem:[#allocation0]]
  $region103: #{tpu_custom_call.1} parent=0
    _
  %s10 = ssub.s32 1, %s8
  %s11 = scalar_select 0, %s10, %s8
  %v12 = vstv %s6
  %13 = vst [vmem:[#allocation2] sm:$0x1] %v12
  $region1: #{tpu_custom_call.1} parent=0
    #allocation3 [shape = 'u8[98304]{0}', space=vmem, size = 0x18000, scoped, tag = 'input window, operand 0']
    #allocation4 [shape = 'u8[524288]{0}', space=vmem, size = 0x80000, scoped, tag = 'input window, operand 3, single buffered']
    #allocation5 [shape = 's32[2]{0}', space=sflag, size = 0x8, scoped, tag = 'scoped memory for tpu_custom_call.1']
    %14 = vsyncpa [#allocation5], 0
    loop: start=0, step=1, limit=4
    $region2: #{tpu_custom_call.1} parent=1 // loop_pre_header
      _
    $region3: #{tpu_custom_call.1} parent=1 // loop_header
      %s16 = sphi 0, %s20
      %p17 = scmp.ge.s32.totalorder %s16, 4
      %s26 = sphi 0, %s28
      %s29 = sphi 0, %s26
      %s30 = sphi 0, %s29
      %s46 = sphi 0, %s30
      %s50 = sphi 0, %s50
      %s52 = sphi 0, %s50
      %s53 = sphi 0, %s52
      %s67 = sphi 0, %s53
      %s71 = sphi 0, %s71
      %s73 = sphi 0, %s71
      %s74 = sphi 0, %s73
      %s88 = sphi 0, %s74
      %s92 = sphi 0, %s92
      %s94 = sphi 0, %s92
      %s95 = sphi 0, %s94
      %s109 = sphi 0, %s95
      %s113 = sphi 0, %s113
      %s115 = sphi 0, %s113
      %s116 = sphi 0, %s115
      %s130 = sphi 0, %s116
      %s134 = sphi 0, %s134
      %s136 = sphi 0, %s134
      %s137 = sphi 0, %s136
      %s151 = sphi 0, %s137
      %s155 = sphi 0, %s155
      %s157 = sphi 0, %s155
      %s158 = sphi 0, %s157
      %s172 = sphi 0, %s158
      %s178 = sphi 0, %s180
      %s181 = sphi 0, %s178
      %s182 = sphi 0, %s181
      %s198 = sphi 0, %s182
    $region4: #{tpu_custom_call.1} parent=1 // loop_header_branch
      %19 = sbr.rel (%p17) target = $region8
    $region5: #{tpu_custom_call.1} parent=1 // loop_body
      %s21 = ssub.s32 %s16, 1
      %s22 = ssub.s32 %s16, 2
      %s23 = sadd.s32 %s16, 1
      %s24 = ssub.s32 %s16, %s23
      %p25 = scmp.eq.s32.totalorder %s24, 0
      %s27 = sadd.s32 %s26, 1
      %s28 = scalar_select %p25, %s26, %s27
      %p31 = pneg %p25
      %p32 = scmp.eq.s32.totalorder %s16, 1
      %p33 = por %p31, %p32
      %p34 = scmp.ne.s32.totalorder %s26, %s29
      %p35 = scmp.eq.s32.totalorder %s16, 0
      %p36 = por %p34, %p35
      %p37 = scmp.ne.s32.totalorder %s26, %s29
      %p38 = scmp.eq.s32.totalorder %s21, 1
      %p39 = por %p37, %p38
      %p40 = scmp.ne.s32.totalorder %s29, %s30
      %p41 = scmp.eq.s32.totalorder %s21, 0
      %p42 = por %p40, %p41
      %p43 = scmp.ne.s32.totalorder %s29, %s30
      %p44 = scmp.eq.s32.totalorder %s22, 1
      %p45 = por %p43, %p44
      %p47 = scmp.ne.s32.totalorder %s30, %s46
      %p48 = scmp.eq.s32.totalorder %s22, 0
      %p49 = por %p47, %p48
      %s51 = sadd.s32 %s50, 1
      %p54 = scmp.eq.s32.totalorder %s16, 1
      %p55 = scmp.ne.s32.totalorder %s50, %s52
      %p56 = scmp.eq.s32.totalorder %s16, 0
      %p57 = por %p55, %p56
      %p58 = scmp.ne.s32.totalorder %s50, %s52
      %p59 = scmp.eq.s32.totalorder %s21, 1
      %p60 = por %p58, %p59
      %p61 = scmp.ne.s32.totalorder %s52, %s53
      %p62 = scmp.eq.s32.totalorder %s21, 0
      %p63 = por %p61, %p62
      %p64 = scmp.ne.s32.totalorder %s52, %s53
      %p65 = scmp.eq.s32.totalorder %s22, 1
      %p66 = por %p64, %p65
      %p68 = scmp.ne.s32.totalorder %s53, %s67
      %p69 = scmp.eq.s32.totalorder %s22, 0
      %p70 = por %p68, %p69
      %s72 = sadd.s32 %s71, 1
      %p75 = scmp.eq.s32.totalorder %s16, 1
      %p76 = scmp.ne.s32.totalorder %s71, %s73
      %p77 = scmp.eq.s32.totalorder %s16, 0
      %p78 = por %p76, %p77
      %p79 = scmp.ne.s32.totalorder %s71, %s73
      %p80 = scmp.eq.s32.totalorder %s21, 1
      %p81 = por %p79, %p80
      %p82 = scmp.ne.s32.totalorder %s73, %s74
      %p83 = scmp.eq.s32.totalorder %s21, 0
      %p84 = por %p82, %p83
      %p85 = scmp.ne.s32.totalorder %s73, %s74
      %p86 = scmp.eq.s32.totalorder %s22, 1
      %p87 = por %p85, %p86
      %p89 = scmp.ne.s32.totalorder %s74, %s88
      %p90 = scmp.eq.s32.totalorder %s22, 0
      %p91 = por %p89, %p90
      %s93 = sadd.s32 %s92, 1
      %p96 = scmp.eq.s32.totalorder %s16, 1
      %p97 = scmp.ne.s32.totalorder %s92, %s94
      %p98 = scmp.eq.s32.totalorder %s16, 0
      %p99 = por %p97, %p98
      %p100 = scmp.ne.s32.totalorder %s92, %s94
      %p101 = scmp.eq.s32.totalorder %s21, 1
      %p102 = por %p100, %p101
      %p103 = scmp.ne.s32.totalorder %s94, %s95
      %p104 = scmp.eq.s32.totalorder %s21, 0
      %p105 = por %p103, %p104
      %p106 = scmp.ne.s32.totalorder %s94, %s95
      %p107 = scmp.eq.s32.totalorder %s22, 1
      %p108 = por %p106, %p107
      %p110 = scmp.ne.s32.totalorder %s95, %s109
      %p111 = scmp.eq.s32.totalorder %s22, 0
      %p112 = por %p110, %p111
      %s114 = sadd.s32 %s113, 1
      %p117 = scmp.eq.s32.totalorder %s16, 1
      %p118 = scmp.ne.s32.totalorder %s113, %s115
      %p119 = scmp.eq.s32.totalorder %s16, 0
      %p120 = por %p118, %p119
      %p121 = scmp.ne.s32.totalorder %s113, %s115
      %p122 = scmp.eq.s32.totalorder %s21, 1
      %p123 = por %p121, %p122
      %p124 = scmp.ne.s32.totalorder %s115, %s116
      %p125 = scmp.eq.s32.totalorder %s21, 0
      %p126 = por %p124, %p125
      %p127 = scmp.ne.s32.totalorder %s115, %s116
      %p128 = scmp.eq.s32.totalorder %s22, 1
      %p129 = por %p127, %p128
      %p131 = scmp.ne.s32.totalorder %s116, %s130
      %p132 = scmp.eq.s32.totalorder %s22, 0
      %p133 = por %p131, %p132
      %s135 = sadd.s32 %s134, 1
      %p138 = scmp.eq.s32.totalorder %s16, 1
      %p139 = scmp.ne.s32.totalorder %s134, %s136
      %p140 = scmp.eq.s32.totalorder %s16, 0
      %p141 = por %p139, %p140
      %p142 = scmp.ne.s32.totalorder %s134, %s136
      %p143 = scmp.eq.s32.totalorder %s21, 1
      %p144 = por %p142, %p143
      %p145 = scmp.ne.s32.totalorder %s136, %s137
      %p146 = scmp.eq.s32.totalorder %s21, 0
      %p147 = por %p145, %p146
      %p148 = scmp.ne.s32.totalorder %s136, %s137
      %p149 = scmp.eq.s32.totalorder %s22, 1
      %p150 = por %p148, %p149
      %p152 = scmp.ne.s32.totalorder %s137, %s151
      %p153 = scmp.eq.s32.totalorder %s22, 0
      %p154 = por %p152, %p153
      %s156 = sadd.s32 %s155, 1
      %p159 = scmp.eq.s32.totalorder %s16, 1
      %p160 = scmp.ne.s32.totalorder %s155, %s157
      %p161 = scmp.eq.s32.totalorder %s16, 0
      %p162 = por %p160, %p161
      %p163 = scmp.ne.s32.totalorder %s155, %s157
      %p164 = scmp.eq.s32.totalorder %s21, 1
      %p165 = por %p163, %p164
      %p166 = scmp.ne.s32.totalorder %s157, %s158
      %p167 = scmp.eq.s32.totalorder %s21, 0
      %p168 = por %p166, %p167
      %p169 = scmp.ne.s32.totalorder %s157, %s158
      %p170 = scmp.eq.s32.totalorder %s22, 1
      %p171 = por %p169, %p170
      %p173 = scmp.ne.s32.totalorder %s158, %s172
      %p174 = scmp.eq.s32.totalorder %s22, 0
      %p175 = por %p173, %p174
      %s176 = ssub.s32 %s16, %s23
      %p177 = scmp.eq.s32.totalorder %s176, 0
      %s179 = sadd.s32 %s178, 1
      %s180 = scalar_select %p177, %s178, %s179
      %p183 = pneg %p177
      %p184 = scmp.eq.s32.totalorder %s16, 1
      %p185 = por %p183, %p184
      %p186 = scmp.ne.s32.totalorder %s178, %s181
      %p187 = scmp.eq.s32.totalorder %s16, 0
      %p188 = por %p186, %p187
      %p189 = scmp.ne.s32.totalorder %s178, %s181
      %p190 = scmp.eq.s32.totalorder %s21, 1
      %p191 = por %p189, %p190
      %p192 = scmp.ne.s32.totalorder %s181, %s182
      %p193 = scmp.eq.s32.totalorder %s21, 0
      %p194 = por %p192, %p193
      %p195 = scmp.ne.s32.totalorder %s181, %s182
      %p196 = scmp.eq.s32.totalorder %s22, 1
      %p197 = por %p195, %p196
      %p199 = scmp.ne.s32.totalorder %s182, %s198
      %p200 = scmp.eq.s32.totalorder %s22, 0
      %p201 = por %p199, %p200
      %p202 = scmp.le.s32.totalorder 1, %s16
      %p203 = scmp.lt.s32.totalorder %s16, 3
      %p204 = pnand %p202, %p203
      %p205 = pneg %p204
      // Predicated region
      $region9: #{tpu_custom_call.1} parent=5 // pred_check
        _
      $region10: #{tpu_custom_call.1} parent=5 // pred_check_branch
        %207 = sbr.rel (%p204) target = $region12
      $region11: #{tpu_custom_call.1} parent=5 // pred_region
        %s208 = ssub.s32 %s16, 1
        // Predicated region
        $region13: #{tpu_custom_call.1} parent=11 // pred_check
          %p209 = pneg %p63
        $region14: #{tpu_custom_call.1} parent=11 // pred_check_branch
          %211 = sbr.rel (%p209) target = $region16
        $region15: #{tpu_custom_call.1} parent=11 // pred_region
          _
        $region16: #{tpu_custom_call.1} parent=11 // pred_fallthru
          _
        // Predicated region
        $region17: #{tpu_custom_call.1} parent=11 // pred_check
          %p212 = pneg %p84
        $region18: #{tpu_custom_call.1} parent=11 // pred_check_branch
          %214 = sbr.rel (%p212) target = $region20
        $region19: #{tpu_custom_call.1} parent=11 // pred_region
          _
        $region20: #{tpu_custom_call.1} parent=11 // pred_fallthru
          _
        // Predicated region
        $region21: #{tpu_custom_call.1} parent=11 // pred_check
          %p215 = pneg %p105
        $region22: #{tpu_custom_call.1} parent=11 // pred_check_branch
          %217 = sbr.rel (%p215) target = $region24
        $region23: #{tpu_custom_call.1} parent=11 // pred_region
          %219 = vsyncadd [#allocation5], 0
          %s220 = sshll.u32 %s3, 4
          %s221 = int_to_ptr.hbm [resolvable:$true] %s220
          %s222 = sshll.u32 [#allocation4], 4
          %s223 = int_to_ptr.vmem [resolvable:$true] %s222
          %228 = dma.hbm_to_vmem [thread:$0]  %s221, 16384, %s223, [#allocation5], 512, 512, 32
        $region24: #{tpu_custom_call.1} parent=11 // pred_fallthru
          _
        // Predicated region
        $region25: #{tpu_custom_call.1} parent=11 // pred_check
          %p229 = pneg %p126
        $region26: #{tpu_custom_call.1} parent=11 // pred_check_branch
          %231 = sbr.rel (%p229) target = $region28
        $region27: #{tpu_custom_call.1} parent=11 // pred_region
          _
        $region28: #{tpu_custom_call.1} parent=11 // pred_fallthru
          _
        // Predicated region
        $region29: #{tpu_custom_call.1} parent=11 // pred_check
          %p232 = pneg %p147
        $region30: #{tpu_custom_call.1} parent=11 // pred_check_branch
          %234 = sbr.rel (%p232) target = $region32
        $region31: #{tpu_custom_call.1} parent=11 // pred_region
          _
        $region32: #{tpu_custom_call.1} parent=11 // pred_fallthru
          _
        // Predicated region
        $region33: #{tpu_custom_call.1} parent=11 // pred_check
          %p235 = pneg %p168
        $region34: #{tpu_custom_call.1} parent=11 // pred_check_branch
          %237 = sbr.rel (%p235) target = $region36
        $region35: #{tpu_custom_call.1} parent=11 // pred_region
          _
        $region36: #{tpu_custom_call.1} parent=11 // pred_fallthru
          _
      $region12: #{tpu_custom_call.1} parent=5 // pred_fallthru
        _
      %p238 = scmp.lt.s32.totalorder %s16, 2
      // Predicated region
      $region37: #{tpu_custom_call.1} parent=5 // pred_check
        %p239 = pneg %p238
      $region38: #{tpu_custom_call.1} parent=5 // pred_check_branch
        %241 = sbr.rel (%p239) target = $region40
      $region39: #{tpu_custom_call.1} parent=5 // pred_region
        // Predicated region
        $region41: #{tpu_custom_call.1} parent=39 // pred_check
          %p242 = pneg %p36
        $region42: #{tpu_custom_call.1} parent=39 // pred_check_branch
          %244 = sbr.rel (%p242) target = $region44
        $region43: #{tpu_custom_call.1} parent=39 // pred_region
          %s245 = sand.u32 %s26, 1
          %s246 = sand.u32 %s26, 1
          %s247 = smul.addr %s246, 96
          %s248 = scalar_lea.vmem [#allocation3], %s247
          %s249 = smul.addr %s16, 8
          %s250 = scalar_lea.vmem %s0, %s249
          // Predicated region
          $region45: #{tpu_custom_call.1} parent=43 // pred_check
            _
          $region46: #{tpu_custom_call.1} parent=43 // pred_check_branch
            %252 = sbr.rel (0) target = $region48
          $region47: #{tpu_custom_call.1} parent=43 // pred_region
            // Predicated region
            $region49: #{tpu_custom_call.1} parent=47 // pred_check
              _
            $region50: #{tpu_custom_call.1} parent=47 // pred_check_branch
              %254 = sbr.rel (0) target = $region52
            $region51: #{tpu_custom_call.1} parent=47 // pred_region
              // Predicated region
              $region64: #{tpu_custom_call.1} parent=51 // pred_check
                _
              $region65: #{tpu_custom_call.1} parent=51 // pred_check_branch
                %292 = sbr.rel (0) target = $region67
              $region66: #{tpu_custom_call.1} parent=51 // pred_region
                loop: start=0, step=1, limit=1
                $region68: #{tpu_custom_call.1} parent=66 // loop_pre_header
                  _
                $region69: #{tpu_custom_call.1} parent=66 // loop_header
                  %s294 = sphi 0, %s298
                  %p295 = scmp.ge.s32.totalorder %s294, 1
                  %s299 = sphi %s250, %s250
                  %s300 = sphi %s248, %s248
                $region70: #{tpu_custom_call.1} parent=66 // loop_header_branch
                  %297 = sbr.rel (%p295) target = $region74
                $region71: #{tpu_custom_call.1} parent=66 // loop_body
                  %v301 = vld [vmem:[%s299] sm:$0xff]
                  %302 = vst [vmem:[%s300] sm:$0xff] %v301
                  %v303 = vld [vmem:[%s299 + $0x10] sm:$0xff]
                  %304 = vst [vmem:[%s300 + $0x8] sm:$0xff] %v303
                  %v305 = vld [vmem:[%s299 + $0x20] sm:$0xff]
                  %306 = vst [vmem:[%s300 + $0x10] sm:$0xff] %v305
                  %v307 = vld [vmem:[%s299 + $0x30] sm:$0xff]
                  %308 = vst [vmem:[%s300 + $0x18] sm:$0xff] %v307
                  %v309 = vld [vmem:[%s299 + $0x40] sm:$0xff]
                  %310 = vst [vmem:[%s300 + $0x20] sm:$0xff] %v309
                  %v311 = vld [vmem:[%s299 + $0x50] sm:$0xff]
                  %312 = vst [vmem:[%s300 + $0x28] sm:$0xff] %v311
                  %v313 = vld [vmem:[%s299 + $0x60] sm:$0xff]
                  %314 = vst [vmem:[%s300 + $0x30] sm:$0xff] %v313
                  %v315 = vld [vmem:[%s299 + $0x70] sm:$0xff]
                  %316 = vst [vmem:[%s300 + $0x38] sm:$0xff] %v315
                  %v317 = vld [vmem:[%s299 + $0x80] sm:$0xff]
                  %318 = vst [vmem:[%s300 + $0x40] sm:$0xff] %v317
                  %v319 = vld [vmem:[%s299 + $0x90] sm:$0xff]
                  %320 = vst [vmem:[%s300 + $0x48] sm:$0xff] %v319
                  %v321 = vld [vmem:[%s299 + $0xa0] sm:$0xff]
                  %322 = vst [vmem:[%s300 + $0x50] sm:$0xff] %v321
                  %v323 = vld [vmem:[%s299 + $0xb0] sm:$0xff]
                  %324 = vst [vmem:[%s300 + $0x58] sm:$0xff] %v323
                $region72: #{tpu_custom_call.1} parent=66 // loop_footer
                  %s298 = sadd.s32 1, %s294
                $region73: #{tpu_custom_call.1} parent=66 // loop_footer_branch
                  %293 = sbr.rel target = $region69
                $region74: #{tpu_custom_call.1} parent=66 // loop_exit
                  _
              $region67: #{tpu_custom_call.1} parent=51 // pred_fallthru
                _
              // Predicated region
              $region75: #{tpu_custom_call.1} parent=51 // pred_check
                _
              $region76: #{tpu_custom_call.1} parent=51 // pred_check_branch
                %326 = sbr.rel target = $region78
              $region77: #{tpu_custom_call.1} parent=51 // pred_region
                _
              $region78: #{tpu_custom_call.1} parent=51 // pred_fallthru
                _
            $region52: #{tpu_custom_call.1} parent=47 // pred_fallthru
              _
            // Predicated region
            $region53: #{tpu_custom_call.1} parent=47 // pred_check
              _
            $region54: #{tpu_custom_call.1} parent=47 // pred_check_branch
              %256 = sbr.rel target = $region56
            $region55: #{tpu_custom_call.1} parent=47 // pred_region
              %s258 = ssub.s32 256, 1
              loop: start=0, step=1, limit=1
              $region57: #{tpu_custom_call.1} parent=55 // loop_pre_header
                _
              $region58: #{tpu_custom_call.1} parent=55 // loop_header
                %s260 = sphi 0, %s264
                %p261 = scmp.ge.s32.totalorder %s260, 1
                %s265 = sphi %s250, %s250
                %s266 = sphi %s248, %s248
              $region59: #{tpu_custom_call.1} parent=55 // loop_header_branch
                %263 = sbr.rel (%p261) target = $region63
              $region60: #{tpu_custom_call.1} parent=55 // loop_body
                %v267 = vld [vmem:[%s265] sm:%s258]
                %268 = vst [vmem:[%s266] sm:%s258] %v267
                %v269 = vld [vmem:[%s265 + $0x10] sm:%s258]
                %270 = vst [vmem:[%s266 + $0x8] sm:%s258] %v269
                %v271 = vld [vmem:[%s265 + $0x20] sm:%s258]
                %272 = vst [vmem:[%s266 + $0x10] sm:%s258] %v271
                %v273 = vld [vmem:[%s265 + $0x30] sm:%s258]
                %274 = vst [vmem:[%s266 + $0x18] sm:%s258] %v273
                %v275 = vld [vmem:[%s265 + $0x40] sm:%s258]
                %276 = vst [vmem:[%s266 + $0x20] sm:%s258] %v275
                %v277 = vld [vmem:[%s265 + $0x50] sm:%s258]
                %278 = vst [vmem:[%s266 + $0x28] sm:%s258] %v277
                %v279 = vld [vmem:[%s265 + $0x60] sm:%s258]
                %280 = vst [vmem:[%s266 + $0x30] sm:%s258] %v279
                %v281 = vld [vmem:[%s265 + $0x70] sm:%s258]
                %282 = vst [vmem:[%s266 + $0x38] sm:%s258] %v281
                %v283 = vld [vmem:[%s265 + $0x80] sm:%s258]
                %284 = vst [vmem:[%s266 + $0x40] sm:%s258] %v283
                %v285 = vld [vmem:[%s265 + $0x90] sm:%s258]
                %286 = vst [vmem:[%s266 + $0x48] sm:%s258] %v285
                %v287 = vld [vmem:[%s265 + $0xa0] sm:%s258]
                %288 = vst [vmem:[%s266 + $0x50] sm:%s258] %v287
                %v289 = vld [vmem:[%s265 + $0xb0] sm:%s258]
                %290 = vst [vmem:[%s266 + $0x58] sm:%s258] %v289
              $region61: #{tpu_custom_call.1} parent=55 // loop_footer
                %s264 = sadd.s32 1, %s260
              $region62: #{tpu_custom_call.1} parent=55 // loop_footer_branch
                %259 = sbr.rel target = $region58
              $region63: #{tpu_custom_call.1} parent=55 // loop_exit
                _
            $region56: #{tpu_custom_call.1} parent=47 // pred_fallthru
              _
          $region48: #{tpu_custom_call.1} parent=43 // pred_fallthru
            _
          %327 = vnop
        $region44: #{tpu_custom_call.1} parent=39 // pred_fallthru
          _
      $region40: #{tpu_custom_call.1} parent=5 // pred_fallthru
        _
      %p328 = scmp.le.s32.totalorder 1, %s16
      %p329 = scmp.lt.s32.totalorder %s16, 3
      %p330 = pnand %p328, %p329
      %p331 = pneg %p330
      // Predicated region
      $region79: #{tpu_custom_call.1} parent=5 // pred_check
        _
      $region80: #{tpu_custom_call.1} parent=5 // pred_check_branch
        %333 = sbr.rel (%p330) target = $region82
      $region81: #{tpu_custom_call.1} parent=5 // pred_region
        %s334 = ssub.s32 %s16, 1
        %s335 = sand.u32 %s29, 1
        %s336 = sand.u32 %s29, 1
        %s337 = smul.addr %s336, 96
        %s338 = scalar_lea.vmem [#allocation3], %s337
        // Predicated region
        $region83: #{tpu_custom_call.1} parent=81 // pred_check
          %p339 = pneg %p42
        $region84: #{tpu_custom_call.1} parent=81 // pred_check_branch
          %341 = sbr.rel (%p339) target = $region86
        $region85: #{tpu_custom_call.1} parent=81 // pred_region
          _
        $region86: #{tpu_custom_call.1} parent=81 // pred_fallthru
          _
        // Predicated region
        $region87: #{tpu_custom_call.1} parent=81 // pred_check
          %p342 = pneg %p105
        $region88: #{tpu_custom_call.1} parent=81 // pred_check_branch
          %344 = sbr.rel (%p342) target = $region90
        $region89: #{tpu_custom_call.1} parent=81 // pred_region
          %346 = dma.done [#allocation5], 16384
        $region90: #{tpu_custom_call.1} parent=81 // pred_fallthru
          _
        %s347 = sand.u32 %s29, 1
        %s348 = sand.u32 %s29, 1
        %s349 = smul.addr %s348, 96
        %s350 = scalar_lea.vmem [#allocation3], %s349
        %p351 = pneg %p42
        %p352 = pneg %p39
        %p353 = pneg %p63
        %p354 = pneg %p60
        %p355 = pneg %p84
        %p356 = pneg %p81
        %p357 = pneg %p105
        %p358 = pneg %p102
        %p359 = pneg %p126
        %p360 = pneg %p123
        %p361 = pneg %p147
        %p362 = pneg %p144
        %p363 = pneg %p168
        %p364 = pneg %p165
        %p365 = pneg %p194
        %p366 = pneg %p191
        %p367 = scmp.lt.s32.totalorder %s21, 1
        %s368 = scalar_select %p367, %s21, 1
        %s369 = smul.addr %s368, 8
        %s370 = scalar_lea.vmem %s7, %s369
        %p371 = scmp.lt.s32.totalorder %s21, 1
        %s372 = scalar_select %p371, %s21, 1
        %s373 = smul.addr %s372, 8
        %s374 = scalar_lea.vmem %s7, %s373
        %v375 = vld [vmem:[#allocation4] sm:$0xff]
        %v376 = vld [vmem:[#allocation4 + $0x8] sm:$0xff]
        %v377 = vld [vmem:[#allocation4 + $0x10] sm:$0xff]
        %v378 = vld [vmem:[#allocation4 + $0x18] sm:$0xff]
        %v379 = vld [vmem:[#allocation4 + $0x20] sm:$0xff]
        %v380 = vld [vmem:[#allocation4 + $0x28] sm:$0xff]
        %v381 = vld [vmem:[#allocation4 + $0x30] sm:$0xff]
        %v382 = vld [vmem:[#allocation4 + $0x38] sm:$0xff]
        %v383 = vld [vmem:[#allocation4 + $0x40] sm:$0xff]
        %v384 = vld [vmem:[#allocation4 + $0x48] sm:$0xff]
        %v385 = vld [vmem:[#allocation4 + $0x50] sm:$0xff]
        %v386 = vld [vmem:[#allocation4 + $0x58] sm:$0xff]
        %v387 = vld [vmem:[#allocation4 + $0x60] sm:$0xff]
        %v388 = vld [vmem:[#allocation4 + $0x68] sm:$0xff]
        %v389 = vld [vmem:[#allocation4 + $0x70] sm:$0xff]
        %v390 = vld [vmem:[#allocation4 + $0x78] sm:$0xff]
        %v391 = vld [vmem:[#allocation4 + $0x80] sm:$0xff]
        %v392 = vld [vmem:[#allocation4 + $0x88] sm:$0xff]
        %v393 = vld [vmem:[#allocation4 + $0x90] sm:$0xff]
        %v394 = vld [vmem:[#allocation4 + $0x98] sm:$0xff]
        %v395 = vld [vmem:[#allocation4 + $0xa0] sm:$0xff]
        %v396 = vld [vmem:[#allocation4 + $0xa8] sm:$0xff]
        %v397 = vld [vmem:[#allocation4 + $0xb0] sm:$0xff]
        %v398 = vld [vmem:[#allocation4 + $0xb8] sm:$0xff]
        %v399 = vld [vmem:[#allocation4 + $0xc0] sm:$0xff]
        %v400 = vld [vmem:[#allocation4 + $0xc8] sm:$0xff]
        %v401 = vld [vmem:[#allocation4 + $0xd0] sm:$0xff]
        %v402 = vld [vmem:[#allocation4 + $0xd8] sm:$0xff]
        %v403 = vld [vmem:[#allocation4 + $0xe0] sm:$0xff]
        %v404 = vld [vmem:[#allocation4 + $0xe8] sm:$0xff]
        %v405 = vld [vmem:[#allocation4 + $0xf0] sm:$0xff]
        %v406 = vld [vmem:[#allocation4 + $0xf8] sm:$0xff]
        %v407 = vld [vmem:[#allocation4 + $0x100] sm:$0xff]
        %v408 = vld [vmem:[#allocation4 + $0x108] sm:$0xff]
        %v409 = vld [vmem:[#allocation4 + $0x110] sm:$0xff]
        %v410 = vld [vmem:[#allocation4 + $0x118] sm:$0xff]
        %v411 = vld [vmem:[#allocation4 + $0x120] sm:$0xff]
        %v412 = vld [vmem:[#allocation4 + $0x128] sm:$0xff]
        %v413 = vld [vmem:[#allocation4 + $0x130] sm:$0xff]
        %v414 = vld [vmem:[#allocation4 + $0x138] sm:$0xff]
        %v415 = vld [vmem:[#allocation4 + $0x140] sm:$0xff]
        %v416 = vld [vmem:[#allocation4 + $0x148] sm:$0xff]
        %v417 = vld [vmem:[#allocation4 + $0x150] sm:$0xff]
        %v418 = vld [vmem:[#allocation4 + $0x158] sm:$0xff]
        %v419 = vld [vmem:[#allocation4 + $0x160] sm:$0xff]
        %v420 = vld [vmem:[#allocation4 + $0x168] sm:$0xff]
        %v421 = vld [vmem:[#allocation4 + $0x170] sm:$0xff]
        %v422 = vld [vmem:[#allocation4 + $0x178] sm:$0xff]
        %v423 = vld [vmem:[#allocation4 + $0x180] sm:$0xff]
        %v424 = vld [vmem:[#allocation4 + $0x188] sm:$0xff]
        %v425 = vld [vmem:[#allocation4 + $0x190] sm:$0xff]
        %v426 = vld [vmem:[#allocation4 + $0x198] sm:$0xff]
        %v427 = vld [vmem:[#allocation4 + $0x1a0] sm:$0xff]
        %v428 = vld [vmem:[#allocation4 + $0x1a8] sm:$0xff]
        %v429 = vld [vmem:[#allocation4 + $0x1b0] sm:$0xff]
        %v430 = vld [vmem:[#allocation4 + $0x1b8] sm:$0xff]
        %v431 = vld [vmem:[#allocation4 + $0x1c0] sm:$0xff]
        %v432 = vld [vmem:[#allocation4 + $0x1c8] sm:$0xff]
        %v433 = vld [vmem:[#allocation4 + $0x1d0] sm:$0xff]
        %v434 = vld [vmem:[#allocation4 + $0x1d8] sm:$0xff]
        %v435 = vld [vmem:[#allocation4 + $0x1e0] sm:$0xff]
        %v436 = vld [vmem:[#allocation4 + $0x1e8] sm:$0xff]
        %v437 = vld [vmem:[#allocation4 + $0x1f0] sm:$0xff]
        %v438 = vld [vmem:[#allocation4 + $0x1f8] sm:$0xff]
        %v439 = vld [vmem:[#allocation4 + $0x200] sm:$0xff]
        %v440 = vld [vmem:[#allocation4 + $0x208] sm:$0xff]
        %v441 = vld [vmem:[#allocation4 + $0x210] sm:$0xff]
        %v442 = vld [vmem:[#allocation4 + $0x218] sm:$0xff]
        %v443 = vld [vmem:[#allocation4 + $0x220] sm:$0xff]
        %v444 = vld [vmem:[#allocation4 + $0x228] sm:$0xff]
        %v445 = vld [vmem:[#allocation4 + $0x230] sm:$0xff]
        %v446 = vld [vmem:[#allocation4 + $0x238] sm:$0xff]
        %v447 = vld [vmem:[#allocation4 + $0x240] sm:$0xff]
        %v448 = vld [vmem:[#allocation4 + $0x248] sm:$0xff]
        %v449 = vld [vmem:[#allocation4 + $0x250] sm:$0xff]
        %v450 = vld [vmem:[#allocation4 + $0x258] sm:$0xff]
        %v451 = vld [vmem:[#allocation4 + $0x260] sm:$0xff]
        %v452 = vld [vmem:[#allocation4 + $0x268] sm:$0xff]
        %v453 = vld [vmem:[#allocation4 + $0x270] sm:$0xff]
        %v454 = vld [vmem:[#allocation4 + $0x278] sm:$0xff]
        %v455 = vld [vmem:[#allocation4 + $0x280] sm:$0xff]
        %v456 = vld [vmem:[#allocation4 + $0x288] sm:$0xff]
        %v457 = vld [vmem:[#allocation4 + $0x290] sm:$0xff]
        %v458 = vld [vmem:[#allocation4 + $0x298] sm:$0xff]
        %v459 = vld [vmem:[#allocation4 + $0x2a0] sm:$0xff]
        %v460 = vld [vmem:[#allocation4 + $0x2a8] sm:$0xff]
        %v461 = vld [vmem:[#allocation4 + $0x2b0] sm:$0xff]
        %v462 = vld [vmem:[#allocation4 + $0x2b8] sm:$0xff]
        %v463 = vld [vmem:[#allocation4 + $0x2c0] sm:$0xff]
        %v464 = vld [vmem:[#allocation4 + $0x2c8] sm:$0xff]
        %v465 = vld [vmem:[#allocation4 + $0x2d0] sm:$0xff]
        %v466 = vld [vmem:[#allocation4 + $0x2d8] sm:$0xff]
        %v467 = vld [vmem:[#allocation4 + $0x2e0] sm:$0xff]
        %v468 = vld [vmem:[#allocation4 + $0x2e8] sm:$0xff]
        %v469 = vld [vmem:[#allocation4 + $0x2f0] sm:$0xff]
        %v470 = vld [vmem:[#allocation4 + $0x2f8] sm:$0xff]
        %v471 = vld [vmem:[#allocation4 + $0x300] sm:$0xff]
        %v472 = vld [vmem:[#allocation4 + $0x308] sm:$0xff]
        %v473 = vld [vmem:[#allocation4 + $0x310] sm:$0xff]
        %v474 = vld [vmem:[#allocation4 + $0x318] sm:$0xff]
        %v475 = vld [vmem:[#allocation4 + $0x320] sm:$0xff]
        %v476 = vld [vmem:[#allocation4 + $0x328] sm:$0xff]
        %v477 = vld [vmem:[#allocation4 + $0x330] sm:$0xff]
        %v478 = vld [vmem:[#allocation4 + $0x338] sm:$0xff]
        %v479 = vld [vmem:[#allocation4 + $0x340] sm:$0xff]
        %v480 = vld [vmem:[#allocation4 + $0x348] sm:$0xff]
        %v481 = vld [vmem:[#allocation4 + $0x350] sm:$0xff]
        %v482 = vld [vmem:[#allocation4 + $0x358] sm:$0xff]
        %v483 = vld [vmem:[#allocation4 + $0x360] sm:$0xff]
        %v484 = vld [vmem:[#allocation4 + $0x368] sm:$0xff]
        %v485 = vld [vmem:[#allocation4 + $0x370] sm:$0xff]
        %v486 = vld [vmem:[#allocation4 + $0x378] sm:$0xff]
        %v487 = vld [vmem:[#allocation4 + $0x380] sm:$0xff]
        %v488 = vld [vmem:[#allocation4 + $0x388] sm:$0xff]
        %v489 = vld [vmem:[#allocation4 + $0x390] sm:$0xff]
        %v490 = vld [vmem:[#allocation4 + $0x398] sm:$0xff]
        %v491 = vld [vmem:[#allocation4 + $0x3a0] sm:$0xff]
        %v492 = vld [vmem:[#allocation4 + $0x3a8] sm:$0xff]
        %v493 = vld [vmem:[#allocation4 + $0x3b0] sm:$0xff]
        %v494 = vld [vmem:[#allocation4 + $0x3b8] sm:$0xff]
        %v495 = vld [vmem:[#allocation4 + $0x3c0] sm:$0xff]
        %v496 = vld [vmem:[#allocation4 + $0x3c8] sm:$0xff]
        %v497 = vld [vmem:[#allocation4 + $0x3d0] sm:$0xff]
        %v498 = vld [vmem:[#allocation4 + $0x3d8] sm:$0xff]
        %v499 = vld [vmem:[#allocation4 + $0x3e0] sm:$0xff]
        %v500 = vld [vmem:[#allocation4 + $0x3e8] sm:$0xff]
        %v501 = vld [vmem:[#allocation4 + $0x3f0] sm:$0xff]
        %v502 = vld [vmem:[#allocation4 + $0x3f8] sm:$0xff]
        %v503 = vld [vmem:[%s4] sm:$0xf]
        %v504 = vld [vmem:[%s1] sm:$0xf]
        %v506 = vperm.slane %v504, 0
        %v507 = vperm.slane %v504, 1
        %v508 = vperm.slane %v504, 2
        %v509 = vperm.slane %v504, 3
        %v514 = vld [vmem:[%s2] sm:$0xf]
        %v516 = vperm.slane %v514, 0
        %v517 = vperm.slane %v514, 1
        %v518 = vperm.slane %v514, 2
        %v519 = vperm.slane %v514, 3
        %v524 = vld [vmem:[%s338] sm:$0xff]
        %526 = vset.pattern.permute.xlu0 0
        %527 = vperm.xlu0 %526, %v524
        %v528 = vpop.permute.xlu0 %527
        %v530 = vmul.f32 %v528, %v506
        %v531 = vmul.f32 %v528, %v508
        %v532 = vmul.f32 %v528, %v509
        %v533 = vadd.f32 %v530, %v516
        %v534 = vadd.f32 %v531, %v518
        %v535 = vadd.f32 %v532, %v519
        %v536 = vmul.f32 %v533, 0.5
        %v537 = vtanh.pop %v536
        %v538 = vmul.f32 %v537, 0.5
        %v539 = vadd.f32 %v538, 0.5
        %v540 = vtanh.pop %v534
        %v541 = vmul.f32 %v535, 0.5
        %v542 = vtanh.pop %v541
        %v543 = vmul.f32 %v542, 0.5
        %v544 = vadd.f32 %v543, 0.5
        %v545 = vmul.f32 %v539, %v540
        %v546 = vtanh.pop %v545
        %v547 = vmul.f32 %v544, %v546
        %v548 = vpack.c.bf16 %v547, %v547
        %v549 = vld [vmem:[#allocation4] sm:$0xff]
        %v550 = vld [vmem:[#allocation4 + $0x8] sm:$0xff]
        %v551 = vld [vmem:[#allocation4 + $0x10] sm:$0xff]
        %v552 = vld [vmem:[#allocation4 + $0x18] sm:$0xff]
        %v553 = vld [vmem:[#allocation4 + $0x20] sm:$0xff]
        %v554 = vld [vmem:[#allocation4 + $0x28] sm:$0xff]
        %v555 = vld [vmem:[#allocation4 + $0x30] sm:$0xff]
        %v556 = vld [vmem:[#allocation4 + $0x38] sm:$0xff]
        %v557 = vld [vmem:[#allocation4 + $0x40] sm:$0xff]
        %v558 = vld [vmem:[#allocation4 + $0x48] sm:$0xff]
        %v559 = vld [vmem:[#allocation4 + $0x50] sm:$0xff]
        %v560 = vld [vmem:[#allocation4 + $0x58] sm:$0xff]
        %v561 = vld [vmem:[#allocation4 + $0x60] sm:$0xff]
        %v562 = vld [vmem:[#allocation4 + $0x68] sm:$0xff]
        %v563 = vld [vmem:[#allocation4 + $0x70] sm:$0xff]
        %v564 = vld [vmem:[#allocation4 + $0x78] sm:$0xff]
        %v565 = vld [vmem:[#allocation4 + $0x80] sm:$0xff]
        %v566 = vld [vmem:[#allocation4 + $0x88] sm:$0xff]
        %v567 = vld [vmem:[#allocation4 + $0x90] sm:$0xff]
        %v568 = vld [vmem:[#allocation4 + $0x98] sm:$0xff]
        %v569 = vld [vmem:[#allocation4 + $0xa0] sm:$0xff]
        %v570 = vld [vmem:[#allocation4 + $0xa8] sm:$0xff]
        %v571 = vld [vmem:[#allocation4 + $0xb0] sm:$0xff]
        %v572 = vld [vmem:[#allocation4 + $0xb8] sm:$0xff]
        %v573 = vld [vmem:[#allocation4 + $0xc0] sm:$0xff]
        %v574 = vld [vmem:[#allocation4 + $0xc8] sm:$0xff]
        %v575 = vld [vmem:[#allocation4 + $0xd0] sm:$0xff]
        %v576 = vld [vmem:[#allocation4 + $0xd8] sm:$0xff]
        %v577 = vld [vmem:[#allocation4 + $0xe0] sm:$0xff]
        %v578 = vld [vmem:[#allocation4 + $0xe8] sm:$0xff]
        %v579 = vld [vmem:[#allocation4 + $0xf0] sm:$0xff]
        %v580 = vld [vmem:[#allocation4 + $0xf8] sm:$0xff]
        %v581 = vld [vmem:[#allocation4 + $0x100] sm:$0xff]
        %v582 = vld [vmem:[#allocation4 + $0x108] sm:$0xff]
        %v583 = vld [vmem:[#allocation4 + $0x110] sm:$0xff]
        %v584 = vld [vmem:[#allocation4 + $0x118] sm:$0xff]
        %v585 = vld [vmem:[#allocation4 + $0x120] sm:$0xff]
        %v586 = vld [vmem:[#allocation4 + $0x128] sm:$0xff]
        %v587 = vld [vmem:[#allocation4 + $0x130] sm:$0xff]
        %v588 = vld [vmem:[#allocation4 + $0x138] sm:$0xff]
        %v589 = vld [vmem:[#allocation4 + $0x140] sm:$0xff]
        %v590 = vld [vmem:[#allocation4 + $0x148] sm:$0xff]
        %v591 = vld [vmem:[#allocation4 + $0x150] sm:$0xff]
        %v592 = vld [vmem:[#allocation4 + $0x158] sm:$0xff]
        %v593 = vld [vmem:[#allocation4 + $0x160] sm:$0xff]
        %v594 = vld [vmem:[#allocation4 + $0x168] sm:$0xff]
        %v595 = vld [vmem:[#allocation4 + $0x170] sm:$0xff]
        %v596 = vld [vmem:[#allocation4 + $0x178] sm:$0xff]
        %v597 = vld [vmem:[#allocation4 + $0x180] sm:$0xff]
        %v598 = vld [vmem:[#allocation4 + $0x188] sm:$0xff]
        %v599 = vld [vmem:[#allocation4 + $0x190] sm:$0xff]
        %v600 = vld [vmem:[#allocation4 + $0x198] sm:$0xff]
        %v601 = vld [vmem:[#allocation4 + $0x1a0] sm:$0xff]
        %v602 = vld [vmem:[#allocation4 + $0x1a8] sm:$0xff]
        %v603 = vld [vmem:[#allocation4 + $0x1b0] sm:$0xff]
        %v604 = vld [vmem:[#allocation4 + $0x1b8] sm:$0xff]
        %v605 = vld [vmem:[#allocation4 + $0x1c0] sm:$0xff]
        %v606 = vld [vmem:[#allocation4 + $0x1c8] sm:$0xff]
        %v607 = vld [vmem:[#allocation4 + $0x1d0] sm:$0xff]
        %v608 = vld [vmem:[#allocation4 + $0x1d8] sm:$0xff]
        %v609 = vld [vmem:[#allocation4 + $0x1e0] sm:$0xff]
        %v610 = vld [vmem:[#allocation4 + $0x1e8] sm:$0xff]
        %v611 = vld [vmem:[#allocation4 + $0x1f0] sm:$0xff]
        %v612 = vld [vmem:[#allocation4 + $0x1f8] sm:$0xff]
        %v677 = vunpack.c.l.b16 %v549
        %v678 = vunpack.c.l.b16 %v550
        %v679 = vunpack.c.h.b16 %v550
        %v680 = vunpack.c.l.b16 %v551
        %v681 = vunpack.c.h.b16 %v551
        %v682 = vunpack.c.l.b16 %v552
        %v683 = vunpack.c.h.b16 %v552
        %v684 = vunpack.c.l.b16 %v553
        %v685 = vunpack.c.l.b16 %v554
        %v686 = vunpack.c.h.b16 %v554
        %v687 = vunpack.c.l.b16 %v555
        %v688 = vunpack.c.h.b16 %v555
        %v689 = vunpack.c.l.b16 %v556
        %v690 = vunpack.c.h.b16 %v556
        %v691 = vunpack.c.l.b16 %v557
        %v692 = vunpack.c.l.b16 %v558
        %v693 = vunpack.c.h.b16 %v558
        %v694 = vunpack.c.l.b16 %v559
        %v695 = vunpack.c.h.b16 %v559
        %v696 = vunpack.c.l.b16 %v560
        %v697 = vunpack.c.h.b16 %v560
        %v698 = vunpack.c.l.b16 %v561
        %v699 = vunpack.c.l.b16 %v562
        %v700 = vunpack.c.h.b16 %v562
        %v701 = vunpack.c.l.b16 %v563
        %v702 = vunpack.c.h.b16 %v563
        %v703 = vunpack.c.l.b16 %v564
        %v704 = vunpack.c.h.b16 %v564
        %v705 = vunpack.c.l.b16 %v565
        %v706 = vunpack.c.l.b16 %v566
        %v707 = vunpack.c.h.b16 %v566
        %v708 = vunpack.c.l.b16 %v567
        %v709 = vunpack.c.h.b16 %v567
        %v710 = vunpack.c.l.b16 %v568
        %v711 = vunpack.c.h.b16 %v568
        %v712 = vunpack.c.l.b16 %v569
        %v713 = vunpack.c.l.b16 %v570
        %v714 = vunpack.c.h.b16 %v570
        %v715 = vunpack.c.l.b16 %v571
        %v716 = vunpack.c.h.b16 %v571
        %v717 = vunpack.c.l.b16 %v572
        %v718 = vunpack.c.h.b16 %v572
        %v719 = vunpack.c.l.b16 %v573
        %v720 = vunpack.c.l.b16 %v574
        %v721 = vunpack.c.h.b16 %v574
        %v722 = vunpack.c.l.b16 %v575
        %v723 = vunpack.c.h.b16 %v575
        %v724 = vunpack.c.l.b16 %v576
        %v725 = vunpack.c.h.b16 %v576
        %v726 = vunpack.c.l.b16 %v577
        %v727 = vunpack.c.l.b16 %v578
        %v728 = vunpack.c.h.b16 %v578
        %v729 = vunpack.c.l.b16 %v579
        %v730 = vunpack.c.h.b16 %v579
        %v731 = vunpack.c.l.b16 %v580
        %v732 = vunpack.c.h.b16 %v580
        %v733 = vunpack.c.l.b16 %v581
        %v734 = vunpack.c.l.b16 %v582
        %v735 = vunpack.c.h.b16 %v582
        %v736 = vunpack.c.l.b16 %v583
        %v737 = vunpack.c.h.b16 %v583
        %v738 = vunpack.c.l.b16 %v584
        %v739 = vunpack.c.h.b16 %v584
        %v740 = vunpack.c.l.b16 %v585
        %v741 = vunpack.c.l.b16 %v586
        %v742 = vunpack.c.h.b16 %v586
        %v743 = vunpack.c.l.b16 %v587
        %v744 = vunpack.c.h.b16 %v587
        %v745 = vunpack.c.l.b16 %v588
        %v746 = vunpack.c.h.b16 %v588
        %v747 = vunpack.c.l.b16 %v589
        %v748 = vunpack.c.l.b16 %v590
        %v749 = vunpack.c.h.b16 %v590
        %v750 = vunpack.c.l.b16 %v591
        %v751 = vunpack.c.h.b16 %v591
        %v752 = vunpack.c.l.b16 %v592
        %v753 = vunpack.c.h.b16 %v592
        %v754 = vunpack.c.l.b16 %v593
        %v755 = vunpack.c.l.b16 %v594
        %v756 = vunpack.c.h.b16 %v594
        %v757 = vunpack.c.l.b16 %v595
        %v758 = vunpack.c.h.b16 %v595
        %v759 = vunpack.c.l.b16 %v596
        %v760 = vunpack.c.h.b16 %v596
        %v761 = vunpack.c.l.b16 %v597
        %v762 = vunpack.c.l.b16 %v598
        %v763 = vunpack.c.h.b16 %v598
        %v764 = vunpack.c.l.b16 %v599
        %v765 = vunpack.c.h.b16 %v599
        %v766 = vunpack.c.l.b16 %v600
        %v767 = vunpack.c.h.b16 %v600
        %v768 = vunpack.c.l.b16 %v601
        %v769 = vunpack.c.l.b16 %v602
        %v770 = vunpack.c.h.b16 %v602
        %v771 = vunpack.c.l.b16 %v603
        %v772 = vunpack.c.h.b16 %v603
        %v773 = vunpack.c.l.b16 %v604
        %v774 = vunpack.c.h.b16 %v604
        %v775 = vunpack.c.l.b16 %v605
        %v776 = vunpack.c.l.b16 %v606
        %v777 = vunpack.c.h.b16 %v606
        %v778 = vunpack.c.l.b16 %v607
        %v779 = vunpack.c.h.b16 %v607
        %v780 = vunpack.c.l.b16 %v608
        %v781 = vunpack.c.h.b16 %v608
        %v782 = vunpack.c.l.b16 %v609
        %v783 = vunpack.c.l.b16 %v610
        %v784 = vunpack.c.h.b16 %v610
        %v785 = vunpack.c.l.b16 %v611
        %v786 = vunpack.c.h.b16 %v611
        %v787 = vunpack.c.l.b16 %v612
        %v788 = vunpack.c.h.b16 %v612
        %v789 = vpack.c.b16 %v684, %v677
        %v790 = vpack.c.b16 %v685, %v678
        %v791 = vpack.c.b16 %v686, %v679
        %v792 = vpack.c.b16 %v687, %v680
        %v793 = vpack.c.b16 %v688, %v681
        %v794 = vpack.c.b16 %v689, %v682
        %v795 = vpack.c.b16 %v690, %v683
        %v796 = vpack.c.b16 %v698, %v691
        %v797 = vpack.c.b16 %v699, %v692
        %v798 = vpack.c.b16 %v700, %v693
        %v799 = vpack.c.b16 %v701, %v694
        %v800 = vpack.c.b16 %v702, %v695
        %v801 = vpack.c.b16 %v703, %v696
        %v802 = vpack.c.b16 %v704, %v697
        %v803 = vpack.c.b16 %v712, %v705
        %v804 = vpack.c.b16 %v713, %v706
        %v805 = vpack.c.b16 %v714, %v707
        %v806 = vpack.c.b16 %v715, %v708
        %v807 = vpack.c.b16 %v716, %v709
        %v808 = vpack.c.b16 %v717, %v710
        %v809 = vpack.c.b16 %v718, %v711
        %v810 = vpack.c.b16 %v726, %v719
        %v811 = vpack.c.b16 %v727, %v720
        %v812 = vpack.c.b16 %v728, %v721
        %v813 = vpack.c.b16 %v729, %v722
        %v814 = vpack.c.b16 %v730, %v723
        %v815 = vpack.c.b16 %v731, %v724
        %v816 = vpack.c.b16 %v732, %v725
        %v817 = vpack.c.b16 %v740, %v733
        %v818 = vpack.c.b16 %v741, %v734
        %v819 = vpack.c.b16 %v742, %v735
        %v820 = vpack.c.b16 %v743, %v736
        %v821 = vpack.c.b16 %v744, %v737
        %v822 = vpack.c.b16 %v745, %v738
        %v823 = vpack.c.b16 %v746, %v739
        %v824 = vpack.c.b16 %v754, %v747
        %v825 = vpack.c.b16 %v755, %v748
        %v826 = vpack.c.b16 %v756, %v749
        %v827 = vpack.c.b16 %v757, %v750
        %v828 = vpack.c.b16 %v758, %v751
        %v829 = vpack.c.b16 %v759, %v752
        %v830 = vpack.c.b16 %v760, %v753
        %v831 = vpack.c.b16 %v768, %v761
        %v832 = vpack.c.b16 %v769, %v762
        %v833 = vpack.c.b16 %v770, %v763
        %v834 = vpack.c.b16 %v771, %v764
        %v835 = vpack.c.b16 %v772, %v765
        %v836 = vpack.c.b16 %v773, %v766
        %v837 = vpack.c.b16 %v774, %v767
        %v838 = vpack.c.b16 %v782, %v775
        %v839 = vpack.c.b16 %v783, %v776
        %v840 = vpack.c.b16 %v784, %v777
        %v841 = vpack.c.b16 %v785, %v778
        %v842 = vpack.c.b16 %v786, %v779
        %v843 = vpack.c.b16 %v787, %v780
        %v844 = vpack.c.b16 %v788, %v781
        %901 = vmatpush.bf16.msra.mxu0 %v838
        %902 = vmatpush.bf16.msra.mxu0 %v831
        %903 = vmatpush.bf16.msra.mxu0 %v824
        %904 = vmatpush.bf16.msra.mxu0 %v817
        %905 = vmatpush.bf16.msra.mxu0 %v810
        %906 = vmatpush.bf16.msra.mxu0 %v803
        %907 = vmatpush.bf16.msra.mxu0 %v796
        %908 = vmatpush.bf16.msra.mxu0 %v789
        %909 = vmatmul.bf16.gmra.mxu0 %v548
        %v910 = vpop.f32.mrf.mxu0
        %v911 = vadd.f32 0.0, %v910
        %v912 = vpop.f32.mrf.mxu0
        %913 = vdwg.mxu0
        %914 = vmatpush.bf16.msra.mxu0 %v839
        %915 = vmatpush.bf16.msra.mxu0 %v832
        %916 = vmatpush.bf16.msra.mxu0 %v825
        %917 = vmatpush.bf16.msra.mxu0 %v818
        %918 = vmatpush.bf16.msra.mxu0 %v811
        %919 = vmatpush.bf16.msra.mxu0 %v804
        %920 = vmatpush.bf16.msra.mxu0 %v797
        %921 = vmatpush.bf16.msra.mxu0 %v790
        %922 = vmatmul.bf16.gmra.mxu0 %v548
        %v923 = vpop.f32.mrf.mxu0
        %v924 = vadd.f32 0.0, %v923
        %v925 = vpop.f32.mrf.mxu0
        %926 = vdwg.mxu0
        %927 = vmatpush.bf16.msra.mxu0 %v840
        %928 = vmatpush.bf16.msra.mxu0 %v833
        %929 = vmatpush.bf16.msra.mxu0 %v826
        %930 = vmatpush.bf16.msra.mxu0 %v819
        %931 = vmatpush.bf16.msra.mxu0 %v812
        %932 = vmatpush.bf16.msra.mxu0 %v805
        %933 = vmatpush.bf16.msra.mxu0 %v798
        %934 = vmatpush.bf16.msra.mxu0 %v791
        %935 = vmatmul.bf16.gmra.mxu0 %v548
        %v936 = vpop.f32.mrf.mxu0
        %v937 = vadd.f32 0.0, %v936
        %v938 = vpop.f32.mrf.mxu0
        %939 = vdwg.mxu0
        %940 = vmatpush.bf16.msra.mxu0 %v841
        %941 = vmatpush.bf16.msra.mxu0 %v834
        %942 = vmatpush.bf16.msra.mxu0 %v827
        %943 = vmatpush.bf16.msra.mxu0 %v820
        %944 = vmatpush.bf16.msra.mxu0 %v813
        %945 = vmatpush.bf16.msra.mxu0 %v806
        %946 = vmatpush.bf16.msra.mxu0 %v799
        %947 = vmatpush.bf16.msra.mxu0 %v792
        %948 = vmatmul.bf16.gmra.mxu0 %v548
        %v949 = vpop.f32.mrf.mxu0
        %v950 = vadd.f32 0.0, %v949
        %v951 = vpop.f32.mrf.mxu0
        %952 = vdwg.mxu0
        %953 = vmatpush.bf16.msra.mxu0 %v842
        %954 = vmatpush.bf16.msra.mxu0 %v835
        %955 = vmatpush.bf16.msra.mxu0 %v828
        %956 = vmatpush.bf16.msra.mxu0 %v821
        %957 = vmatpush.bf16.msra.mxu0 %v814
        %958 = vmatpush.bf16.msra.mxu0 %v807
        %959 = vmatpush.bf16.msra.mxu0 %v800
        %960 = vmatpush.bf16.msra.mxu0 %v793
        %961 = vmatmul.bf16.gmra.mxu0 %v548
        %v962 = vpop.f32.mrf.mxu0
        %v963 = vadd.f32 0.0, %v962
        %v964 = vpop.f32.mrf.mxu0
        %965 = vdwg.mxu0
        %966 = vmatpush.bf16.msra.mxu0 %v843
        %967 = vmatpush.bf16.msra.mxu0 %v836
        %968 = vmatpush.bf16.msra.mxu0 %v829
        %969 = vmatpush.bf16.msra.mxu0 %v822
        %970 = vmatpush.bf16.msra.mxu0 %v815
        %971 = vmatpush.bf16.msra.mxu0 %v808
        %972 = vmatpush.bf16.msra.mxu0 %v801
        %973 = vmatpush.bf16.msra.mxu0 %v794
        %974 = vmatmul.bf16.gmra.mxu0 %v548
        %v975 = vpop.f32.mrf.mxu0
        %v976 = vadd.f32 0.0, %v975
        %v977 = vpop.f32.mrf.mxu0
        %978 = vdwg.mxu0
        %979 = vmatpush.bf16.msra.mxu0 %v844
        %980 = vmatpush.bf16.msra.mxu0 %v837
        %981 = vmatpush.bf16.msra.mxu0 %v830
        %982 = vmatpush.bf16.msra.mxu0 %v823
        %983 = vmatpush.bf16.msra.mxu0 %v816
        %984 = vmatpush.bf16.msra.mxu0 %v809
        %985 = vmatpush.bf16.msra.mxu0 %v802
        %986 = vmatpush.bf16.msra.mxu0 %v795
        %987 = vmatmul.bf16.gmra.mxu0 %v548
        %v988 = vpop.f32.mrf.mxu0
        %v989 = vadd.f32 0.0, %v988
        %v990 = vpop.f32.mrf.mxu0
        %991 = vdwg.mxu0
        %v993 = vperm.slane %v503, 0
        %v994 = vperm.slane %v503, 1
        %v995 = vperm.slane %v503, 2
        %v996 = vperm.slane %v503, 3
        %v1001 = vadd.f32 %v911, %v993
        %v1002 = vadd.f32 %v924, %v995
        %v1003 = vadd.f32 %v937, %v996
        %v1004 = vmul.f32 %v1001, 0.5
        %v1005 = vtanh.pop %v1004
        %v1006 = vmul.f32 %v1005, 0.5
        %v1007 = vadd.f32 %v1006, 0.5
        %v1008 = vtanh.pop %v1002
        %v1009 = vmul.f32 %v1003, 0.5
        %v1010 = vtanh.pop %v1009
        %v1011 = vmul.f32 %v1010, 0.5
        %v1012 = vadd.f32 %v1011, 0.5
        %v1013 = vmul.f32 %v1007, %v1008
        %v1014 = vtanh.pop %v1013
        %v1015 = vmul.f32 %v1012, %v1014
        %s1016 = scalar_lea.vmem %s338, 8 [#allocation3]
        %v1017 = vld [vmem:[%s1016] sm:$0xff]
        %1019 = vset.pattern.permute.xlu0 0
        %1020 = vperm.xlu0 %1019, %v1017
        %v1021 = vpop.permute.xlu0 %1020
        %v1023 = vmul.f32 %v1021, %v506
        %v1024 = vmul.f32 %v1021, %v507
        %v1025 = vmul.f32 %v1021, %v508
        %v1026 = vmul.f32 %v1021, %v509
        %v1027 = vadd.f32 %v1023, %v516
        %v1028 = vadd.f32 %v1024, %v517
        %v1029 = vadd.f32 %v1025, %v518
        %v1030 = vadd.f32 %v1026, %v519
        %v1031 = vadd.f32 %v1027, %v950
        %v1032 = vadd.f32 %v1028, %v963
        %v1033 = vadd.f32 %v1029, %v976
        %v1034 = vadd.f32 %v1030, %v989
        %v1035 = vmul.f32 %v1031, 0.5
        %v1036 = vtanh.pop %v1035
        %v1037 = vmul.f32 %v1036, 0.5
        %v1038 = vadd.f32 %v1037, 0.5
        %v1039 = vmul.f32 %v1032, 0.5
        %v1040 = vtanh.pop %v1039
        %v1041 = vmul.f32 %v1040, 0.5
        %v1042 = vadd.f32 %v1041, 0.5
        %v1043 = vtanh.pop %v1033
        %v1044 = vmul.f32 %v1034, 0.5
        %v1045 = vtanh.pop %v1044
        %v1046 = vmul.f32 %v1045, 0.5
        %v1047 = vadd.f32 %v1046, 0.5
        %v1048 = vmul.f32 %v1042, %v545
        %v1049 = vmul.f32 %v1038, %v1043
        %v1050 = vadd.f32 %v1048, %v1049
        %v1051 = vtanh.pop %v1050
        %v1052 = vmul.f32 %v1047, %v1051
        %v1053 = vpack.c.bf16 %v1052, %v1052
        %v1054 = vpack.c.bf16 %v1015, %v1015
        %v1183 = vunpack.c.l.b16 %v375
        %v1184 = vunpack.c.h.b16 %v375
        %v1185 = vunpack.c.l.b16 %v376
        %v1186 = vunpack.c.h.b16 %v376
        %v1187 = vunpack.c.l.b16 %v377
        %v1188 = vunpack.c.h.b16 %v377
        %v1189 = vunpack.c.l.b16 %v378
        %v1190 = vunpack.c.h.b16 %v378
        %v1191 = vunpack.c.l.b16 %v379
        %v1192 = vunpack.c.h.b16 %v379
        %v1193 = vunpack.c.l.b16 %v380
        %v1194 = vunpack.c.h.b16 %v380
        %v1195 = vunpack.c.l.b16 %v381
        %v1196 = vunpack.c.h.b16 %v381
        %v1197 = vunpack.c.l.b16 %v382
        %v1198 = vunpack.c.h.b16 %v382
        %v1199 = vunpack.c.l.b16 %v383
        %v1200 = vunpack.c.h.b16 %v383
        %v1201 = vunpack.c.l.b16 %v384
        %v1202 = vunpack.c.h.b16 %v384
        %v1203 = vunpack.c.l.b16 %v385
        %v1204 = vunpack.c.h.b16 %v385
        %v1205 = vunpack.c.l.b16 %v386
        %v1206 = vunpack.c.h.b16 %v386
        %v1207 = vunpack.c.l.b16 %v387
        %v1208 = vunpack.c.h.b16 %v387
        %v1209 = vunpack.c.l.b16 %v388
        %v1210 = vunpack.c.h.b16 %v388
        %v1211 = vunpack.c.l.b16 %v389
        %v1212 = vunpack.c.h.b16 %v389
        %v1213 = vunpack.c.l.b16 %v390
        %v1214 = vunpack.c.h.b16 %v390
        %v1215 = vunpack.c.l.b16 %v391
        %v1216 = vunpack.c.h.b16 %v391
        %v1217 = vunpack.c.l.b16 %v392
        %v1218 = vunpack.c.h.b16 %v392
        %v1219 = vunpack.c.l.b16 %v393
        %v1220 = vunpack.c.h.b16 %v393
        %v1221 = vunpack.c.l.b16 %v394
        %v1222 = vunpack.c.h.b16 %v394
        %v1223 = vunpack.c.l.b16 %v395
        %v1224 = vunpack.c.h.b16 %v395
        %v1225 = vunpack.c.l.b16 %v396
        %v1226 = vunpack.c.h.b16 %v396
        %v1227 = vunpack.c.l.b16 %v397
        %v1228 = vunpack.c.h.b16 %v397
        %v1229 = vunpack.c.l.b16 %v398
        %v1230 = vunpack.c.h.b16 %v398
        %v1231 = vunpack.c.l.b16 %v399
        %v1232 = vunpack.c.h.b16 %v399
        %v1233 = vunpack.c.l.b16 %v400
        %v1234 = vunpack.c.h.b16 %v400
        %v1235 = vunpack.c.l.b16 %v401
        %v1236 = vunpack.c.h.b16 %v401
        %v1237 = vunpack.c.l.b16 %v402
        %v1238 = vunpack.c.h.b16 %v402
        %v1239 = vunpack.c.l.b16 %v403
        %v1240 = vunpack.c.h.b16 %v403
        %v1241 = vunpack.c.l.b16 %v404
        %v1242 = vunpack.c.h.b16 %v404
        %v1243 = vunpack.c.l.b16 %v405
        %v1244 = vunpack.c.h.b16 %v405
        %v1245 = vunpack.c.l.b16 %v406
        %v1246 = vunpack.c.h.b16 %v406
        %v1247 = vunpack.c.l.b16 %v407
        %v1248 = vunpack.c.h.b16 %v407
        %v1249 = vunpack.c.l.b16 %v408
        %v1250 = vunpack.c.h.b16 %v408
        %v1251 = vunpack.c.l.b16 %v409
        %v1252 = vunpack.c.h.b16 %v409
        %v1253 = vunpack.c.l.b16 %v410
        %v1254 = vunpack.c.h.b16 %v410
        %v1255 = vunpack.c.l.b16 %v411
        %v1256 = vunpack.c.h.b16 %v411
        %v1257 = vunpack.c.l.b16 %v412
        %v1258 = vunpack.c.h.b16 %v412
        %v1259 = vunpack.c.l.b16 %v413
        %v1260 = vunpack.c.h.b16 %v413
        %v1261 = vunpack.c.l.b16 %v414
        %v1262 = vunpack.c.h.b16 %v414
        %v1263 = vunpack.c.l.b16 %v415
        %v1264 = vunpack.c.h.b16 %v415
        %v1265 = vunpack.c.l.b16 %v416
        %v1266 = vunpack.c.h.b16 %v416
        %v1267 = vunpack.c.l.b16 %v417
        %v1268 = vunpack.c.h.b16 %v417
        %v1269 = vunpack.c.l.b16 %v418
        %v1270 = vunpack.c.h.b16 %v418
        %v1271 = vunpack.c.l.b16 %v419
        %v1272 = vunpack.c.h.b16 %v419
        %v1273 = vunpack.c.l.b16 %v420
        %v1274 = vunpack.c.h.b16 %v420
        %v1275 = vunpack.c.l.b16 %v421
        %v1276 = vunpack.c.h.b16 %v421
        %v1277 = vunpack.c.l.b16 %v422
        %v1278 = vunpack.c.h.b16 %v422
        %v1279 = vunpack.c.l.b16 %v423
        %v1280 = vunpack.c.h.b16 %v423
        %v1281 = vunpack.c.l.b16 %v424
        %v1282 = vunpack.c.h.b16 %v424
        %v1283 = vunpack.c.l.b16 %v425
        %v1284 = vunpack.c.h.b16 %v425
        %v1285 = vunpack.c.l.b16 %v426
        %v1286 = vunpack.c.h.b16 %v426
        %v1287 = vunpack.c.l.b16 %v427
        %v1288 = vunpack.c.h.b16 %v427
        %v1289 = vunpack.c.l.b16 %v428
        %v1290 = vunpack.c.h.b16 %v428
        %v1291 = vunpack.c.l.b16 %v429
        %v1292 = vunpack.c.h.b16 %v429
        %v1293 = vunpack.c.l.b16 %v430
        %v1294 = vunpack.c.h.b16 %v430
        %v1295 = vunpack.c.l.b16 %v431
        %v1296 = vunpack.c.h.b16 %v431
        %v1297 = vunpack.c.l.b16 %v432
        %v1298 = vunpack.c.h.b16 %v432
        %v1299 = vunpack.c.l.b16 %v433
        %v1300 = vunpack.c.h.b16 %v433
        %v1301 = vunpack.c.l.b16 %v434
        %v1302 = vunpack.c.h.b16 %v434
        %v1303 = vunpack.c.l.b16 %v435
        %v1304 = vunpack.c.h.b16 %v435
        %v1305 = vunpack.c.l.b16 %v436
        %v1306 = vunpack.c.h.b16 %v436
        %v1307 = vunpack.c.l.b16 %v437
        %v1308 = vunpack.c.h.b16 %v437
        %v1309 = vunpack.c.l.b16 %v438
        %v1310 = vunpack.c.h.b16 %v438
        %v1311 = vunpack.c.l.b16 %v439
        %v1312 = vunpack.c.h.b16 %v439
        %v1313 = vunpack.c.l.b16 %v440
        %v1314 = vunpack.c.h.b16 %v440
        %v1315 = vunpack.c.l.b16 %v441
        %v1316 = vunpack.c.h.b16 %v441
        %v1317 = vunpack.c.l.b16 %v442
        %v1318 = vunpack.c.h.b16 %v442
        %v1319 = vunpack.c.l.b16 %v443
        %v1320 = vunpack.c.h.b16 %v443
        %v1321 = vunpack.c.l.b16 %v444
        %v1322 = vunpack.c.h.b16 %v444
        %v1323 = vunpack.c.l.b16 %v445
        %v1324 = vunpack.c.h.b16 %v445
        %v1325 = vunpack.c.l.b16 %v446
        %v1326 = vunpack.c.h.b16 %v446
        %v1327 = vunpack.c.l.b16 %v447
        %v1328 = vunpack.c.h.b16 %v447
        %v1329 = vunpack.c.l.b16 %v448
        %v1330 = vunpack.c.h.b16 %v448
        %v1331 = vunpack.c.l.b16 %v449
        %v1332 = vunpack.c.h.b16 %v449
        %v1333 = vunpack.c.l.b16 %v450
        %v1334 = vunpack.c.h.b16 %v450
        %v1335 = vunpack.c.l.b16 %v451
        %v1336 = vunpack.c.h.b16 %v451
        %v1337 = vunpack.c.l.b16 %v452
        %v1338 = vunpack.c.h.b16 %v452
        %v1339 = vunpack.c.l.b16 %v453
        %v1340 = vunpack.c.h.b16 %v453
        %v1341 = vunpack.c.l.b16 %v454
        %v1342 = vunpack.c.h.b16 %v454
        %v1343 = vunpack.c.l.b16 %v455
        %v1344 = vunpack.c.h.b16 %v455
        %v1345 = vunpack.c.l.b16 %v456
        %v1346 = vunpack.c.h.b16 %v456
        %v1347 = vunpack.c.l.b16 %v457
        %v1348 = vunpack.c.h.b16 %v457
        %v1349 = vunpack.c.l.b16 %v458
        %v1350 = vunpack.c.h.b16 %v458
        %v1351 = vunpack.c.l.b16 %v459
        %v1352 = vunpack.c.h.b16 %v459
        %v1353 = vunpack.c.l.b16 %v460
        %v1354 = vunpack.c.h.b16 %v460
        %v1355 = vunpack.c.l.b16 %v461
        %v1356 = vunpack.c.h.b16 %v461
        %v1357 = vunpack.c.l.b16 %v462
        %v1358 = vunpack.c.h.b16 %v462
        %v1359 = vunpack.c.l.b16 %v463
        %v1360 = vunpack.c.h.b16 %v463
        %v1361 = vunpack.c.l.b16 %v464
        %v1362 = vunpack.c.h.b16 %v464
        %v1363 = vunpack.c.l.b16 %v465
        %v1364 = vunpack.c.h.b16 %v465
        %v1365 = vunpack.c.l.b16 %v466
        %v1366 = vunpack.c.h.b16 %v466
        %v1367 = vunpack.c.l.b16 %v467
        %v1368 = vunpack.c.h.b16 %v467
        %v1369 = vunpack.c.l.b16 %v468
        %v1370 = vunpack.c.h.b16 %v468
        %v1371 = vunpack.c.l.b16 %v469
        %v1372 = vunpack.c.h.b16 %v469
        %v1373 = vunpack.c.l.b16 %v470
        %v1374 = vunpack.c.h.b16 %v470
        %v1375 = vunpack.c.l.b16 %v471
        %v1376 = vunpack.c.h.b16 %v471
        %v1377 = vunpack.c.l.b16 %v472
        %v1378 = vunpack.c.h.b16 %v472
        %v1379 = vunpack.c.l.b16 %v473
        %v1380 = vunpack.c.h.b16 %v473
        %v1381 = vunpack.c.l.b16 %v474
        %v1382 = vunpack.c.h.b16 %v474
        %v1383 = vunpack.c.l.b16 %v475
        %v1384 = vunpack.c.h.b16 %v475
        %v1385 = vunpack.c.l.b16 %v476
        %v1386 = vunpack.c.h.b16 %v476
        %v1387 = vunpack.c.l.b16 %v477
        %v1388 = vunpack.c.h.b16 %v477
        %v1389 = vunpack.c.l.b16 %v478
        %v1390 = vunpack.c.h.b16 %v478
        %v1391 = vunpack.c.l.b16 %v479
        %v1392 = vunpack.c.h.b16 %v479
        %v1393 = vunpack.c.l.b16 %v480
        %v1394 = vunpack.c.h.b16 %v480
        %v1395 = vunpack.c.l.b16 %v481
        %v1396 = vunpack.c.h.b16 %v481
        %v1397 = vunpack.c.l.b16 %v482
        %v1398 = vunpack.c.h.b16 %v482
        %v1399 = vunpack.c.l.b16 %v483
        %v1400 = vunpack.c.h.b16 %v483
        %v1401 = vunpack.c.l.b16 %v484
        %v1402 = vunpack.c.h.b16 %v484
        %v1403 = vunpack.c.l.b16 %v485
        %v1404 = vunpack.c.h.b16 %v485
        %v1405 = vunpack.c.l.b16 %v486
        %v1406 = vunpack.c.h.b16 %v486
        %v1407 = vunpack.c.l.b16 %v487
        %v1408 = vunpack.c.h.b16 %v487
        %v1409 = vunpack.c.l.b16 %v488
        %v1410 = vunpack.c.h.b16 %v488
        %v1411 = vunpack.c.l.b16 %v489
        %v1412 = vunpack.c.h.b16 %v489
        %v1413 = vunpack.c.l.b16 %v490
        %v1414 = vunpack.c.h.b16 %v490
        %v1415 = vunpack.c.l.b16 %v491
        %v1416 = vunpack.c.h.b16 %v491
        %v1417 = vunpack.c.l.b16 %v492
        %v1418 = vunpack.c.h.b16 %v492
        %v1419 = vunpack.c.l.b16 %v493
        %v1420 = vunpack.c.h.b16 %v493
        %v1421 = vunpack.c.l.b16 %v494
        %v1422 = vunpack.c.h.b16 %v494
        %v1423 = vunpack.c.l.b16 %v495
        %v1424 = vunpack.c.h.b16 %v495
        %v1425 = vunpack.c.l.b16 %v496
        %v1426 = vunpack.c.h.b16 %v496
        %v1427 = vunpack.c.l.b16 %v497
        %v1428 = vunpack.c.h.b16 %v497
        %v1429 = vunpack.c.l.b16 %v498
        %v1430 = vunpack.c.h.b16 %v498
        %v1431 = vunpack.c.l.b16 %v499
        %v1432 = vunpack.c.h.b16 %v499
        %v1433 = vunpack.c.l.b16 %v500
        %v1434 = vunpack.c.h.b16 %v500
        %v1435 = vunpack.c.l.b16 %v501
        %v1436 = vunpack.c.h.b16 %v501
        %v1437 = vunpack.c.l.b16 %v502
        %v1438 = vunpack.c.h.b16 %v502
        %v1439 = vpack.c.b16 %v1191, %v1183
        %v1440 = vpack.c.b16 %v1192, %v1184
        %v1441 = vpack.c.b16 %v1193, %v1185
        %v1442 = vpack.c.b16 %v1194, %v1186
        %v1443 = vpack.c.b16 %v1195, %v1187
        %v1444 = vpack.c.b16 %v1196, %v1188
        %v1445 = vpack.c.b16 %v1197, %v1189
        %v1446 = vpack.c.b16 %v1198, %v1190
        %v1447 = vpack.c.b16 %v1207, %v1199
        %v1448 = vpack.c.b16 %v1208, %v1200
        %v1449 = vpack.c.b16 %v1209, %v1201
        %v1450 = vpack.c.b16 %v1210, %v1202
        %v1451 = vpack.c.b16 %v1211, %v1203
        %v1452 = vpack.c.b16 %v1212, %v1204
        %v1453 = vpack.c.b16 %v1213, %v1205
        %v1454 = vpack.c.b16 %v1214, %v1206
        %v1455 = vpack.c.b16 %v1223, %v1215
        %v1456 = vpack.c.b16 %v1224, %v1216
        %v1457 = vpack.c.b16 %v1225, %v1217
        %v1458 = vpack.c.b16 %v1226, %v1218
        %v1459 = vpack.c.b16 %v1227, %v1219
        %v1460 = vpack.c.b16 %v1228, %v1220
        %v1461 = vpack.c.b16 %v1229, %v1221
        %v1462 = vpack.c.b16 %v1230, %v1222
        %v1463 = vpack.c.b16 %v1239, %v1231
        %v1464 = vpack.c.b16 %v1240, %v1232
        %v1465 = vpack.c.b16 %v1241, %v1233
        %v1466 = vpack.c.b16 %v1242, %v1234
        %v1467 = vpack.c.b16 %v1243, %v1235
        %v1468 = vpack.c.b16 %v1244, %v1236
        %v1469 = vpack.c.b16 %v1245, %v1237
        %v1470 = vpack.c.b16 %v1246, %v1238
        %v1471 = vpack.c.b16 %v1255, %v1247
        %v1472 = vpack.c.b16 %v1256, %v1248
        %v1473 = vpack.c.b16 %v1257, %v1249
        %v1474 = vpack.c.b16 %v1258, %v1250
        %v1475 = vpack.c.b16 %v1259, %v1251
        %v1476 = vpack.c.b16 %v1260, %v1252
        %v1477 = vpack.c.b16 %v1261, %v1253
        %v1478 = vpack.c.b16 %v1262, %v1254
        %v1479 = vpack.c.b16 %v1271, %v1263
        %v1480 = vpack.c.b16 %v1272, %v1264
        %v1481 = vpack.c.b16 %v1273, %v1265
        %v1482 = vpack.c.b16 %v1274, %v1266
        %v1483 = vpack.c.b16 %v1275, %v1267
        %v1484 = vpack.c.b16 %v1276, %v1268
        %v1485 = vpack.c.b16 %v1277, %v1269
        %v1486 = vpack.c.b16 %v1278, %v1270
        %v1487 = vpack.c.b16 %v1287, %v1279
        %v1488 = vpack.c.b16 %v1288, %v1280
        %v1489 = vpack.c.b16 %v1289, %v1281
        %v1490 = vpack.c.b16 %v1290, %v1282
        %v1491 = vpack.c.b16 %v1291, %v1283
        %v1492 = vpack.c.b16 %v1292, %v1284
        %v1493 = vpack.c.b16 %v1293, %v1285
        %v1494 = vpack.c.b16 %v1294, %v1286
        %v1495 = vpack.c.b16 %v1303, %v1295
        %v1496 = vpack.c.b16 %v1304, %v1296
        %v1497 = vpack.c.b16 %v1305, %v1297
        %v1498 = vpack.c.b16 %v1306, %v1298
        %v1499 = vpack.c.b16 %v1307, %v1299
        %v1500 = vpack.c.b16 %v1308, %v1300
        %v1501 = vpack.c.b16 %v1309, %v1301
        %v1502 = vpack.c.b16 %v1310, %v1302
        %v1503 = vpack.c.b16 %v1319, %v1311
        %v1504 = vpack.c.b16 %v1320, %v1312
        %v1505 = vpack.c.b16 %v1321, %v1313
        %v1506 = vpack.c.b16 %v1322, %v1314
        %v1507 = vpack.c.b16 %v1323, %v1315
        %v1508 = vpack.c.b16 %v1324, %v1316
        %v1509 = vpack.c.b16 %v1325, %v1317
        %v1510 = vpack.c.b16 %v1326, %v1318
        %v1511 = vpack.c.b16 %v1335, %v1327
        %v1512 = vpack.c.b16 %v1336, %v1328
        %v1513 = vpack.c.b16 %v1337, %v1329
        %v1514 = vpack.c.b16 %v1338, %v1330
        %v1515 = vpack.c.b16 %v1339, %v1331
        %v1516 = vpack.c.b16 %v1340, %v1332
        %v1517 = vpack.c.b16 %v1341, %v1333
        %v1518 = vpack.c.b16 %v1342, %v1334
        %v1519 = vpack.c.b16 %v1351, %v1343
        %v1520 = vpack.c.b16 %v1352, %v1344
        %v1521 = vpack.c.b16 %v1353, %v1345
        %v1522 = vpack.c.b16 %v1354, %v1346
        %v1523 = vpack.c.b16 %v1355, %v1347
        %v1524 = vpack.c.b16 %v1356, %v1348
        %v1525 = vpack.c.b16 %v1357, %v1349
        %v1526 = vpack.c.b16 %v1358, %v1350
        %v1527 = vpack.c.b16 %v1367, %v1359
        %v1528 = vpack.c.b16 %v1368, %v1360
        %v1529 = vpack.c.b16 %v1369, %v1361
        %v1530 = vpack.c.b16 %v1370, %v1362
        %v1531 = vpack.c.b16 %v1371, %v1363
        %v1532 = vpack.c.b16 %v1372, %v1364
        %v1533 = vpack.c.b16 %v1373, %v1365
        %v1534 = vpack.c.b16 %v1374, %v1366
        %v1535 = vpack.c.b16 %v1383, %v1375
        %v1536 = vpack.c.b16 %v1384, %v1376
        %v1537 = vpack.c.b16 %v1385, %v1377
        %v1538 = vpack.c.b16 %v1386, %v1378
        %v1539 = vpack.c.b16 %v1387, %v1379
        %v1540 = vpack.c.b16 %v1388, %v1380
        %v1541 = vpack.c.b16 %v1389, %v1381
        %v1542 = vpack.c.b16 %v1390, %v1382
        %v1543 = vpack.c.b16 %v1399, %v1391
        %v1544 = vpack.c.b16 %v1400, %v1392
        %v1545 = vpack.c.b16 %v1401, %v1393
        %v1546 = vpack.c.b16 %v1402, %v1394
        %v1547 = vpack.c.b16 %v1403, %v1395
        %v1548 = vpack.c.b16 %v1404, %v1396
        %v1549 = vpack.c.b16 %v1405, %v1397
        %v1550 = vpack.c.b16 %v1406, %v1398
        %v1551 = vpack.c.b16 %v1415, %v1407
        %v1552 = vpack.c.b16 %v1416, %v1408
        %v1553 = vpack.c.b16 %v1417, %v1409
        %v1554 = vpack.c.b16 %v1418, %v1410
        %v1555 = vpack.c.b16 %v1419, %v1411
        %v1556 = vpack.c.b16 %v1420, %v1412
        %v1557 = vpack.c.b16 %v1421, %v1413
        %v1558 = vpack.c.b16 %v1422, %v1414
        %v1559 = vpack.c.b16 %v1431, %v1423
        %v1560 = vpack.c.b16 %v1432, %v1424
        %v1561 = vpack.c.b16 %v1433, %v1425
        %v1562 = vpack.c.b16 %v1434, %v1426
        %v1563 = vpack.c.b16 %v1435, %v1427
        %v1564 = vpack.c.b16 %v1436, %v1428
        %v1565 = vpack.c.b16 %v1437, %v1429
        %v1566 = vpack.c.b16 %v1438, %v1430
        %1695 = vmatpush.bf16.msra.mxu0 %v1495
        %1696 = vmatpush.bf16.msra.mxu0 %v1487
        %1697 = vmatpush.bf16.msra.mxu0 %v1479
        %1698 = vmatpush.bf16.msra.mxu0 %v1471
        %1699 = vmatpush.bf16.msra.mxu0 %v1463
        %1700 = vmatpush.bf16.msra.mxu0 %v1455
        %1701 = vmatpush.bf16.msra.mxu0 %v1447
        %1702 = vmatpush.bf16.msra.mxu0 %v1439
        %1703 = vmatmul.bf16.gmra.mxu0 %v1053
        %v1704 = vpop.f32.mrf.mxu0
        %v1705 = vadd.f32 0.0, %v1704
        %v1706 = vpop.f32.mrf.mxu0
        %1707 = vdwg.mxu0
        %1708 = vmatpush.bf16.msra.mxu0 %v1559
        %1709 = vmatpush.bf16.msra.mxu0 %v1551
        %1710 = vmatpush.bf16.msra.mxu0 %v1543
        %1711 = vmatpush.bf16.msra.mxu0 %v1535
        %1712 = vmatpush.bf16.msra.mxu0 %v1527
        %1713 = vmatpush.bf16.msra.mxu0 %v1519
        %1714 = vmatpush.bf16.msra.mxu0 %v1511
        %1715 = vmatpush.bf16.msra.mxu0 %v1503
        %1716 = vmatmul.bf16.gmra.mxu0 %v1054
        %v1717 = vpop.f32.mrf.mxu0
        %v1718 = vadd.f32 %v1705, %v1717
        %v1719 = vpop.f32.mrf.mxu0
        %1720 = vdwg.mxu0
        %1721 = vmatpush.bf16.msra.mxu0 %v1496
        %1722 = vmatpush.bf16.msra.mxu0 %v1488
        %1723 = vmatpush.bf16.msra.mxu0 %v1480
        %1724 = vmatpush.bf16.msra.mxu0 %v1472
        %1725 = vmatpush.bf16.msra.mxu0 %v1464
        %1726 = vmatpush.bf16.msra.mxu0 %v1456
        %1727 = vmatpush.bf16.msra.mxu0 %v1448
        %1728 = vmatpush.bf16.msra.mxu0 %v1440
        %1729 = vmatmul.bf16.gmra.mxu0 %v1053
        %v1730 = vpop.f32.mrf.mxu0
        %v1731 = vadd.f32 0.0, %v1730
        %v1732 = vpop.f32.mrf.mxu0
        %1733 = vdwg.mxu0
        %1734 = vmatpush.bf16.msra.mxu0 %v1560
        %1735 = vmatpush.bf16.msra.mxu0 %v1552
        %1736 = vmatpush.bf16.msra.mxu0 %v1544
        %1737 = vmatpush.bf16.msra.mxu0 %v1536
        %1738 = vmatpush.bf16.msra.mxu0 %v1528
        %1739 = vmatpush.bf16.msra.mxu0 %v1520
        %1740 = vmatpush.bf16.msra.mxu0 %v1512
        %1741 = vmatpush.bf16.msra.mxu0 %v1504
        %1742 = vmatmul.bf16.gmra.mxu0 %v1054
        %v1743 = vpop.f32.mrf.mxu0
        %v1744 = vadd.f32 %v1731, %v1743
        %v1745 = vpop.f32.mrf.mxu0
        %1746 = vdwg.mxu0
        %1747 = vmatpush.bf16.msra.mxu0 %v1497
        %1748 = vmatpush.bf16.msra.mxu0 %v1489
        %1749 = vmatpush.bf16.msra.mxu0 %v1481
        %1750 = vmatpush.bf16.msra.mxu0 %v1473
        %1751 = vmatpush.bf16.msra.mxu0 %v1465
        %1752 = vmatpush.bf16.msra.mxu0 %v1457
        %1753 = vmatpush.bf16.msra.mxu0 %v1449
        %1754 = vmatpush.bf16.msra.mxu0 %v1441
        %1755 = vmatmul.bf16.gmra.mxu0 %v1053
        %v1756 = vpop.f32.mrf.mxu0
        %v1757 = vadd.f32 0.0, %v1756
        %v1758 = vpop.f32.mrf.mxu0
        %1759 = vdwg.mxu0
        %1760 = vmatpush.bf16.msra.mxu0 %v1561
        %1761 = vmatpush.bf16.msra.mxu0 %v1553
        %1762 = vmatpush.bf16.msra.mxu0 %v1545
        %1763 = vmatpush.bf16.msra.mxu0 %v1537
        %1764 = vmatpush.bf16.msra.mxu0 %v1529
        %1765 = vmatpush.bf16.msra.mxu0 %v1521
        %1766 = vmatpush.bf16.msra.mxu0 %v1513
        %1767 = vmatpush.bf16.msra.mxu0 %v1505
        %1768 = vmatmul.bf16.gmra.mxu0 %v1054
        %v1769 = vpop.f32.mrf.mxu0
        %v1770 = vadd.f32 %v1757, %v1769
        %v1771 = vpop.f32.mrf.mxu0
        %1772 = vdwg.mxu0
        %1773 = vmatpush.bf16.msra.mxu0 %v1498
        %1774 = vmatpush.bf16.msra.mxu0 %v1490
        %1775 = vmatpush.bf16.msra.mxu0 %v1482
        %1776 = vmatpush.bf16.msra.mxu0 %v1474
        %1777 = vmatpush.bf16.msra.mxu0 %v1466
        %1778 = vmatpush.bf16.msra.mxu0 %v1458
        %1779 = vmatpush.bf16.msra.mxu0 %v1450
        %1780 = vmatpush.bf16.msra.mxu0 %v1442
        %1781 = vmatmul.bf16.gmra.mxu0 %v1053
        %v1782 = vpop.f32.mrf.mxu0
        %v1783 = vadd.f32 0.0, %v1782
        %v1784 = vpop.f32.mrf.mxu0
        %1785 = vdwg.mxu0
        %1786 = vmatpush.bf16.msra.mxu0 %v1562
        %1787 = vmatpush.bf16.msra.mxu0 %v1554
        %1788 = vmatpush.bf16.msra.mxu0 %v1546
        %1789 = vmatpush.bf16.msra.mxu0 %v1538
        %1790 = vmatpush.bf16.msra.mxu0 %v1530
        %1791 = vmatpush.bf16.msra.mxu0 %v1522
        %1792 = vmatpush.bf16.msra.mxu0 %v1514
        %1793 = vmatpush.bf16.msra.mxu0 %v1506
        %1794 = vmatmul.bf16.gmra.mxu0 %v1054
        %v1795 = vpop.f32.mrf.mxu0
        %v1796 = vadd.f32 %v1783, %v1795
        %v1797 = vpop.f32.mrf.mxu0
        %1798 = vdwg.mxu0
        %1799 = vmatpush.bf16.msra.mxu0 %v1499
        %1800 = vmatpush.bf16.msra.mxu0 %v1491
        %1801 = vmatpush.bf16.msra.mxu0 %v1483
        %1802 = vmatpush.bf16.msra.mxu0 %v1475
        %1803 = vmatpush.bf16.msra.mxu0 %v1467
        %1804 = vmatpush.bf16.msra.mxu0 %v1459
        %1805 = vmatpush.bf16.msra.mxu0 %v1451
        %1806 = vmatpush.bf16.msra.mxu0 %v1443
        %1807 = vmatmul.bf16.gmra.mxu0 %v1053
        %v1808 = vpop.f32.mrf.mxu0
        %v1809 = vadd.f32 0.0, %v1808
        %v1810 = vpop.f32.mrf.mxu0
        %1811 = vdwg.mxu0
        %1812 = vmatpush.bf16.msra.mxu0 %v1563
        %1813 = vmatpush.bf16.msra.mxu0 %v1555
        %1814 = vmatpush.bf16.msra.mxu0 %v1547
        %1815 = vmatpush.bf16.msra.mxu0 %v1539
        %1816 = vmatpush.bf16.msra.mxu0 %v1531
        %1817 = vmatpush.bf16.msra.mxu0 %v1523
        %1818 = vmatpush.bf16.msra.mxu0 %v1515
        %1819 = vmatpush.bf16.msra.mxu0 %v1507
        %1820 = vmatmul.bf16.gmra.mxu0 %v1054
        %v1821 = vpop.f32.mrf.mxu0
        %v1822 = vadd.f32 %v1809, %v1821
        %v1823 = vpop.f32.mrf.mxu0
        %1824 = vdwg.mxu0
        %1825 = vmatpush.bf16.msra.mxu0 %v1500
        %1826 = vmatpush.bf16.msra.mxu0 %v1492
        %1827 = vmatpush.bf16.msra.mxu0 %v1484
        %1828 = vmatpush.bf16.msra.mxu0 %v1476
        %1829 = vmatpush.bf16.msra.mxu0 %v1468
        %1830 = vmatpush.bf16.msra.mxu0 %v1460
        %1831 = vmatpush.bf16.msra.mxu0 %v1452
        %1832 = vmatpush.bf16.msra.mxu0 %v1444
        %1833 = vmatmul.bf16.gmra.mxu0 %v1053
        %v1834 = vpop.f32.mrf.mxu0
        %v1835 = vadd.f32 0.0, %v1834
        %v1836 = vpop.f32.mrf.mxu0
        %1837 = vdwg.mxu0
        %1838 = vmatpush.bf16.msra.mxu0 %v1564
        %1839 = vmatpush.bf16.msra.mxu0 %v1556
        %1840 = vmatpush.bf16.msra.mxu0 %v1548
        %1841 = vmatpush.bf16.msra.mxu0 %v1540
        %1842 = vmatpush.bf16.msra.mxu0 %v1532
        %1843 = vmatpush.bf16.msra.mxu0 %v1524
        %1844 = vmatpush.bf16.msra.mxu0 %v1516
        %1845 = vmatpush.bf16.msra.mxu0 %v1508
        %1846 = vmatmul.bf16.gmra.mxu0 %v1054
        %v1847 = vpop.f32.mrf.mxu0
        %v1848 = vadd.f32 %v1835, %v1847
        %v1849 = vpop.f32.mrf.mxu0
        %1850 = vdwg.mxu0
        %1851 = vmatpush.bf16.msra.mxu0 %v1501
        %1852 = vmatpush.bf16.msra.mxu0 %v1493
        %1853 = vmatpush.bf16.msra.mxu0 %v1485
        %1854 = vmatpush.bf16.msra.mxu0 %v1477
        %1855 = vmatpush.bf16.msra.mxu0 %v1469
        %1856 = vmatpush.bf16.msra.mxu0 %v1461
        %1857 = vmatpush.bf16.msra.mxu0 %v1453
        %1858 = vmatpush.bf16.msra.mxu0 %v1445
        %1859 = vmatmul.bf16.gmra.mxu0 %v1053
        %v1860 = vpop.f32.mrf.mxu0
        %v1861 = vadd.f32 0.0, %v1860
        %v1862 = vpop.f32.mrf.mxu0
        %1863 = vdwg.mxu0
        %1864 = vmatpush.bf16.msra.mxu0 %v1565
        %1865 = vmatpush.bf16.msra.mxu0 %v1557
        %1866 = vmatpush.bf16.msra.mxu0 %v1549
        %1867 = vmatpush.bf16.msra.mxu0 %v1541
        %1868 = vmatpush.bf16.msra.mxu0 %v1533
        %1869 = vmatpush.bf16.msra.mxu0 %v1525
        %1870 = vmatpush.bf16.msra.mxu0 %v1517
        %1871 = vmatpush.bf16.msra.mxu0 %v1509
        %1872 = vmatmul.bf16.gmra.mxu0 %v1054
        %v1873 = vpop.f32.mrf.mxu0
        %v1874 = vadd.f32 %v1861, %v1873
        %v1875 = vpop.f32.mrf.mxu0
        %1876 = vdwg.mxu0
        %1877 = vmatpush.bf16.msra.mxu0 %v1502
        %1878 = vmatpush.bf16.msra.mxu0 %v1494
        %1879 = vmatpush.bf16.msra.mxu0 %v1486
        %1880 = vmatpush.bf16.msra.mxu0 %v1478
        %1881 = vmatpush.bf16.msra.mxu0 %v1470
        %1882 = vmatpush.bf16.msra.mxu0 %v1462
        %1883 = vmatpush.bf16.msra.mxu0 %v1454
        %1884 = vmatpush.bf16.msra.mxu0 %v1446
        %1885 = vmatmul.bf16.gmra.mxu0 %v1053
        %v1886 = vpop.f32.mrf.mxu0
        %v1887 = vadd.f32 0.0, %v1886
        %v1888 = vpop.f32.mrf.mxu0
        %1889 = vdwg.mxu0
        %1890 = vmatpush.bf16.msra.mxu0 %v1566
        %1891 = vmatpush.bf16.msra.mxu0 %v1558
        %1892 = vmatpush.bf16.msra.mxu0 %v1550
        %1893 = vmatpush.bf16.msra.mxu0 %v1542
        %1894 = vmatpush.bf16.msra.mxu0 %v1534
        %1895 = vmatpush.bf16.msra.mxu0 %v1526
        %1896 = vmatpush.bf16.msra.mxu0 %v1518
        %1897 = vmatpush.bf16.msra.mxu0 %v1510
        %1898 = vmatmul.bf16.gmra.mxu0 %v1054
        %v1899 = vpop.f32.mrf.mxu0
        %v1900 = vadd.f32 %v1887, %v1899
        %v1901 = vpop.f32.mrf.mxu0
        %1902 = vdwg.mxu0
        %v1903 = vadd.f32 %v1718, %v993
        %v1904 = vadd.f32 %v1744, %v994
        %v1905 = vadd.f32 %v1770, %v995
        %v1906 = vadd.f32 %v1796, %v996
        %v1907 = vmul.f32 %v1903, 0.5
        %v1908 = vtanh.pop %v1907
        %v1909 = vmul.f32 %v1908, 0.5
        %v1910 = vadd.f32 %v1909, 0.5
        %v1911 = vmul.f32 %v1904, 0.5
        %v1912 = vtanh.pop %v1911
        %v1913 = vmul.f32 %v1912, 0.5
        %v1914 = vadd.f32 %v1913, 0.5
        %v1915 = vtanh.pop %v1905
        %v1916 = vmul.f32 %v1906, 0.5
        %v1917 = vtanh.pop %v1916
        %v1918 = vmul.f32 %v1917, 0.5
        %v1919 = vadd.f32 %v1918, 0.5
        %v1920 = vmul.f32 %v1914, %v1013
        %v1921 = vmul.f32 %v1910, %v1915
        %v1922 = vadd.f32 %v1920, %v1921
        %v1923 = vtanh.pop %v1922
        %v1924 = vmul.f32 %v1919, %v1923
        %s1925 = scalar_lea.vmem %s338, 16 [#allocation3]
        %v1926 = vld [vmem:[%s1925] sm:$0xff]
        %1928 = vset.pattern.permute.xlu0 0
        %1929 = vperm.xlu0 %1928, %v1926
        %v1930 = vpop.permute.xlu0 %1929
        %v1932 = vmul.f32 %v1930, %v506
        %v1933 = vmul.f32 %v1930, %v507
        %v1934 = vmul.f32 %v1930, %v508
        %v1935 = vmul.f32 %v1930, %v509
        %v1936 = vadd.f32 %v1932, %v516
        %v1937 = vadd.f32 %v1933, %v517
        %v1938 = vadd.f32 %v1934, %v518
        %v1939 = vadd.f32 %v1935, %v519
        %v1940 = vadd.f32 %v1936, %v1822
        %v1941 = vadd.f32 %v1937, %v1848
        %v1942 = vadd.f32 %v1938, %v1874
        %v1943 = vadd.f32 %v1939, %v1900
        %v1944 = vmul.f32 %v1940, 0.5
        %v1945 = vtanh.pop %v1944
        %v1946 = vmul.f32 %v1945, 0.5
        %v1947 = vadd.f32 %v1946, 0.5
        %v1948 = vmul.f32 %v1941, 0.5
        %v1949 = vtanh.pop %v1948
        %v1950 = vmul.f32 %v1949, 0.5
        %v1951 = vadd.f32 %v1950, 0.5
        %v1952 = vtanh.pop %v1942
        %v1953 = vmul.f32 %v1943, 0.5
        %v1954 = vtanh.pop %v1953
        %v1955 = vmul.f32 %v1954, 0.5
        %v1956 = vadd.f32 %v1955, 0.5
        %v1957 = vmul.f32 %v1951, %v1050
        %v1958 = vmul.f32 %v1947, %v1952
        %v1959 = vadd.f32 %v1957, %v1958
        %v1960 = vtanh.pop %v1959
        %v1961 = vmul.f32 %v1956, %v1960
        %v1962 = vpack.c.bf16 %v1961, %v1961
        %v1963 = vpack.c.bf16 %v1924, %v1924
        %1964 = vmatpush.bf16.msra.mxu0 %v1495
        %1965 = vmatpush.bf16.msra.mxu0 %v1487
        %1966 = vmatpush.bf16.msra.mxu0 %v1479
        %1967 = vmatpush.bf16.msra.mxu0 %v1471
        %1968 = vmatpush.bf16.msra.mxu0 %v1463
        %1969 = vmatpush.bf16.msra.mxu0 %v1455
        %1970 = vmatpush.bf16.msra.mxu0 %v1447
        %1971 = vmatpush.bf16.msra.mxu0 %v1439
        %1972 = vmatmul.bf16.gmra.mxu0 %v1962
        %v1973 = vpop.f32.mrf.mxu0
        %v1974 = vadd.f32 0.0, %v1973
        %v1975 = vpop.f32.mrf.mxu0
        %1976 = vdwg.mxu0
        %1977 = vmatpush.bf16.msra.mxu0 %v1559
        %1978 = vmatpush.bf16.msra.mxu0 %v1551
        %1979 = vmatpush.bf16.msra.mxu0 %v1543
        %1980 = vmatpush.bf16.msra.mxu0 %v1535
        %1981 = vmatpush.bf16.msra.mxu0 %v1527
        %1982 = vmatpush.bf16.msra.mxu0 %v1519
        %1983 = vmatpush.bf16.msra.mxu0 %v1511
        %1984 = vmatpush.bf16.msra.mxu0 %v1503
        %1985 = vmatmul.bf16.gmra.mxu0 %v1963
        %v1986 = vpop.f32.mrf.mxu0
        %v1987 = vadd.f32 %v1974, %v1986
        %v1988 = vpop.f32.mrf.mxu0
        %1989 = vdwg.mxu0
        %1990 = vmatpush.bf16.msra.mxu0 %v1496
        %1991 = vmatpush.bf16.msra.mxu0 %v1488
        %1992 = vmatpush.bf16.msra.mxu0 %v1480
        %1993 = vmatpush.bf16.msra.mxu0 %v1472
        %1994 = vmatpush.bf16.msra.mxu0 %v1464
        %1995 = vmatpush.bf16.msra.mxu0 %v1456
        %1996 = vmatpush.bf16.msra.mxu0 %v1448
        %1997 = vmatpush.bf16.msra.mxu0 %v1440
        %1998 = vmatmul.bf16.gmra.mxu0 %v1962
        %v1999 = vpop.f32.mrf.mxu0
        %v2000 = vadd.f32 0.0, %v1999
        %v2001 = vpop.f32.mrf.mxu0
        %2002 = vdwg.mxu0
        %2003 = vmatpush.bf16.msra.mxu0 %v1560
        %2004 = vmatpush.bf16.msra.mxu0 %v1552
        %2005 = vmatpush.bf16.msra.mxu0 %v1544
        %2006 = vmatpush.bf16.msra.mxu0 %v1536
        %2007 = vmatpush.bf16.msra.mxu0 %v1528
        %2008 = vmatpush.bf16.msra.mxu0 %v1520
        %2009 = vmatpush.bf16.msra.mxu0 %v1512
        %2010 = vmatpush.bf16.msra.mxu0 %v1504
        %2011 = vmatmul.bf16.gmra.mxu0 %v1963
        %v2012 = vpop.f32.mrf.mxu0
        %v2013 = vadd.f32 %v2000, %v2012
        %v2014 = vpop.f32.mrf.mxu0
        %2015 = vdwg.mxu0
        %2016 = vmatpush.bf16.msra.mxu0 %v1497
        %2017 = vmatpush.bf16.msra.mxu0 %v1489
        %2018 = vmatpush.bf16.msra.mxu0 %v1481
        %2019 = vmatpush.bf16.msra.mxu0 %v1473
        %2020 = vmatpush.bf16.msra.mxu0 %v1465
        %2021 = vmatpush.bf16.msra.mxu0 %v1457
        %2022 = vmatpush.bf16.msra.mxu0 %v1449
        %2023 = vmatpush.bf16.msra.mxu0 %v1441
        %2024 = vmatmul.bf16.gmra.mxu0 %v1962
        %v2025 = vpop.f32.mrf.mxu0
        %v2026 = vadd.f32 0.0, %v2025
        %v2027 = vpop.f32.mrf.mxu0
        %2028 = vdwg.mxu0
        %2029 = vmatpush.bf16.msra.mxu0 %v1561
        %2030 = vmatpush.bf16.msra.mxu0 %v1553
        %2031 = vmatpush.bf16.msra.mxu0 %v1545
        %2032 = vmatpush.bf16.msra.mxu0 %v1537
        %2033 = vmatpush.bf16.msra.mxu0 %v1529
        %2034 = vmatpush.bf16.msra.mxu0 %v1521
        %2035 = vmatpush.bf16.msra.mxu0 %v1513
        %2036 = vmatpush.bf16.msra.mxu0 %v1505
        %2037 = vmatmul.bf16.gmra.mxu0 %v1963
        %v2038 = vpop.f32.mrf.mxu0
        %v2039 = vadd.f32 %v2026, %v2038
        %v2040 = vpop.f32.mrf.mxu0
        %2041 = vdwg.mxu0
        %2042 = vmatpush.bf16.msra.mxu0 %v1498
        %2043 = vmatpush.bf16.msra.mxu0 %v1490
        %2044 = vmatpush.bf16.msra.mxu0 %v1482
        %2045 = vmatpush.bf16.msra.mxu0 %v1474
        %2046 = vmatpush.bf16.msra.mxu0 %v1466
        %2047 = vmatpush.bf16.msra.mxu0 %v1458
        %2048 = vmatpush.bf16.msra.mxu0 %v1450
        %2049 = vmatpush.bf16.msra.mxu0 %v1442
        %2050 = vmatmul.bf16.gmra.mxu0 %v1962
        %v2051 = vpop.f32.mrf.mxu0
        %v2052 = vadd.f32 0.0, %v2051
        %v2053 = vpop.f32.mrf.mxu0
        %2054 = vdwg.mxu0
        %2055 = vmatpush.bf16.msra.mxu0 %v1562
        %2056 = vmatpush.bf16.msra.mxu0 %v1554
        %2057 = vmatpush.bf16.msra.mxu0 %v1546
        %2058 = vmatpush.bf16.msra.mxu0 %v1538
        %2059 = vmatpush.bf16.msra.mxu0 %v1530
        %2060 = vmatpush.bf16.msra.mxu0 %v1522
        %2061 = vmatpush.bf16.msra.mxu0 %v1514
        %2062 = vmatpush.bf16.msra.mxu0 %v1506
        %2063 = vmatmul.bf16.gmra.mxu0 %v1963
        %v2064 = vpop.f32.mrf.mxu0
        %v2065 = vadd.f32 %v2052, %v2064
        %v2066 = vpop.f32.mrf.mxu0
        %2067 = vdwg.mxu0
        %2068 = vmatpush.bf16.msra.mxu0 %v1499
        %2069 = vmatpush.bf16.msra.mxu0 %v1491
        %2070 = vmatpush.bf16.msra.mxu0 %v1483
        %2071 = vmatpush.bf16.msra.mxu0 %v1475
        %2072 = vmatpush.bf16.msra.mxu0 %v1467
        %2073 = vmatpush.bf16.msra.mxu0 %v1459
        %2074 = vmatpush.bf16.msra.mxu0 %v1451
        %2075 = vmatpush.bf16.msra.mxu0 %v1443
        %2076 = vmatmul.bf16.gmra.mxu0 %v1962
        %v2077 = vpop.f32.mrf.mxu0
        %v2078 = vadd.f32 0.0, %v2077
        %v2079 = vpop.f32.mrf.mxu0
        %2080 = vdwg.mxu0
        %2081 = vmatpush.bf16.msra.mxu0 %v1563
        %2082 = vmatpush.bf16.msra.mxu0 %v1555
        %2083 = vmatpush.bf16.msra.mxu0 %v1547
        %2084 = vmatpush.bf16.msra.mxu0 %v1539
        %2085 = vmatpush.bf16.msra.mxu0 %v1531
        %2086 = vmatpush.bf16.msra.mxu0 %v1523
        %2087 = vmatpush.bf16.msra.mxu0 %v1515
        %2088 = vmatpush.bf16.msra.mxu0 %v1507
        %2089 = vmatmul.bf16.gmra.mxu0 %v1963
        %v2090 = vpop.f32.mrf.mxu0
        %v2091 = vadd.f32 %v2078, %v2090
        %v2092 = vpop.f32.mrf.mxu0
        %2093 = vdwg.mxu0
        %2094 = vmatpush.bf16.msra.mxu0 %v1500
        %2095 = vmatpush.bf16.msra.mxu0 %v1492
        %2096 = vmatpush.bf16.msra.mxu0 %v1484
        %2097 = vmatpush.bf16.msra.mxu0 %v1476
        %2098 = vmatpush.bf16.msra.mxu0 %v1468
        %2099 = vmatpush.bf16.msra.mxu0 %v1460
        %2100 = vmatpush.bf16.msra.mxu0 %v1452
        %2101 = vmatpush.bf16.msra.mxu0 %v1444
        %2102 = vmatmul.bf16.gmra.mxu0 %v1962
        %v2103 = vpop.f32.mrf.mxu0
        %v2104 = vadd.f32 0.0, %v2103
        %v2105 = vpop.f32.mrf.mxu0
        %2106 = vdwg.mxu0
        %2107 = vmatpush.bf16.msra.mxu0 %v1564
        %2108 = vmatpush.bf16.msra.mxu0 %v1556
        %2109 = vmatpush.bf16.msra.mxu0 %v1548
        %2110 = vmatpush.bf16.msra.mxu0 %v1540
        %2111 = vmatpush.bf16.msra.mxu0 %v1532
        %2112 = vmatpush.bf16.msra.mxu0 %v1524
        %2113 = vmatpush.bf16.msra.mxu0 %v1516
        %2114 = vmatpush.bf16.msra.mxu0 %v1508
        %2115 = vmatmul.bf16.gmra.mxu0 %v1963
        %v2116 = vpop.f32.mrf.mxu0
        %v2117 = vadd.f32 %v2104, %v2116
        %v2118 = vpop.f32.mrf.mxu0
        %2119 = vdwg.mxu0
        %2120 = vmatpush.bf16.msra.mxu0 %v1501
        %2121 = vmatpush.bf16.msra.mxu0 %v1493
        %2122 = vmatpush.bf16.msra.mxu0 %v1485
        %2123 = vmatpush.bf16.msra.mxu0 %v1477
        %2124 = vmatpush.bf16.msra.mxu0 %v1469
        %2125 = vmatpush.bf16.msra.mxu0 %v1461
        %2126 = vmatpush.bf16.msra.mxu0 %v1453
        %2127 = vmatpush.bf16.msra.mxu0 %v1445
        %2128 = vmatmul.bf16.gmra.mxu0 %v1962
        %v2129 = vpop.f32.mrf.mxu0
        %v2130 = vadd.f32 0.0, %v2129
        %v2131 = vpop.f32.mrf.mxu0
        %2132 = vdwg.mxu0
        %2133 = vmatpush.bf16.msra.mxu0 %v1565
        %2134 = vmatpush.bf16.msra.mxu0 %v1557
        %2135 = vmatpush.bf16.msra.mxu0 %v1549
        %2136 = vmatpush.bf16.msra.mxu0 %v1541
        %2137 = vmatpush.bf16.msra.mxu0 %v1533
        %2138 = vmatpush.bf16.msra.mxu0 %v1525
        %2139 = vmatpush.bf16.msra.mxu0 %v1517
        %2140 = vmatpush.bf16.msra.mxu0 %v1509
        %2141 = vmatmul.bf16.gmra.mxu0 %v1963
        %v2142 = vpop.f32.mrf.mxu0
        %v2143 = vadd.f32 %v2130, %v2142
        %v2144 = vpop.f32.mrf.mxu0
        %2145 = vdwg.mxu0
        %2146 = vmatpush.bf16.msra.mxu0 %v1502
        %2147 = vmatpush.bf16.msra.mxu0 %v1494
        %2148 = vmatpush.bf16.msra.mxu0 %v1486
        %2149 = vmatpush.bf16.msra.mxu0 %v1478
        %2150 = vmatpush.bf16.msra.mxu0 %v1470
        %2151 = vmatpush.bf16.msra.mxu0 %v1462
        %2152 = vmatpush.bf16.msra.mxu0 %v1454
        %2153 = vmatpush.bf16.msra.mxu0 %v1446
        %2154 = vmatmul.bf16.gmra.mxu0 %v1962
        %v2155 = vpop.f32.mrf.mxu0
        %v2156 = vadd.f32 0.0, %v2155
        %v2157 = vpop.f32.mrf.mxu0
        %2158 = vdwg.mxu0
        %2159 = vmatpush.bf16.msra.mxu0 %v1566
        %2160 = vmatpush.bf16.msra.mxu0 %v1558
        %2161 = vmatpush.bf16.msra.mxu0 %v1550
        %2162 = vmatpush.bf16.msra.mxu0 %v1542
        %2163 = vmatpush.bf16.msra.mxu0 %v1534
        %2164 = vmatpush.bf16.msra.mxu0 %v1526
        %2165 = vmatpush.bf16.msra.mxu0 %v1518
        %2166 = vmatpush.bf16.msra.mxu0 %v1510
        %2167 = vmatmul.bf16.gmra.mxu0 %v1963
        %v2168 = vpop.f32.mrf.mxu0
        %v2169 = vadd.f32 %v2156, %v2168
        %v2170 = vpop.f32.mrf.mxu0
        %2171 = vdwg.mxu0
        %v2172 = vadd.f32 %v1987, %v993
        %v2173 = vadd.f32 %v2013, %v994
        %v2174 = vadd.f32 %v2039, %v995
        %v2175 = vadd.f32 %v2065, %v996
        %v2176 = vmul.f32 %v2172, 0.5
        %v2177 = vtanh.pop %v2176
        %v2178 = vmul.f32 %v2177, 0.5
        %v2179 = vadd.f32 %v2178, 0.5
        %v2180 = vmul.f32 %v2173, 0.5
        %v2181 = vtanh.pop %v2180
        %v2182 = vmul.f32 %v2181, 0.5
        %v2183 = vadd.f32 %v2182, 0.5
        %v2184 = vtanh.pop %v2174
        %v2185 = vmul.f32 %v2175, 0.5
        %v2186 = vtanh.pop %v2185
        %v2187 = vmul.f32 %v2186, 0.5
        %v2188 = vadd.f32 %v2187, 0.5
        %v2189 = vmul.f32 %v2183, %v1922
        %v2190 = vmul.f32 %v2179, %v2184
        %v2191 = vadd.f32 %v2189, %v2190
        %v2192 = vtanh.pop %v2191
        %v2193 = vmul.f32 %v2188, %v2192
        %s2194 = scalar_lea.vmem %s338, 24 [#allocation3]
        %v2195 = vld [vmem:[%s2194] sm:$0xff]
        %2197 = vset.pattern.permute.xlu0 0
        %2198 = vperm.xlu0 %2197, %v2195
        %v2199 = vpop.permute.xlu0 %2198
        %v2201 = vmul.f32 %v2199, %v506
        %v2202 = vmul.f32 %v2199, %v507
        %v2203 = vmul.f32 %v2199, %v508
        %v2204 = vmul.f32 %v2199, %v509
        %v2205 = vadd.f32 %v2201, %v516
        %v2206 = vadd.f32 %v2202, %v517
        %v2207 = vadd.f32 %v2203, %v518
        %v2208 = vadd.f32 %v2204, %v519
        %v2209 = vadd.f32 %v2205, %v2091
        %v2210 = vadd.f32 %v2206, %v2117
        %v2211 = vadd.f32 %v2207, %v2143
        %v2212 = vadd.f32 %v2208, %v2169
        %v2213 = vmul.f32 %v2209, 0.5
        %v2214 = vtanh.pop %v2213
        %v2215 = vmul.f32 %v2214, 0.5
        %v2216 = vadd.f32 %v2215, 0.5
        %v2217 = vmul.f32 %v2210, 0.5
        %v2218 = vtanh.pop %v2217
        %v2219 = vmul.f32 %v2218, 0.5
        %v2220 = vadd.f32 %v2219, 0.5
        %v2221 = vtanh.pop %v2211
        %v2222 = vmul.f32 %v2212, 0.5
        %v2223 = vtanh.pop %v2222
        %v2224 = vmul.f32 %v2223, 0.5
        %v2225 = vadd.f32 %v2224, 0.5
        %v2226 = vmul.f32 %v2220, %v1959
        %v2227 = vmul.f32 %v2216, %v2221
        %v2228 = vadd.f32 %v2226, %v2227
        %v2229 = vtanh.pop %v2228
        %v2230 = vmul.f32 %v2225, %v2229
        %v2231 = vpack.c.bf16 %v2230, %v2230
        %v2232 = vpack.c.bf16 %v2193, %v2193
        %2233 = vmatpush.bf16.msra.mxu0 %v1495
        %2234 = vmatpush.bf16.msra.mxu0 %v1487
        %2235 = vmatpush.bf16.msra.mxu0 %v1479
        %2236 = vmatpush.bf16.msra.mxu0 %v1471
        %2237 = vmatpush.bf16.msra.mxu0 %v1463
        %2238 = vmatpush.bf16.msra.mxu0 %v1455
        %2239 = vmatpush.bf16.msra.mxu0 %v1447
        %2240 = vmatpush.bf16.msra.mxu0 %v1439
        %2241 = vmatmul.bf16.gmra.mxu0 %v2231
        %v2242 = vpop.f32.mrf.mxu0
        %v2243 = vadd.f32 0.0, %v2242
        %v2244 = vpop.f32.mrf.mxu0
        %2245 = vdwg.mxu0
        %2246 = vmatpush.bf16.msra.mxu0 %v1559
        %2247 = vmatpush.bf16.msra.mxu0 %v1551
        %2248 = vmatpush.bf16.msra.mxu0 %v1543
        %2249 = vmatpush.bf16.msra.mxu0 %v1535
        %2250 = vmatpush.bf16.msra.mxu0 %v1527
        %2251 = vmatpush.bf16.msra.mxu0 %v1519
        %2252 = vmatpush.bf16.msra.mxu0 %v1511
        %2253 = vmatpush.bf16.msra.mxu0 %v1503
        %2254 = vmatmul.bf16.gmra.mxu0 %v2232
        %v2255 = vpop.f32.mrf.mxu0
        %v2256 = vadd.f32 %v2243, %v2255
        %v2257 = vpop.f32.mrf.mxu0
        %2258 = vdwg.mxu0
        %2259 = vmatpush.bf16.msra.mxu0 %v1496
        %2260 = vmatpush.bf16.msra.mxu0 %v1488
        %2261 = vmatpush.bf16.msra.mxu0 %v1480
        %2262 = vmatpush.bf16.msra.mxu0 %v1472
        %2263 = vmatpush.bf16.msra.mxu0 %v1464
        %2264 = vmatpush.bf16.msra.mxu0 %v1456
        %2265 = vmatpush.bf16.msra.mxu0 %v1448
        %2266 = vmatpush.bf16.msra.mxu0 %v1440
        %2267 = vmatmul.bf16.gmra.mxu0 %v2231
        %v2268 = vpop.f32.mrf.mxu0
        %v2269 = vadd.f32 0.0, %v2268
        %v2270 = vpop.f32.mrf.mxu0
        %2271 = vdwg.mxu0
        %2272 = vmatpush.bf16.msra.mxu0 %v1560
        %2273 = vmatpush.bf16.msra.mxu0 %v1552
        %2274 = vmatpush.bf16.msra.mxu0 %v1544
        %2275 = vmatpush.bf16.msra.mxu0 %v1536
        %2276 = vmatpush.bf16.msra.mxu0 %v1528
        %2277 = vmatpush.bf16.msra.mxu0 %v1520
        %2278 = vmatpush.bf16.msra.mxu0 %v1512
        %2279 = vmatpush.bf16.msra.mxu0 %v1504
        %2280 = vmatmul.bf16.gmra.mxu0 %v2232
        %v2281 = vpop.f32.mrf.mxu0
        %v2282 = vadd.f32 %v2269, %v2281
        %v2283 = vpop.f32.mrf.mxu0
        %2284 = vdwg.mxu0
        %2285 = vmatpush.bf16.msra.mxu0 %v1497
        %2286 = vmatpush.bf16.msra.mxu0 %v1489
        %2287 = vmatpush.bf16.msra.mxu0 %v1481
        %2288 = vmatpush.bf16.msra.mxu0 %v1473
        %2289 = vmatpush.bf16.msra.mxu0 %v1465
        %2290 = vmatpush.bf16.msra.mxu0 %v1457
        %2291 = vmatpush.bf16.msra.mxu0 %v1449
        %2292 = vmatpush.bf16.msra.mxu0 %v1441
        %2293 = vmatmul.bf16.gmra.mxu0 %v2231
        %v2294 = vpop.f32.mrf.mxu0
        %v2295 = vadd.f32 0.0, %v2294
        %v2296 = vpop.f32.mrf.mxu0
        %2297 = vdwg.mxu0
        %2298 = vmatpush.bf16.msra.mxu0 %v1561
        %2299 = vmatpush.bf16.msra.mxu0 %v1553
        %2300 = vmatpush.bf16.msra.mxu0 %v1545
        %2301 = vmatpush.bf16.msra.mxu0 %v1537
        %2302 = vmatpush.bf16.msra.mxu0 %v1529
        %2303 = vmatpush.bf16.msra.mxu0 %v1521
        %2304 = vmatpush.bf16.msra.mxu0 %v1513
        %2305 = vmatpush.bf16.msra.mxu0 %v1505
        %2306 = vmatmul.bf16.gmra.mxu0 %v2232
        %v2307 = vpop.f32.mrf.mxu0
        %v2308 = vadd.f32 %v2295, %v2307
        %v2309 = vpop.f32.mrf.mxu0
        %2310 = vdwg.mxu0
        %2311 = vmatpush.bf16.msra.mxu0 %v1498
        %2312 = vmatpush.bf16.msra.mxu0 %v1490
        %2313 = vmatpush.bf16.msra.mxu0 %v1482
        %2314 = vmatpush.bf16.msra.mxu0 %v1474
        %2315 = vmatpush.bf16.msra.mxu0 %v1466
        %2316 = vmatpush.bf16.msra.mxu0 %v1458
        %2317 = vmatpush.bf16.msra.mxu0 %v1450
        %2318 = vmatpush.bf16.msra.mxu0 %v1442
        %2319 = vmatmul.bf16.gmra.mxu0 %v2231
        %v2320 = vpop.f32.mrf.mxu0
        %v2321 = vadd.f32 0.0, %v2320
        %v2322 = vpop.f32.mrf.mxu0
        %2323 = vdwg.mxu0
        %2324 = vmatpush.bf16.msra.mxu0 %v1562
        %2325 = vmatpush.bf16.msra.mxu0 %v1554
        %2326 = vmatpush.bf16.msra.mxu0 %v1546
        %2327 = vmatpush.bf16.msra.mxu0 %v1538
        %2328 = vmatpush.bf16.msra.mxu0 %v1530
        %2329 = vmatpush.bf16.msra.mxu0 %v1522
        %2330 = vmatpush.bf16.msra.mxu0 %v1514
        %2331 = vmatpush.bf16.msra.mxu0 %v1506
        %2332 = vmatmul.bf16.gmra.mxu0 %v2232
        %v2333 = vpop.f32.mrf.mxu0
        %v2334 = vadd.f32 %v2321, %v2333
        %v2335 = vpop.f32.mrf.mxu0
        %2336 = vdwg.mxu0
        %2337 = vmatpush.bf16.msra.mxu0 %v1499
        %2338 = vmatpush.bf16.msra.mxu0 %v1491
        %2339 = vmatpush.bf16.msra.mxu0 %v1483
        %2340 = vmatpush.bf16.msra.mxu0 %v1475
        %2341 = vmatpush.bf16.msra.mxu0 %v1467
        %2342 = vmatpush.bf16.msra.mxu0 %v1459
        %2343 = vmatpush.bf16.msra.mxu0 %v1451
        %2344 = vmatpush.bf16.msra.mxu0 %v1443
        %2345 = vmatmul.bf16.gmra.mxu0 %v2231
        %v2346 = vpop.f32.mrf.mxu0
        %v2347 = vadd.f32 0.0, %v2346
        %v2348 = vpop.f32.mrf.mxu0
        %2349 = vdwg.mxu0
        %2350 = vmatpush.bf16.msra.mxu0 %v1563
        %2351 = vmatpush.bf16.msra.mxu0 %v1555
        %2352 = vmatpush.bf16.msra.mxu0 %v1547
        %2353 = vmatpush.bf16.msra.mxu0 %v1539
        %2354 = vmatpush.bf16.msra.mxu0 %v1531
        %2355 = vmatpush.bf16.msra.mxu0 %v1523
        %2356 = vmatpush.bf16.msra.mxu0 %v1515
        %2357 = vmatpush.bf16.msra.mxu0 %v1507
        %2358 = vmatmul.bf16.gmra.mxu0 %v2232
        %v2359 = vpop.f32.mrf.mxu0
        %v2360 = vadd.f32 %v2347, %v2359
        %v2361 = vpop.f32.mrf.mxu0
        %2362 = vdwg.mxu0
        %2363 = vmatpush.bf16.msra.mxu0 %v1500
        %2364 = vmatpush.bf16.msra.mxu0 %v1492
        %2365 = vmatpush.bf16.msra.mxu0 %v1484
        %2366 = vmatpush.bf16.msra.mxu0 %v1476
        %2367 = vmatpush.bf16.msra.mxu0 %v1468
        %2368 = vmatpush.bf16.msra.mxu0 %v1460
        %2369 = vmatpush.bf16.msra.mxu0 %v1452
        %2370 = vmatpush.bf16.msra.mxu0 %v1444
        %2371 = vmatmul.bf16.gmra.mxu0 %v2231
        %v2372 = vpop.f32.mrf.mxu0
        %v2373 = vadd.f32 0.0, %v2372
        %v2374 = vpop.f32.mrf.mxu0
        %2375 = vdwg.mxu0
        %2376 = vmatpush.bf16.msra.mxu0 %v1564
        %2377 = vmatpush.bf16.msra.mxu0 %v1556
        %2378 = vmatpush.bf16.msra.mxu0 %v1548
        %2379 = vmatpush.bf16.msra.mxu0 %v1540
        %2380 = vmatpush.bf16.msra.mxu0 %v1532
        %2381 = vmatpush.bf16.msra.mxu0 %v1524
        %2382 = vmatpush.bf16.msra.mxu0 %v1516
        %2383 = vmatpush.bf16.msra.mxu0 %v1508
        %2384 = vmatmul.bf16.gmra.mxu0 %v2232
        %v2385 = vpop.f32.mrf.mxu0
        %v2386 = vadd.f32 %v2373, %v2385
        %v2387 = vpop.f32.mrf.mxu0
        %2388 = vdwg.mxu0
        %2389 = vmatpush.bf16.msra.mxu0 %v1501
        %2390 = vmatpush.bf16.msra.mxu0 %v1493
        %2391 = vmatpush.bf16.msra.mxu0 %v1485
        %2392 = vmatpush.bf16.msra.mxu0 %v1477
        %2393 = vmatpush.bf16.msra.mxu0 %v1469
        %2394 = vmatpush.bf16.msra.mxu0 %v1461
        %2395 = vmatpush.bf16.msra.mxu0 %v1453
        %2396 = vmatpush.bf16.msra.mxu0 %v1445
        %2397 = vmatmul.bf16.gmra.mxu0 %v2231
        %v2398 = vpop.f32.mrf.mxu0
        %v2399 = vadd.f32 0.0, %v2398
        %v2400 = vpop.f32.mrf.mxu0
        %2401 = vdwg.mxu0
        %2402 = vmatpush.bf16.msra.mxu0 %v1565
        %2403 = vmatpush.bf16.msra.mxu0 %v1557
        %2404 = vmatpush.bf16.msra.mxu0 %v1549
        %2405 = vmatpush.bf16.msra.mxu0 %v1541
        %2406 = vmatpush.bf16.msra.mxu0 %v1533
        %2407 = vmatpush.bf16.msra.mxu0 %v1525
        %2408 = vmatpush.bf16.msra.mxu0 %v1517
        %2409 = vmatpush.bf16.msra.mxu0 %v1509
        %2410 = vmatmul.bf16.gmra.mxu0 %v2232
        %v2411 = vpop.f32.mrf.mxu0
        %v2412 = vadd.f32 %v2399, %v2411
        %v2413 = vpop.f32.mrf.mxu0
        %2414 = vdwg.mxu0
        %2415 = vmatpush.bf16.msra.mxu0 %v1502
        %2416 = vmatpush.bf16.msra.mxu0 %v1494
        %2417 = vmatpush.bf16.msra.mxu0 %v1486
        %2418 = vmatpush.bf16.msra.mxu0 %v1478
        %2419 = vmatpush.bf16.msra.mxu0 %v1470
        %2420 = vmatpush.bf16.msra.mxu0 %v1462
        %2421 = vmatpush.bf16.msra.mxu0 %v1454
        %2422 = vmatpush.bf16.msra.mxu0 %v1446
        %2423 = vmatmul.bf16.gmra.mxu0 %v2231
        %v2424 = vpop.f32.mrf.mxu0
        %v2425 = vadd.f32 0.0, %v2424
        %v2426 = vpop.f32.mrf.mxu0
        %2427 = vdwg.mxu0
        %2428 = vmatpush.bf16.msra.mxu0 %v1566
        %2429 = vmatpush.bf16.msra.mxu0 %v1558
        %2430 = vmatpush.bf16.msra.mxu0 %v1550
        %2431 = vmatpush.bf16.msra.mxu0 %v1542
        %2432 = vmatpush.bf16.msra.mxu0 %v1534
        %2433 = vmatpush.bf16.msra.mxu0 %v1526
        %2434 = vmatpush.bf16.msra.mxu0 %v1518
        %2435 = vmatpush.bf16.msra.mxu0 %v1510
        %2436 = vmatmul.bf16.gmra.mxu0 %v2232
        %v2437 = vpop.f32.mrf.mxu0
        %v2438 = vadd.f32 %v2425, %v2437
        %v2439 = vpop.f32.mrf.mxu0
        %2440 = vdwg.mxu0
        %v2441 = vadd.f32 %v2256, %v993
        %v2442 = vadd.f32 %v2282, %v994
        %v2443 = vadd.f32 %v2308, %v995
        %v2444 = vadd.f32 %v2334, %v996
        %v2445 = vmul.f32 %v2441, 0.5
        %v2446 = vtanh.pop %v2445
        %v2447 = vmul.f32 %v2446, 0.5
        %v2448 = vadd.f32 %v2447, 0.5
        %v2449 = vmul.f32 %v2442, 0.5
        %v2450 = vtanh.pop %v2449
        %v2451 = vmul.f32 %v2450, 0.5
        %v2452 = vadd.f32 %v2451, 0.5
        %v2453 = vtanh.pop %v2443
        %v2454 = vmul.f32 %v2444, 0.5
        %v2455 = vtanh.pop %v2454
        %v2456 = vmul.f32 %v2455, 0.5
        %v2457 = vadd.f32 %v2456, 0.5
        %v2458 = vmul.f32 %v2452, %v2191
        %v2459 = vmul.f32 %v2448, %v2453
        %v2460 = vadd.f32 %v2458, %v2459
        %v2461 = vtanh.pop %v2460
        %v2462 = vmul.f32 %v2457, %v2461
        %s2463 = scalar_lea.vmem %s338, 32 [#allocation3]
        %v2464 = vld [vmem:[%s2463] sm:$0xff]
        %2466 = vset.pattern.permute.xlu0 0
        %2467 = vperm.xlu0 %2466, %v2464
        %v2468 = vpop.permute.xlu0 %2467
        %v2470 = vmul.f32 %v2468, %v506
        %v2471 = vmul.f32 %v2468, %v507
        %v2472 = vmul.f32 %v2468, %v508
        %v2473 = vmul.f32 %v2468, %v509
        %v2474 = vadd.f32 %v2470, %v516
        %v2475 = vadd.f32 %v2471, %v517
        %v2476 = vadd.f32 %v2472, %v518
        %v2477 = vadd.f32 %v2473, %v519
        %v2478 = vadd.f32 %v2474, %v2360
        %v2479 = vadd.f32 %v2475, %v2386
        %v2480 = vadd.f32 %v2476, %v2412
        %v2481 = vadd.f32 %v2477, %v2438
        %v2482 = vmul.f32 %v2478, 0.5
        %v2483 = vtanh.pop %v2482
        %v2484 = vmul.f32 %v2483, 0.5
        %v2485 = vadd.f32 %v2484, 0.5
        %v2486 = vmul.f32 %v2479, 0.5
        %v2487 = vtanh.pop %v2486
        %v2488 = vmul.f32 %v2487, 0.5
        %v2489 = vadd.f32 %v2488, 0.5
        %v2490 = vtanh.pop %v2480
        %v2491 = vmul.f32 %v2481, 0.5
        %v2492 = vtanh.pop %v2491
        %v2493 = vmul.f32 %v2492, 0.5
        %v2494 = vadd.f32 %v2493, 0.5
        %v2495 = vmul.f32 %v2489, %v2228
        %v2496 = vmul.f32 %v2485, %v2490
        %v2497 = vadd.f32 %v2495, %v2496
        %v2498 = vtanh.pop %v2497
        %v2499 = vmul.f32 %v2494, %v2498
        %v2500 = vpack.c.bf16 %v2499, %v2499
        %v2501 = vpack.c.bf16 %v2462, %v2462
        %2502 = vmatpush.bf16.msra.mxu0 %v1495
        %2503 = vmatpush.bf16.msra.mxu0 %v1487
        %2504 = vmatpush.bf16.msra.mxu0 %v1479
        %2505 = vmatpush.bf16.msra.mxu0 %v1471
        %2506 = vmatpush.bf16.msra.mxu0 %v1463
        %2507 = vmatpush.bf16.msra.mxu0 %v1455
        %2508 = vmatpush.bf16.msra.mxu0 %v1447
        %2509 = vmatpush.bf16.msra.mxu0 %v1439
        %2510 = vmatmul.bf16.gmra.mxu0 %v2500
        %v2511 = vpop.f32.mrf.mxu0
        %v2512 = vadd.f32 0.0, %v2511
        %v2513 = vpop.f32.mrf.mxu0
        %2514 = vdwg.mxu0
        %2515 = vmatpush.bf16.msra.mxu0 %v1559
        %2516 = vmatpush.bf16.msra.mxu0 %v1551
        %2517 = vmatpush.bf16.msra.mxu0 %v1543
        %2518 = vmatpush.bf16.msra.mxu0 %v1535
        %2519 = vmatpush.bf16.msra.mxu0 %v1527
        %2520 = vmatpush.bf16.msra.mxu0 %v1519
        %2521 = vmatpush.bf16.msra.mxu0 %v1511
        %2522 = vmatpush.bf16.msra.mxu0 %v1503
        %2523 = vmatmul.bf16.gmra.mxu0 %v2501
        %v2524 = vpop.f32.mrf.mxu0
        %v2525 = vadd.f32 %v2512, %v2524
        %v2526 = vpop.f32.mrf.mxu0
        %2527 = vdwg.mxu0
        %2528 = vmatpush.bf16.msra.mxu0 %v1496
        %2529 = vmatpush.bf16.msra.mxu0 %v1488
        %2530 = vmatpush.bf16.msra.mxu0 %v1480
        %2531 = vmatpush.bf16.msra.mxu0 %v1472
        %2532 = vmatpush.bf16.msra.mxu0 %v1464
        %2533 = vmatpush.bf16.msra.mxu0 %v1456
        %2534 = vmatpush.bf16.msra.mxu0 %v1448
        %2535 = vmatpush.bf16.msra.mxu0 %v1440
        %2536 = vmatmul.bf16.gmra.mxu0 %v2500
        %v2537 = vpop.f32.mrf.mxu0
        %v2538 = vadd.f32 0.0, %v2537
        %v2539 = vpop.f32.mrf.mxu0
        %2540 = vdwg.mxu0
        %2541 = vmatpush.bf16.msra.mxu0 %v1560
        %2542 = vmatpush.bf16.msra.mxu0 %v1552
        %2543 = vmatpush.bf16.msra.mxu0 %v1544
        %2544 = vmatpush.bf16.msra.mxu0 %v1536
        %2545 = vmatpush.bf16.msra.mxu0 %v1528
        %2546 = vmatpush.bf16.msra.mxu0 %v1520
        %2547 = vmatpush.bf16.msra.mxu0 %v1512
        %2548 = vmatpush.bf16.msra.mxu0 %v1504
        %2549 = vmatmul.bf16.gmra.mxu0 %v2501
        %v2550 = vpop.f32.mrf.mxu0
        %v2551 = vadd.f32 %v2538, %v2550
        %v2552 = vpop.f32.mrf.mxu0
        %2553 = vdwg.mxu0
        %2554 = vmatpush.bf16.msra.mxu0 %v1497
        %2555 = vmatpush.bf16.msra.mxu0 %v1489
        %2556 = vmatpush.bf16.msra.mxu0 %v1481
        %2557 = vmatpush.bf16.msra.mxu0 %v1473
        %2558 = vmatpush.bf16.msra.mxu0 %v1465
        %2559 = vmatpush.bf16.msra.mxu0 %v1457
        %2560 = vmatpush.bf16.msra.mxu0 %v1449
        %2561 = vmatpush.bf16.msra.mxu0 %v1441
        %2562 = vmatmul.bf16.gmra.mxu0 %v2500
        %v2563 = vpop.f32.mrf.mxu0
        %v2564 = vadd.f32 0.0, %v2563
        %v2565 = vpop.f32.mrf.mxu0
        %2566 = vdwg.mxu0
        %2567 = vmatpush.bf16.msra.mxu0 %v1561
        %2568 = vmatpush.bf16.msra.mxu0 %v1553
        %2569 = vmatpush.bf16.msra.mxu0 %v1545
        %2570 = vmatpush.bf16.msra.mxu0 %v1537
        %2571 = vmatpush.bf16.msra.mxu0 %v1529
        %2572 = vmatpush.bf16.msra.mxu0 %v1521
        %2573 = vmatpush.bf16.msra.mxu0 %v1513
        %2574 = vmatpush.bf16.msra.mxu0 %v1505
        %2575 = vmatmul.bf16.gmra.mxu0 %v2501
        %v2576 = vpop.f32.mrf.mxu0
        %v2577 = vadd.f32 %v2564, %v2576
        %v2578 = vpop.f32.mrf.mxu0
        %2579 = vdwg.mxu0
        %2580 = vmatpush.bf16.msra.mxu0 %v1498
        %2581 = vmatpush.bf16.msra.mxu0 %v1490
        %2582 = vmatpush.bf16.msra.mxu0 %v1482
        %2583 = vmatpush.bf16.msra.mxu0 %v1474
        %2584 = vmatpush.bf16.msra.mxu0 %v1466
        %2585 = vmatpush.bf16.msra.mxu0 %v1458
        %2586 = vmatpush.bf16.msra.mxu0 %v1450
        %2587 = vmatpush.bf16.msra.mxu0 %v1442
        %2588 = vmatmul.bf16.gmra.mxu0 %v2500
        %v2589 = vpop.f32.mrf.mxu0
        %v2590 = vadd.f32 0.0, %v2589
        %v2591 = vpop.f32.mrf.mxu0
        %2592 = vdwg.mxu0
        %2593 = vmatpush.bf16.msra.mxu0 %v1562
        %2594 = vmatpush.bf16.msra.mxu0 %v1554
        %2595 = vmatpush.bf16.msra.mxu0 %v1546
        %2596 = vmatpush.bf16.msra.mxu0 %v1538
        %2597 = vmatpush.bf16.msra.mxu0 %v1530
        %2598 = vmatpush.bf16.msra.mxu0 %v1522
        %2599 = vmatpush.bf16.msra.mxu0 %v1514
        %2600 = vmatpush.bf16.msra.mxu0 %v1506
        %2601 = vmatmul.bf16.gmra.mxu0 %v2501
        %v2602 = vpop.f32.mrf.mxu0
        %v2603 = vadd.f32 %v2590, %v2602
        %v2604 = vpop.f32.mrf.mxu0
        %2605 = vdwg.mxu0
        %2606 = vmatpush.bf16.msra.mxu0 %v1499
        %2607 = vmatpush.bf16.msra.mxu0 %v1491
        %2608 = vmatpush.bf16.msra.mxu0 %v1483
        %2609 = vmatpush.bf16.msra.mxu0 %v1475
        %2610 = vmatpush.bf16.msra.mxu0 %v1467
        %2611 = vmatpush.bf16.msra.mxu0 %v1459
        %2612 = vmatpush.bf16.msra.mxu0 %v1451
        %2613 = vmatpush.bf16.msra.mxu0 %v1443
        %2614 = vmatmul.bf16.gmra.mxu0 %v2500
        %v2615 = vpop.f32.mrf.mxu0
        %v2616 = vadd.f32 0.0, %v2615
        %v2617 = vpop.f32.mrf.mxu0
        %2618 = vdwg.mxu0
        %2619 = vmatpush.bf16.msra.mxu0 %v1563
        %2620 = vmatpush.bf16.msra.mxu0 %v1555
        %2621 = vmatpush.bf16.msra.mxu0 %v1547
        %2622 = vmatpush.bf16.msra.mxu0 %v1539
        %2623 = vmatpush.bf16.msra.mxu0 %v1531
        %2624 = vmatpush.bf16.msra.mxu0 %v1523
        %2625 = vmatpush.bf16.msra.mxu0 %v1515
        %2626 = vmatpush.bf16.msra.mxu0 %v1507
        %2627 = vmatmul.bf16.gmra.mxu0 %v2501
        %v2628 = vpop.f32.mrf.mxu0
        %v2629 = vadd.f32 %v2616, %v2628
        %v2630 = vpop.f32.mrf.mxu0
        %2631 = vdwg.mxu0
        %2632 = vmatpush.bf16.msra.mxu0 %v1500
        %2633 = vmatpush.bf16.msra.mxu0 %v1492
        %2634 = vmatpush.bf16.msra.mxu0 %v1484
        %2635 = vmatpush.bf16.msra.mxu0 %v1476
        %2636 = vmatpush.bf16.msra.mxu0 %v1468
        %2637 = vmatpush.bf16.msra.mxu0 %v1460
        %2638 = vmatpush.bf16.msra.mxu0 %v1452
        %2639 = vmatpush.bf16.msra.mxu0 %v1444
        %2640 = vmatmul.bf16.gmra.mxu0 %v2500
        %v2641 = vpop.f32.mrf.mxu0
        %v2642 = vadd.f32 0.0, %v2641
        %v2643 = vpop.f32.mrf.mxu0
        %2644 = vdwg.mxu0
        %2645 = vmatpush.bf16.msra.mxu0 %v1564
        %2646 = vmatpush.bf16.msra.mxu0 %v1556
        %2647 = vmatpush.bf16.msra.mxu0 %v1548
        %2648 = vmatpush.bf16.msra.mxu0 %v1540
        %2649 = vmatpush.bf16.msra.mxu0 %v1532
        %2650 = vmatpush.bf16.msra.mxu0 %v1524
        %2651 = vmatpush.bf16.msra.mxu0 %v1516
        %2652 = vmatpush.bf16.msra.mxu0 %v1508
        %2653 = vmatmul.bf16.gmra.mxu0 %v2501
        %v2654 = vpop.f32.mrf.mxu0
        %v2655 = vadd.f32 %v2642, %v2654
        %v2656 = vpop.f32.mrf.mxu0
        %2657 = vdwg.mxu0
        %2658 = vmatpush.bf16.msra.mxu0 %v1501
        %2659 = vmatpush.bf16.msra.mxu0 %v1493
        %2660 = vmatpush.bf16.msra.mxu0 %v1485
        %2661 = vmatpush.bf16.msra.mxu0 %v1477
        %2662 = vmatpush.bf16.msra.mxu0 %v1469
        %2663 = vmatpush.bf16.msra.mxu0 %v1461
        %2664 = vmatpush.bf16.msra.mxu0 %v1453
        %2665 = vmatpush.bf16.msra.mxu0 %v1445
        %2666 = vmatmul.bf16.gmra.mxu0 %v2500
        %v2667 = vpop.f32.mrf.mxu0
        %v2668 = vadd.f32 0.0, %v2667
        %v2669 = vpop.f32.mrf.mxu0
        %2670 = vdwg.mxu0
        %2671 = vmatpush.bf16.msra.mxu0 %v1565
        %2672 = vmatpush.bf16.msra.mxu0 %v1557
        %2673 = vmatpush.bf16.msra.mxu0 %v1549
        %2674 = vmatpush.bf16.msra.mxu0 %v1541
        %2675 = vmatpush.bf16.msra.mxu0 %v1533
        %2676 = vmatpush.bf16.msra.mxu0 %v1525
        %2677 = vmatpush.bf16.msra.mxu0 %v1517
        %2678 = vmatpush.bf16.msra.mxu0 %v1509
        %2679 = vmatmul.bf16.gmra.mxu0 %v2501
        %v2680 = vpop.f32.mrf.mxu0
        %v2681 = vadd.f32 %v2668, %v2680
        %v2682 = vpop.f32.mrf.mxu0
        %2683 = vdwg.mxu0
        %2684 = vmatpush.bf16.msra.mxu0 %v1502
        %2685 = vmatpush.bf16.msra.mxu0 %v1494
        %2686 = vmatpush.bf16.msra.mxu0 %v1486
        %2687 = vmatpush.bf16.msra.mxu0 %v1478
        %2688 = vmatpush.bf16.msra.mxu0 %v1470
        %2689 = vmatpush.bf16.msra.mxu0 %v1462
        %2690 = vmatpush.bf16.msra.mxu0 %v1454
        %2691 = vmatpush.bf16.msra.mxu0 %v1446
        %2692 = vmatmul.bf16.gmra.mxu0 %v2500
        %v2693 = vpop.f32.mrf.mxu0
        %v2694 = vadd.f32 0.0, %v2693
        %v2695 = vpop.f32.mrf.mxu0
        %2696 = vdwg.mxu0
        %2697 = vmatpush.bf16.msra.mxu0 %v1566
        %2698 = vmatpush.bf16.msra.mxu0 %v1558
        %2699 = vmatpush.bf16.msra.mxu0 %v1550
        %2700 = vmatpush.bf16.msra.mxu0 %v1542
        %2701 = vmatpush.bf16.msra.mxu0 %v1534
        %2702 = vmatpush.bf16.msra.mxu0 %v1526
        %2703 = vmatpush.bf16.msra.mxu0 %v1518
        %2704 = vmatpush.bf16.msra.mxu0 %v1510
        %2705 = vmatmul.bf16.gmra.mxu0 %v2501
        %v2706 = vpop.f32.mrf.mxu0
        %v2707 = vadd.f32 %v2694, %v2706
        %v2708 = vpop.f32.mrf.mxu0
        %2709 = vdwg.mxu0
        %v2710 = vadd.f32 %v2525, %v993
        %v2711 = vadd.f32 %v2551, %v994
        %v2712 = vadd.f32 %v2577, %v995
        %v2713 = vadd.f32 %v2603, %v996
        %v2714 = vmul.f32 %v2710, 0.5
        %v2715 = vtanh.pop %v2714
        %v2716 = vmul.f32 %v2715, 0.5
        %v2717 = vadd.f32 %v2716, 0.5
        %v2718 = vmul.f32 %v2711, 0.5
        %v2719 = vtanh.pop %v2718
        %v2720 = vmul.f32 %v2719, 0.5
        %v2721 = vadd.f32 %v2720, 0.5
        %v2722 = vtanh.pop %v2712
        %v2723 = vmul.f32 %v2713, 0.5
        %v2724 = vtanh.pop %v2723
        %v2725 = vmul.f32 %v2724, 0.5
        %v2726 = vadd.f32 %v2725, 0.5
        %v2727 = vmul.f32 %v2721, %v2460
        %v2728 = vmul.f32 %v2717, %v2722
        %v2729 = vadd.f32 %v2727, %v2728
        %v2730 = vtanh.pop %v2729
        %v2731 = vmul.f32 %v2726, %v2730
        %s2732 = scalar_lea.vmem %s338, 40 [#allocation3]
        %v2733 = vld [vmem:[%s2732] sm:$0xff]
        %2735 = vset.pattern.permute.xlu0 0
        %2736 = vperm.xlu0 %2735, %v2733
        %v2737 = vpop.permute.xlu0 %2736
        %v2739 = vmul.f32 %v2737, %v506
        %v2740 = vmul.f32 %v2737, %v507
        %v2741 = vmul.f32 %v2737, %v508
        %v2742 = vmul.f32 %v2737, %v509
        %v2743 = vadd.f32 %v2739, %v516
        %v2744 = vadd.f32 %v2740, %v517
        %v2745 = vadd.f32 %v2741, %v518
        %v2746 = vadd.f32 %v2742, %v519
        %v2747 = vadd.f32 %v2743, %v2629
        %v2748 = vadd.f32 %v2744, %v2655
        %v2749 = vadd.f32 %v2745, %v2681
        %v2750 = vadd.f32 %v2746, %v2707
        %v2751 = vmul.f32 %v2747, 0.5
        %v2752 = vtanh.pop %v2751
        %v2753 = vmul.f32 %v2752, 0.5
        %v2754 = vadd.f32 %v2753, 0.5
        %v2755 = vmul.f32 %v2748, 0.5
        %v2756 = vtanh.pop %v2755
        %v2757 = vmul.f32 %v2756, 0.5
        %v2758 = vadd.f32 %v2757, 0.5
        %v2759 = vtanh.pop %v2749
        %v2760 = vmul.f32 %v2750, 0.5
        %v2761 = vtanh.pop %v2760
        %v2762 = vmul.f32 %v2761, 0.5
        %v2763 = vadd.f32 %v2762, 0.5
        %v2764 = vmul.f32 %v2758, %v2497
        %v2765 = vmul.f32 %v2754, %v2759
        %v2766 = vadd.f32 %v2764, %v2765
        %v2767 = vtanh.pop %v2766
        %v2768 = vmul.f32 %v2763, %v2767
        %v2769 = vpack.c.bf16 %v2768, %v2768
        %v2770 = vpack.c.bf16 %v2731, %v2731
        %2771 = vmatpush.bf16.msra.mxu0 %v1495
        %2772 = vmatpush.bf16.msra.mxu0 %v1487
        %2773 = vmatpush.bf16.msra.mxu0 %v1479
        %2774 = vmatpush.bf16.msra.mxu0 %v1471
        %2775 = vmatpush.bf16.msra.mxu0 %v1463
        %2776 = vmatpush.bf16.msra.mxu0 %v1455
        %2777 = vmatpush.bf16.msra.mxu0 %v1447
        %2778 = vmatpush.bf16.msra.mxu0 %v1439
        %2779 = vmatmul.bf16.gmra.mxu0 %v2769
        %v2780 = vpop.f32.mrf.mxu0
        %v2781 = vadd.f32 0.0, %v2780
        %v2782 = vpop.f32.mrf.mxu0
        %2783 = vdwg.mxu0
        %2784 = vmatpush.bf16.msra.mxu0 %v1559
        %2785 = vmatpush.bf16.msra.mxu0 %v1551
        %2786 = vmatpush.bf16.msra.mxu0 %v1543
        %2787 = vmatpush.bf16.msra.mxu0 %v1535
        %2788 = vmatpush.bf16.msra.mxu0 %v1527
        %2789 = vmatpush.bf16.msra.mxu0 %v1519
        %2790 = vmatpush.bf16.msra.mxu0 %v1511
        %2791 = vmatpush.bf16.msra.mxu0 %v1503
        %2792 = vmatmul.bf16.gmra.mxu0 %v2770
        %v2793 = vpop.f32.mrf.mxu0
        %v2794 = vadd.f32 %v2781, %v2793
        %v2795 = vpop.f32.mrf.mxu0
        %2796 = vdwg.mxu0
        %2797 = vmatpush.bf16.msra.mxu0 %v1496
        %2798 = vmatpush.bf16.msra.mxu0 %v1488
        %2799 = vmatpush.bf16.msra.mxu0 %v1480
        %2800 = vmatpush.bf16.msra.mxu0 %v1472
        %2801 = vmatpush.bf16.msra.mxu0 %v1464
        %2802 = vmatpush.bf16.msra.mxu0 %v1456
        %2803 = vmatpush.bf16.msra.mxu0 %v1448
        %2804 = vmatpush.bf16.msra.mxu0 %v1440
        %2805 = vmatmul.bf16.gmra.mxu0 %v2769
        %v2806 = vpop.f32.mrf.mxu0
        %v2807 = vadd.f32 0.0, %v2806
        %v2808 = vpop.f32.mrf.mxu0
        %2809 = vdwg.mxu0
        %2810 = vmatpush.bf16.msra.mxu0 %v1560
        %2811 = vmatpush.bf16.msra.mxu0 %v1552
        %2812 = vmatpush.bf16.msra.mxu0 %v1544
        %2813 = vmatpush.bf16.msra.mxu0 %v1536
        %2814 = vmatpush.bf16.msra.mxu0 %v1528
        %2815 = vmatpush.bf16.msra.mxu0 %v1520
        %2816 = vmatpush.bf16.msra.mxu0 %v1512
        %2817 = vmatpush.bf16.msra.mxu0 %v1504
        %2818 = vmatmul.bf16.gmra.mxu0 %v2770
        %v2819 = vpop.f32.mrf.mxu0
        %v2820 = vadd.f32 %v2807, %v2819
        %v2821 = vpop.f32.mrf.mxu0
        %2822 = vdwg.mxu0
        %2823 = vmatpush.bf16.msra.mxu0 %v1497
        %2824 = vmatpush.bf16.msra.mxu0 %v1489
        %2825 = vmatpush.bf16.msra.mxu0 %v1481
        %2826 = vmatpush.bf16.msra.mxu0 %v1473
        %2827 = vmatpush.bf16.msra.mxu0 %v1465
        %2828 = vmatpush.bf16.msra.mxu0 %v1457
        %2829 = vmatpush.bf16.msra.mxu0 %v1449
        %2830 = vmatpush.bf16.msra.mxu0 %v1441
        %2831 = vmatmul.bf16.gmra.mxu0 %v2769
        %v2832 = vpop.f32.mrf.mxu0
        %v2833 = vadd.f32 0.0, %v2832
        %v2834 = vpop.f32.mrf.mxu0
        %2835 = vdwg.mxu0
        %2836 = vmatpush.bf16.msra.mxu0 %v1561
        %2837 = vmatpush.bf16.msra.mxu0 %v1553
        %2838 = vmatpush.bf16.msra.mxu0 %v1545
        %2839 = vmatpush.bf16.msra.mxu0 %v1537
        %2840 = vmatpush.bf16.msra.mxu0 %v1529
        %2841 = vmatpush.bf16.msra.mxu0 %v1521
        %2842 = vmatpush.bf16.msra.mxu0 %v1513
        %2843 = vmatpush.bf16.msra.mxu0 %v1505
        %2844 = vmatmul.bf16.gmra.mxu0 %v2770
        %v2845 = vpop.f32.mrf.mxu0
        %v2846 = vadd.f32 %v2833, %v2845
        %v2847 = vpop.f32.mrf.mxu0
        %2848 = vdwg.mxu0
        %2849 = vmatpush.bf16.msra.mxu0 %v1498
        %2850 = vmatpush.bf16.msra.mxu0 %v1490
        %2851 = vmatpush.bf16.msra.mxu0 %v1482
        %2852 = vmatpush.bf16.msra.mxu0 %v1474
        %2853 = vmatpush.bf16.msra.mxu0 %v1466
        %2854 = vmatpush.bf16.msra.mxu0 %v1458
        %2855 = vmatpush.bf16.msra.mxu0 %v1450
        %2856 = vmatpush.bf16.msra.mxu0 %v1442
        %2857 = vmatmul.bf16.gmra.mxu0 %v2769
        %v2858 = vpop.f32.mrf.mxu0
        %v2859 = vadd.f32 0.0, %v2858
        %v2860 = vpop.f32.mrf.mxu0
        %2861 = vdwg.mxu0
        %2862 = vmatpush.bf16.msra.mxu0 %v1562
        %2863 = vmatpush.bf16.msra.mxu0 %v1554
        %2864 = vmatpush.bf16.msra.mxu0 %v1546
        %2865 = vmatpush.bf16.msra.mxu0 %v1538
        %2866 = vmatpush.bf16.msra.mxu0 %v1530
        %2867 = vmatpush.bf16.msra.mxu0 %v1522
        %2868 = vmatpush.bf16.msra.mxu0 %v1514
        %2869 = vmatpush.bf16.msra.mxu0 %v1506
        %2870 = vmatmul.bf16.gmra.mxu0 %v2770
        %v2871 = vpop.f32.mrf.mxu0
        %v2872 = vadd.f32 %v2859, %v2871
        %v2873 = vpop.f32.mrf.mxu0
        %2874 = vdwg.mxu0
        %2875 = vmatpush.bf16.msra.mxu0 %v1499
        %2876 = vmatpush.bf16.msra.mxu0 %v1491
        %2877 = vmatpush.bf16.msra.mxu0 %v1483
        %2878 = vmatpush.bf16.msra.mxu0 %v1475
        %2879 = vmatpush.bf16.msra.mxu0 %v1467
        %2880 = vmatpush.bf16.msra.mxu0 %v1459
        %2881 = vmatpush.bf16.msra.mxu0 %v1451
        %2882 = vmatpush.bf16.msra.mxu0 %v1443
        %2883 = vmatmul.bf16.gmra.mxu0 %v2769
        %v2884 = vpop.f32.mrf.mxu0
        %v2885 = vadd.f32 0.0, %v2884
        %v2886 = vpop.f32.mrf.mxu0
        %2887 = vdwg.mxu0
        %2888 = vmatpush.bf16.msra.mxu0 %v1563
        %2889 = vmatpush.bf16.msra.mxu0 %v1555
        %2890 = vmatpush.bf16.msra.mxu0 %v1547
        %2891 = vmatpush.bf16.msra.mxu0 %v1539
        %2892 = vmatpush.bf16.msra.mxu0 %v1531
        %2893 = vmatpush.bf16.msra.mxu0 %v1523
        %2894 = vmatpush.bf16.msra.mxu0 %v1515
        %2895 = vmatpush.bf16.msra.mxu0 %v1507
        %2896 = vmatmul.bf16.gmra.mxu0 %v2770
        %v2897 = vpop.f32.mrf.mxu0
        %v2898 = vadd.f32 %v2885, %v2897
        %v2899 = vpop.f32.mrf.mxu0
        %2900 = vdwg.mxu0
        %2901 = vmatpush.bf16.msra.mxu0 %v1500
        %2902 = vmatpush.bf16.msra.mxu0 %v1492
        %2903 = vmatpush.bf16.msra.mxu0 %v1484
        %2904 = vmatpush.bf16.msra.mxu0 %v1476
        %2905 = vmatpush.bf16.msra.mxu0 %v1468
        %2906 = vmatpush.bf16.msra.mxu0 %v1460
        %2907 = vmatpush.bf16.msra.mxu0 %v1452
        %2908 = vmatpush.bf16.msra.mxu0 %v1444
        %2909 = vmatmul.bf16.gmra.mxu0 %v2769
        %v2910 = vpop.f32.mrf.mxu0
        %v2911 = vadd.f32 0.0, %v2910
        %v2912 = vpop.f32.mrf.mxu0
        %2913 = vdwg.mxu0
        %2914 = vmatpush.bf16.msra.mxu0 %v1564
        %2915 = vmatpush.bf16.msra.mxu0 %v1556
        %2916 = vmatpush.bf16.msra.mxu0 %v1548
        %2917 = vmatpush.bf16.msra.mxu0 %v1540
        %2918 = vmatpush.bf16.msra.mxu0 %v1532
        %2919 = vmatpush.bf16.msra.mxu0 %v1524
        %2920 = vmatpush.bf16.msra.mxu0 %v1516
        %2921 = vmatpush.bf16.msra.mxu0 %v1508
        %2922 = vmatmul.bf16.gmra.mxu0 %v2770
        %v2923 = vpop.f32.mrf.mxu0
        %v2924 = vadd.f32 %v2911, %v2923
        %v2925 = vpop.f32.mrf.mxu0
        %2926 = vdwg.mxu0
        %2927 = vmatpush.bf16.msra.mxu0 %v1501
        %2928 = vmatpush.bf16.msra.mxu0 %v1493
        %2929 = vmatpush.bf16.msra.mxu0 %v1485
        %2930 = vmatpush.bf16.msra.mxu0 %v1477
        %2931 = vmatpush.bf16.msra.mxu0 %v1469
        %2932 = vmatpush.bf16.msra.mxu0 %v1461
        %2933 = vmatpush.bf16.msra.mxu0 %v1453
        %2934 = vmatpush.bf16.msra.mxu0 %v1445
        %2935 = vmatmul.bf16.gmra.mxu0 %v2769
        %v2936 = vpop.f32.mrf.mxu0
        %v2937 = vadd.f32 0.0, %v2936
        %v2938 = vpop.f32.mrf.mxu0
        %2939 = vdwg.mxu0
        %2940 = vmatpush.bf16.msra.mxu0 %v1565
        %2941 = vmatpush.bf16.msra.mxu0 %v1557
        %2942 = vmatpush.bf16.msra.mxu0 %v1549
        %2943 = vmatpush.bf16.msra.mxu0 %v1541
        %2944 = vmatpush.bf16.msra.mxu0 %v1533
        %2945 = vmatpush.bf16.msra.mxu0 %v1525
        %2946 = vmatpush.bf16.msra.mxu0 %v1517
        %2947 = vmatpush.bf16.msra.mxu0 %v1509
        %2948 = vmatmul.bf16.gmra.mxu0 %v2770
        %v2949 = vpop.f32.mrf.mxu0
        %v2950 = vadd.f32 %v2937, %v2949
        %v2951 = vpop.f32.mrf.mxu0
        %2952 = vdwg.mxu0
        %2953 = vmatpush.bf16.msra.mxu0 %v1502
        %2954 = vmatpush.bf16.msra.mxu0 %v1494
        %2955 = vmatpush.bf16.msra.mxu0 %v1486
        %2956 = vmatpush.bf16.msra.mxu0 %v1478
        %2957 = vmatpush.bf16.msra.mxu0 %v1470
        %2958 = vmatpush.bf16.msra.mxu0 %v1462
        %2959 = vmatpush.bf16.msra.mxu0 %v1454
        %2960 = vmatpush.bf16.msra.mxu0 %v1446
        %2961 = vmatmul.bf16.gmra.mxu0 %v2769
        %v2962 = vpop.f32.mrf.mxu0
        %v2963 = vadd.f32 0.0, %v2962
        %v2964 = vpop.f32.mrf.mxu0
        %2965 = vdwg.mxu0
        %2966 = vmatpush.bf16.msra.mxu0 %v1566
        %2967 = vmatpush.bf16.msra.mxu0 %v1558
        %2968 = vmatpush.bf16.msra.mxu0 %v1550
        %2969 = vmatpush.bf16.msra.mxu0 %v1542
        %2970 = vmatpush.bf16.msra.mxu0 %v1534
        %2971 = vmatpush.bf16.msra.mxu0 %v1526
        %2972 = vmatpush.bf16.msra.mxu0 %v1518
        %2973 = vmatpush.bf16.msra.mxu0 %v1510
        %2974 = vmatmul.bf16.gmra.mxu0 %v2770
        %v2975 = vpop.f32.mrf.mxu0
        %v2976 = vadd.f32 %v2963, %v2975
        %v2977 = vpop.f32.mrf.mxu0
        %2978 = vdwg.mxu0
        %v2979 = vadd.f32 %v2794, %v993
        %v2980 = vadd.f32 %v2820, %v994
        %v2981 = vadd.f32 %v2846, %v995
        %v2982 = vadd.f32 %v2872, %v996
        %v2983 = vmul.f32 %v2979, 0.5
        %v2984 = vtanh.pop %v2983
        %v2985 = vmul.f32 %v2984, 0.5
        %v2986 = vadd.f32 %v2985, 0.5
        %v2987 = vmul.f32 %v2980, 0.5
        %v2988 = vtanh.pop %v2987
        %v2989 = vmul.f32 %v2988, 0.5
        %v2990 = vadd.f32 %v2989, 0.5
        %v2991 = vtanh.pop %v2981
        %v2992 = vmul.f32 %v2982, 0.5
        %v2993 = vtanh.pop %v2992
        %v2994 = vmul.f32 %v2993, 0.5
        %v2995 = vadd.f32 %v2994, 0.5
        %v2996 = vmul.f32 %v2990, %v2729
        %v2997 = vmul.f32 %v2986, %v2991
        %v2998 = vadd.f32 %v2996, %v2997
        %v2999 = vtanh.pop %v2998
        %v3000 = vmul.f32 %v2995, %v2999
        %s3001 = scalar_lea.vmem %s338, 48 [#allocation3]
        %v3002 = vld [vmem:[%s3001] sm:$0xff]
        %3004 = vset.pattern.permute.xlu0 0
        %3005 = vperm.xlu0 %3004, %v3002
        %v3006 = vpop.permute.xlu0 %3005
        %v3008 = vmul.f32 %v3006, %v506
        %v3009 = vmul.f32 %v3006, %v507
        %v3010 = vmul.f32 %v3006, %v508
        %v3011 = vmul.f32 %v3006, %v509
        %v3012 = vadd.f32 %v3008, %v516
        %v3013 = vadd.f32 %v3009, %v517
        %v3014 = vadd.f32 %v3010, %v518
        %v3015 = vadd.f32 %v3011, %v519
        %v3016 = vadd.f32 %v3012, %v2898
        %v3017 = vadd.f32 %v3013, %v2924
        %v3018 = vadd.f32 %v3014, %v2950
        %v3019 = vadd.f32 %v3015, %v2976
        %v3020 = vmul.f32 %v3016, 0.5
        %v3021 = vtanh.pop %v3020
        %v3022 = vmul.f32 %v3021, 0.5
        %v3023 = vadd.f32 %v3022, 0.5
        %v3024 = vmul.f32 %v3017, 0.5
        %v3025 = vtanh.pop %v3024
        %v3026 = vmul.f32 %v3025, 0.5
        %v3027 = vadd.f32 %v3026, 0.5
        %v3028 = vtanh.pop %v3018
        %v3029 = vmul.f32 %v3019, 0.5
        %v3030 = vtanh.pop %v3029
        %v3031 = vmul.f32 %v3030, 0.5
        %v3032 = vadd.f32 %v3031, 0.5
        %v3033 = vmul.f32 %v3027, %v2766
        %v3034 = vmul.f32 %v3023, %v3028
        %v3035 = vadd.f32 %v3033, %v3034
        %v3036 = vtanh.pop %v3035
        %v3037 = vmul.f32 %v3032, %v3036
        %v3038 = vpack.c.bf16 %v3037, %v3037
        %v3039 = vpack.c.bf16 %v3000, %v3000
        %3040 = vmatpush.bf16.msra.mxu0 %v1495
        %3041 = vmatpush.bf16.msra.mxu0 %v1487
        %3042 = vmatpush.bf16.msra.mxu0 %v1479
        %3043 = vmatpush.bf16.msra.mxu0 %v1471
        %3044 = vmatpush.bf16.msra.mxu0 %v1463
        %3045 = vmatpush.bf16.msra.mxu0 %v1455
        %3046 = vmatpush.bf16.msra.mxu0 %v1447
        %3047 = vmatpush.bf16.msra.mxu0 %v1439
        %3048 = vmatmul.bf16.gmra.mxu0 %v3038
        %v3049 = vpop.f32.mrf.mxu0
        %v3050 = vadd.f32 0.0, %v3049
        %v3051 = vpop.f32.mrf.mxu0
        %3052 = vdwg.mxu0
        %3053 = vmatpush.bf16.msra.mxu0 %v1559
        %3054 = vmatpush.bf16.msra.mxu0 %v1551
        %3055 = vmatpush.bf16.msra.mxu0 %v1543
        %3056 = vmatpush.bf16.msra.mxu0 %v1535
        %3057 = vmatpush.bf16.msra.mxu0 %v1527
        %3058 = vmatpush.bf16.msra.mxu0 %v1519
        %3059 = vmatpush.bf16.msra.mxu0 %v1511
        %3060 = vmatpush.bf16.msra.mxu0 %v1503
        %3061 = vmatmul.bf16.gmra.mxu0 %v3039
        %v3062 = vpop.f32.mrf.mxu0
        %v3063 = vadd.f32 %v3050, %v3062
        %v3064 = vpop.f32.mrf.mxu0
        %3065 = vdwg.mxu0
        %3066 = vmatpush.bf16.msra.mxu0 %v1496
        %3067 = vmatpush.bf16.msra.mxu0 %v1488
        %3068 = vmatpush.bf16.msra.mxu0 %v1480
        %3069 = vmatpush.bf16.msra.mxu0 %v1472
        %3070 = vmatpush.bf16.msra.mxu0 %v1464
        %3071 = vmatpush.bf16.msra.mxu0 %v1456
        %3072 = vmatpush.bf16.msra.mxu0 %v1448
        %3073 = vmatpush.bf16.msra.mxu0 %v1440
        %3074 = vmatmul.bf16.gmra.mxu0 %v3038
        %v3075 = vpop.f32.mrf.mxu0
        %v3076 = vadd.f32 0.0, %v3075
        %v3077 = vpop.f32.mrf.mxu0
        %3078 = vdwg.mxu0
        %3079 = vmatpush.bf16.msra.mxu0 %v1560
        %3080 = vmatpush.bf16.msra.mxu0 %v1552
        %3081 = vmatpush.bf16.msra.mxu0 %v1544
        %3082 = vmatpush.bf16.msra.mxu0 %v1536
        %3083 = vmatpush.bf16.msra.mxu0 %v1528
        %3084 = vmatpush.bf16.msra.mxu0 %v1520
        %3085 = vmatpush.bf16.msra.mxu0 %v1512
        %3086 = vmatpush.bf16.msra.mxu0 %v1504
        %3087 = vmatmul.bf16.gmra.mxu0 %v3039
        %v3088 = vpop.f32.mrf.mxu0
        %v3089 = vadd.f32 %v3076, %v3088
        %v3090 = vpop.f32.mrf.mxu0
        %3091 = vdwg.mxu0
        %3092 = vmatpush.bf16.msra.mxu0 %v1497
        %3093 = vmatpush.bf16.msra.mxu0 %v1489
        %3094 = vmatpush.bf16.msra.mxu0 %v1481
        %3095 = vmatpush.bf16.msra.mxu0 %v1473
        %3096 = vmatpush.bf16.msra.mxu0 %v1465
        %3097 = vmatpush.bf16.msra.mxu0 %v1457
        %3098 = vmatpush.bf16.msra.mxu0 %v1449
        %3099 = vmatpush.bf16.msra.mxu0 %v1441
        %3100 = vmatmul.bf16.gmra.mxu0 %v3038
        %v3101 = vpop.f32.mrf.mxu0
        %v3102 = vadd.f32 0.0, %v3101
        %v3103 = vpop.f32.mrf.mxu0
        %3104 = vdwg.mxu0
        %3105 = vmatpush.bf16.msra.mxu0 %v1561
        %3106 = vmatpush.bf16.msra.mxu0 %v1553
        %3107 = vmatpush.bf16.msra.mxu0 %v1545
        %3108 = vmatpush.bf16.msra.mxu0 %v1537
        %3109 = vmatpush.bf16.msra.mxu0 %v1529
        %3110 = vmatpush.bf16.msra.mxu0 %v1521
        %3111 = vmatpush.bf16.msra.mxu0 %v1513
        %3112 = vmatpush.bf16.msra.mxu0 %v1505
        %3113 = vmatmul.bf16.gmra.mxu0 %v3039
        %v3114 = vpop.f32.mrf.mxu0
        %v3115 = vadd.f32 %v3102, %v3114
        %v3116 = vpop.f32.mrf.mxu0
        %3117 = vdwg.mxu0
        %3118 = vmatpush.bf16.msra.mxu0 %v1498
        %3119 = vmatpush.bf16.msra.mxu0 %v1490
        %3120 = vmatpush.bf16.msra.mxu0 %v1482
        %3121 = vmatpush.bf16.msra.mxu0 %v1474
        %3122 = vmatpush.bf16.msra.mxu0 %v1466
        %3123 = vmatpush.bf16.msra.mxu0 %v1458
        %3124 = vmatpush.bf16.msra.mxu0 %v1450
        %3125 = vmatpush.bf16.msra.mxu0 %v1442
        %3126 = vmatmul.bf16.gmra.mxu0 %v3038
        %v3127 = vpop.f32.mrf.mxu0
        %v3128 = vadd.f32 0.0, %v3127
        %v3129 = vpop.f32.mrf.mxu0
        %3130 = vdwg.mxu0
        %3131 = vmatpush.bf16.msra.mxu0 %v1562
        %3132 = vmatpush.bf16.msra.mxu0 %v1554
        %3133 = vmatpush.bf16.msra.mxu0 %v1546
        %3134 = vmatpush.bf16.msra.mxu0 %v1538
        %3135 = vmatpush.bf16.msra.mxu0 %v1530
        %3136 = vmatpush.bf16.msra.mxu0 %v1522
        %3137 = vmatpush.bf16.msra.mxu0 %v1514
        %3138 = vmatpush.bf16.msra.mxu0 %v1506
        %3139 = vmatmul.bf16.gmra.mxu0 %v3039
        %v3140 = vpop.f32.mrf.mxu0
        %v3141 = vadd.f32 %v3128, %v3140
        %v3142 = vpop.f32.mrf.mxu0
        %3143 = vdwg.mxu0
        %3144 = vmatpush.bf16.msra.mxu0 %v1499
        %3145 = vmatpush.bf16.msra.mxu0 %v1491
        %3146 = vmatpush.bf16.msra.mxu0 %v1483
        %3147 = vmatpush.bf16.msra.mxu0 %v1475
        %3148 = vmatpush.bf16.msra.mxu0 %v1467
        %3149 = vmatpush.bf16.msra.mxu0 %v1459
        %3150 = vmatpush.bf16.msra.mxu0 %v1451
        %3151 = vmatpush.bf16.msra.mxu0 %v1443
        %3152 = vmatmul.bf16.gmra.mxu0 %v3038
        %v3153 = vpop.f32.mrf.mxu0
        %v3154 = vadd.f32 0.0, %v3153
        %v3155 = vpop.f32.mrf.mxu0
        %3156 = vdwg.mxu0
        %3157 = vmatpush.bf16.msra.mxu0 %v1563
        %3158 = vmatpush.bf16.msra.mxu0 %v1555
        %3159 = vmatpush.bf16.msra.mxu0 %v1547
        %3160 = vmatpush.bf16.msra.mxu0 %v1539
        %3161 = vmatpush.bf16.msra.mxu0 %v1531
        %3162 = vmatpush.bf16.msra.mxu0 %v1523
        %3163 = vmatpush.bf16.msra.mxu0 %v1515
        %3164 = vmatpush.bf16.msra.mxu0 %v1507
        %3165 = vmatmul.bf16.gmra.mxu0 %v3039
        %v3166 = vpop.f32.mrf.mxu0
        %v3167 = vadd.f32 %v3154, %v3166
        %v3168 = vpop.f32.mrf.mxu0
        %3169 = vdwg.mxu0
        %3170 = vmatpush.bf16.msra.mxu0 %v1500
        %3171 = vmatpush.bf16.msra.mxu0 %v1492
        %3172 = vmatpush.bf16.msra.mxu0 %v1484
        %3173 = vmatpush.bf16.msra.mxu0 %v1476
        %3174 = vmatpush.bf16.msra.mxu0 %v1468
        %3175 = vmatpush.bf16.msra.mxu0 %v1460
        %3176 = vmatpush.bf16.msra.mxu0 %v1452
        %3177 = vmatpush.bf16.msra.mxu0 %v1444
        %3178 = vmatmul.bf16.gmra.mxu0 %v3038
        %v3179 = vpop.f32.mrf.mxu0
        %v3180 = vadd.f32 0.0, %v3179
        %v3181 = vpop.f32.mrf.mxu0
        %3182 = vdwg.mxu0
        %3183 = vmatpush.bf16.msra.mxu0 %v1564
        %3184 = vmatpush.bf16.msra.mxu0 %v1556
        %3185 = vmatpush.bf16.msra.mxu0 %v1548
        %3186 = vmatpush.bf16.msra.mxu0 %v1540
        %3187 = vmatpush.bf16.msra.mxu0 %v1532
        %3188 = vmatpush.bf16.msra.mxu0 %v1524
        %3189 = vmatpush.bf16.msra.mxu0 %v1516
        %3190 = vmatpush.bf16.msra.mxu0 %v1508
        %3191 = vmatmul.bf16.gmra.mxu0 %v3039
        %v3192 = vpop.f32.mrf.mxu0
        %v3193 = vadd.f32 %v3180, %v3192
        %v3194 = vpop.f32.mrf.mxu0
        %3195 = vdwg.mxu0
        %3196 = vmatpush.bf16.msra.mxu0 %v1501
        %3197 = vmatpush.bf16.msra.mxu0 %v1493
        %3198 = vmatpush.bf16.msra.mxu0 %v1485
        %3199 = vmatpush.bf16.msra.mxu0 %v1477
        %3200 = vmatpush.bf16.msra.mxu0 %v1469
        %3201 = vmatpush.bf16.msra.mxu0 %v1461
        %3202 = vmatpush.bf16.msra.mxu0 %v1453
        %3203 = vmatpush.bf16.msra.mxu0 %v1445
        %3204 = vmatmul.bf16.gmra.mxu0 %v3038
        %v3205 = vpop.f32.mrf.mxu0
        %v3206 = vadd.f32 0.0, %v3205
        %v3207 = vpop.f32.mrf.mxu0
        %3208 = vdwg.mxu0
        %3209 = vmatpush.bf16.msra.mxu0 %v1565
        %3210 = vmatpush.bf16.msra.mxu0 %v1557
        %3211 = vmatpush.bf16.msra.mxu0 %v1549
        %3212 = vmatpush.bf16.msra.mxu0 %v1541
        %3213 = vmatpush.bf16.msra.mxu0 %v1533
        %3214 = vmatpush.bf16.msra.mxu0 %v1525
        %3215 = vmatpush.bf16.msra.mxu0 %v1517
        %3216 = vmatpush.bf16.msra.mxu0 %v1509
        %3217 = vmatmul.bf16.gmra.mxu0 %v3039
        %v3218 = vpop.f32.mrf.mxu0
        %v3219 = vadd.f32 %v3206, %v3218
        %v3220 = vpop.f32.mrf.mxu0
        %3221 = vdwg.mxu0
        %3222 = vmatpush.bf16.msra.mxu0 %v1502
        %3223 = vmatpush.bf16.msra.mxu0 %v1494
        %3224 = vmatpush.bf16.msra.mxu0 %v1486
        %3225 = vmatpush.bf16.msra.mxu0 %v1478
        %3226 = vmatpush.bf16.msra.mxu0 %v1470
        %3227 = vmatpush.bf16.msra.mxu0 %v1462
        %3228 = vmatpush.bf16.msra.mxu0 %v1454
        %3229 = vmatpush.bf16.msra.mxu0 %v1446
        %3230 = vmatmul.bf16.gmra.mxu0 %v3038
        %v3231 = vpop.f32.mrf.mxu0
        %v3232 = vadd.f32 0.0, %v3231
        %v3233 = vpop.f32.mrf.mxu0
        %3234 = vdwg.mxu0
        %3235 = vmatpush.bf16.msra.mxu0 %v1566
        %3236 = vmatpush.bf16.msra.mxu0 %v1558
        %3237 = vmatpush.bf16.msra.mxu0 %v1550
        %3238 = vmatpush.bf16.msra.mxu0 %v1542
        %3239 = vmatpush.bf16.msra.mxu0 %v1534
        %3240 = vmatpush.bf16.msra.mxu0 %v1526
        %3241 = vmatpush.bf16.msra.mxu0 %v1518
        %3242 = vmatpush.bf16.msra.mxu0 %v1510
        %3243 = vmatmul.bf16.gmra.mxu0 %v3039
        %v3244 = vpop.f32.mrf.mxu0
        %v3245 = vadd.f32 %v3232, %v3244
        %v3246 = vpop.f32.mrf.mxu0
        %3247 = vdwg.mxu0
        %v3248 = vadd.f32 %v3063, %v993
        %v3249 = vadd.f32 %v3089, %v994
        %v3250 = vadd.f32 %v3115, %v995
        %v3251 = vadd.f32 %v3141, %v996
        %v3252 = vmul.f32 %v3248, 0.5
        %v3253 = vtanh.pop %v3252
        %v3254 = vmul.f32 %v3253, 0.5
        %v3255 = vadd.f32 %v3254, 0.5
        %v3256 = vmul.f32 %v3249, 0.5
        %v3257 = vtanh.pop %v3256
        %v3258 = vmul.f32 %v3257, 0.5
        %v3259 = vadd.f32 %v3258, 0.5
        %v3260 = vtanh.pop %v3250
        %v3261 = vmul.f32 %v3251, 0.5
        %v3262 = vtanh.pop %v3261
        %v3263 = vmul.f32 %v3262, 0.5
        %v3264 = vadd.f32 %v3263, 0.5
        %v3265 = vmul.f32 %v3259, %v2998
        %v3266 = vmul.f32 %v3255, %v3260
        %v3267 = vadd.f32 %v3265, %v3266
        %v3268 = vtanh.pop %v3267
        %v3269 = vmul.f32 %v3264, %v3268
        %s3270 = scalar_lea.vmem %s338, 56 [#allocation3]
        %v3271 = vld [vmem:[%s3270] sm:$0xff]
        %3273 = vset.pattern.permute.xlu0 0
        %3274 = vperm.xlu0 %3273, %v3271
        %v3275 = vpop.permute.xlu0 %3274
        %v3277 = vmul.f32 %v3275, %v506
        %v3278 = vmul.f32 %v3275, %v507
        %v3279 = vmul.f32 %v3275, %v508
        %v3280 = vmul.f32 %v3275, %v509
        %v3281 = vadd.f32 %v3277, %v516
        %v3282 = vadd.f32 %v3278, %v517
        %v3283 = vadd.f32 %v3279, %v518
        %v3284 = vadd.f32 %v3280, %v519
        %v3285 = vadd.f32 %v3281, %v3167
        %v3286 = vadd.f32 %v3282, %v3193
        %v3287 = vadd.f32 %v3283, %v3219
        %v3288 = vadd.f32 %v3284, %v3245
        %v3289 = vmul.f32 %v3285, 0.5
        %v3290 = vtanh.pop %v3289
        %v3291 = vmul.f32 %v3290, 0.5
        %v3292 = vadd.f32 %v3291, 0.5
        %v3293 = vmul.f32 %v3286, 0.5
        %v3294 = vtanh.pop %v3293
        %v3295 = vmul.f32 %v3294, 0.5
        %v3296 = vadd.f32 %v3295, 0.5
        %v3297 = vtanh.pop %v3287
        %v3298 = vmul.f32 %v3288, 0.5
        %v3299 = vtanh.pop %v3298
        %v3300 = vmul.f32 %v3299, 0.5
        %v3301 = vadd.f32 %v3300, 0.5
        %v3302 = vmul.f32 %v3296, %v3035
        %v3303 = vmul.f32 %v3292, %v3297
        %v3304 = vadd.f32 %v3302, %v3303
        %v3305 = vtanh.pop %v3304
        %v3306 = vmul.f32 %v3301, %v3305
        %v3307 = vpack.c.bf16 %v3306, %v3306
        %v3308 = vpack.c.bf16 %v3269, %v3269
        %3309 = vmatpush.bf16.msra.mxu0 %v1495
        %3310 = vmatpush.bf16.msra.mxu0 %v1487
        %3311 = vmatpush.bf16.msra.mxu0 %v1479
        %3312 = vmatpush.bf16.msra.mxu0 %v1471
        %3313 = vmatpush.bf16.msra.mxu0 %v1463
        %3314 = vmatpush.bf16.msra.mxu0 %v1455
        %3315 = vmatpush.bf16.msra.mxu0 %v1447
        %3316 = vmatpush.bf16.msra.mxu0 %v1439
        %3317 = vmatmul.bf16.gmra.mxu0 %v3307
        %v3318 = vpop.f32.mrf.mxu0
        %v3319 = vadd.f32 0.0, %v3318
        %v3320 = vpop.f32.mrf.mxu0
        %3321 = vdwg.mxu0
        %3322 = vmatpush.bf16.msra.mxu0 %v1559
        %3323 = vmatpush.bf16.msra.mxu0 %v1551
        %3324 = vmatpush.bf16.msra.mxu0 %v1543
        %3325 = vmatpush.bf16.msra.mxu0 %v1535
        %3326 = vmatpush.bf16.msra.mxu0 %v1527
        %3327 = vmatpush.bf16.msra.mxu0 %v1519
        %3328 = vmatpush.bf16.msra.mxu0 %v1511
        %3329 = vmatpush.bf16.msra.mxu0 %v1503
        %3330 = vmatmul.bf16.gmra.mxu0 %v3308
        %v3331 = vpop.f32.mrf.mxu0
        %v3332 = vadd.f32 %v3319, %v3331
        %v3333 = vpop.f32.mrf.mxu0
        %3334 = vdwg.mxu0
        %3335 = vmatpush.bf16.msra.mxu0 %v1496
        %3336 = vmatpush.bf16.msra.mxu0 %v1488
        %3337 = vmatpush.bf16.msra.mxu0 %v1480
        %3338 = vmatpush.bf16.msra.mxu0 %v1472
        %3339 = vmatpush.bf16.msra.mxu0 %v1464
        %3340 = vmatpush.bf16.msra.mxu0 %v1456
        %3341 = vmatpush.bf16.msra.mxu0 %v1448
        %3342 = vmatpush.bf16.msra.mxu0 %v1440
        %3343 = vmatmul.bf16.gmra.mxu0 %v3307
        %v3344 = vpop.f32.mrf.mxu0
        %v3345 = vadd.f32 0.0, %v3344
        %v3346 = vpop.f32.mrf.mxu0
        %3347 = vdwg.mxu0
        %3348 = vmatpush.bf16.msra.mxu0 %v1560
        %3349 = vmatpush.bf16.msra.mxu0 %v1552
        %3350 = vmatpush.bf16.msra.mxu0 %v1544
        %3351 = vmatpush.bf16.msra.mxu0 %v1536
        %3352 = vmatpush.bf16.msra.mxu0 %v1528
        %3353 = vmatpush.bf16.msra.mxu0 %v1520
        %3354 = vmatpush.bf16.msra.mxu0 %v1512
        %3355 = vmatpush.bf16.msra.mxu0 %v1504
        %3356 = vmatmul.bf16.gmra.mxu0 %v3308
        %v3357 = vpop.f32.mrf.mxu0
        %v3358 = vadd.f32 %v3345, %v3357
        %v3359 = vpop.f32.mrf.mxu0
        %3360 = vdwg.mxu0
        %3361 = vmatpush.bf16.msra.mxu0 %v1497
        %3362 = vmatpush.bf16.msra.mxu0 %v1489
        %3363 = vmatpush.bf16.msra.mxu0 %v1481
        %3364 = vmatpush.bf16.msra.mxu0 %v1473
        %3365 = vmatpush.bf16.msra.mxu0 %v1465
        %3366 = vmatpush.bf16.msra.mxu0 %v1457
        %3367 = vmatpush.bf16.msra.mxu0 %v1449
        %3368 = vmatpush.bf16.msra.mxu0 %v1441
        %3369 = vmatmul.bf16.gmra.mxu0 %v3307
        %v3370 = vpop.f32.mrf.mxu0
        %v3371 = vadd.f32 0.0, %v3370
        %v3372 = vpop.f32.mrf.mxu0
        %3373 = vdwg.mxu0
        %3374 = vmatpush.bf16.msra.mxu0 %v1561
        %3375 = vmatpush.bf16.msra.mxu0 %v1553
        %3376 = vmatpush.bf16.msra.mxu0 %v1545
        %3377 = vmatpush.bf16.msra.mxu0 %v1537
        %3378 = vmatpush.bf16.msra.mxu0 %v1529
        %3379 = vmatpush.bf16.msra.mxu0 %v1521
        %3380 = vmatpush.bf16.msra.mxu0 %v1513
        %3381 = vmatpush.bf16.msra.mxu0 %v1505
        %3382 = vmatmul.bf16.gmra.mxu0 %v3308
        %v3383 = vpop.f32.mrf.mxu0
        %v3384 = vadd.f32 %v3371, %v3383
        %v3385 = vpop.f32.mrf.mxu0
        %3386 = vdwg.mxu0
        %3387 = vmatpush.bf16.msra.mxu0 %v1498
        %3388 = vmatpush.bf16.msra.mxu0 %v1490
        %3389 = vmatpush.bf16.msra.mxu0 %v1482
        %3390 = vmatpush.bf16.msra.mxu0 %v1474
        %3391 = vmatpush.bf16.msra.mxu0 %v1466
        %3392 = vmatpush.bf16.msra.mxu0 %v1458
        %3393 = vmatpush.bf16.msra.mxu0 %v1450
        %3394 = vmatpush.bf16.msra.mxu0 %v1442
        %3395 = vmatmul.bf16.gmra.mxu0 %v3307
        %v3396 = vpop.f32.mrf.mxu0
        %v3397 = vadd.f32 0.0, %v3396
        %v3398 = vpop.f32.mrf.mxu0
        %3399 = vdwg.mxu0
        %3400 = vmatpush.bf16.msra.mxu0 %v1562
        %3401 = vmatpush.bf16.msra.mxu0 %v1554
        %3402 = vmatpush.bf16.msra.mxu0 %v1546
        %3403 = vmatpush.bf16.msra.mxu0 %v1538
        %3404 = vmatpush.bf16.msra.mxu0 %v1530
        %3405 = vmatpush.bf16.msra.mxu0 %v1522
        %3406 = vmatpush.bf16.msra.mxu0 %v1514
        %3407 = vmatpush.bf16.msra.mxu0 %v1506
        %3408 = vmatmul.bf16.gmra.mxu0 %v3308
        %v3409 = vpop.f32.mrf.mxu0
        %v3410 = vadd.f32 %v3397, %v3409
        %v3411 = vpop.f32.mrf.mxu0
        %3412 = vdwg.mxu0
        %3413 = vmatpush.bf16.msra.mxu0 %v1499
        %3414 = vmatpush.bf16.msra.mxu0 %v1491
        %3415 = vmatpush.bf16.msra.mxu0 %v1483
        %3416 = vmatpush.bf16.msra.mxu0 %v1475
        %3417 = vmatpush.bf16.msra.mxu0 %v1467
        %3418 = vmatpush.bf16.msra.mxu0 %v1459
        %3419 = vmatpush.bf16.msra.mxu0 %v1451
        %3420 = vmatpush.bf16.msra.mxu0 %v1443
        %3421 = vmatmul.bf16.gmra.mxu0 %v3307
        %v3422 = vpop.f32.mrf.mxu0
        %v3423 = vadd.f32 0.0, %v3422
        %v3424 = vpop.f32.mrf.mxu0
        %3425 = vdwg.mxu0
        %3426 = vmatpush.bf16.msra.mxu0 %v1563
        %3427 = vmatpush.bf16.msra.mxu0 %v1555
        %3428 = vmatpush.bf16.msra.mxu0 %v1547
        %3429 = vmatpush.bf16.msra.mxu0 %v1539
        %3430 = vmatpush.bf16.msra.mxu0 %v1531
        %3431 = vmatpush.bf16.msra.mxu0 %v1523
        %3432 = vmatpush.bf16.msra.mxu0 %v1515
        %3433 = vmatpush.bf16.msra.mxu0 %v1507
        %3434 = vmatmul.bf16.gmra.mxu0 %v3308
        %v3435 = vpop.f32.mrf.mxu0
        %v3436 = vadd.f32 %v3423, %v3435
        %v3437 = vpop.f32.mrf.mxu0
        %3438 = vdwg.mxu0
        %3439 = vmatpush.bf16.msra.mxu0 %v1500
        %3440 = vmatpush.bf16.msra.mxu0 %v1492
        %3441 = vmatpush.bf16.msra.mxu0 %v1484
        %3442 = vmatpush.bf16.msra.mxu0 %v1476
        %3443 = vmatpush.bf16.msra.mxu0 %v1468
        %3444 = vmatpush.bf16.msra.mxu0 %v1460
        %3445 = vmatpush.bf16.msra.mxu0 %v1452
        %3446 = vmatpush.bf16.msra.mxu0 %v1444
        %3447 = vmatmul.bf16.gmra.mxu0 %v3307
        %v3448 = vpop.f32.mrf.mxu0
        %v3449 = vadd.f32 0.0, %v3448
        %v3450 = vpop.f32.mrf.mxu0
        %3451 = vdwg.mxu0
        %3452 = vmatpush.bf16.msra.mxu0 %v1564
        %3453 = vmatpush.bf16.msra.mxu0 %v1556
        %3454 = vmatpush.bf16.msra.mxu0 %v1548
        %3455 = vmatpush.bf16.msra.mxu0 %v1540
        %3456 = vmatpush.bf16.msra.mxu0 %v1532
        %3457 = vmatpush.bf16.msra.mxu0 %v1524
        %3458 = vmatpush.bf16.msra.mxu0 %v1516
        %3459 = vmatpush.bf16.msra.mxu0 %v1508
        %3460 = vmatmul.bf16.gmra.mxu0 %v3308
        %v3461 = vpop.f32.mrf.mxu0
        %v3462 = vadd.f32 %v3449, %v3461
        %v3463 = vpop.f32.mrf.mxu0
        %3464 = vdwg.mxu0
        %3465 = vmatpush.bf16.msra.mxu0 %v1501
        %3466 = vmatpush.bf16.msra.mxu0 %v1493
        %3467 = vmatpush.bf16.msra.mxu0 %v1485
        %3468 = vmatpush.bf16.msra.mxu0 %v1477
        %3469 = vmatpush.bf16.msra.mxu0 %v1469
        %3470 = vmatpush.bf16.msra.mxu0 %v1461
        %3471 = vmatpush.bf16.msra.mxu0 %v1453
        %3472 = vmatpush.bf16.msra.mxu0 %v1445
        %3473 = vmatmul.bf16.gmra.mxu0 %v3307
        %v3474 = vpop.f32.mrf.mxu0
        %v3475 = vadd.f32 0.0, %v3474
        %v3476 = vpop.f32.mrf.mxu0
        %3477 = vdwg.mxu0
        %3478 = vmatpush.bf16.msra.mxu0 %v1565
        %3479 = vmatpush.bf16.msra.mxu0 %v1557
        %3480 = vmatpush.bf16.msra.mxu0 %v1549
        %3481 = vmatpush.bf16.msra.mxu0 %v1541
        %3482 = vmatpush.bf16.msra.mxu0 %v1533
        %3483 = vmatpush.bf16.msra.mxu0 %v1525
        %3484 = vmatpush.bf16.msra.mxu0 %v1517
        %3485 = vmatpush.bf16.msra.mxu0 %v1509
        %3486 = vmatmul.bf16.gmra.mxu0 %v3308
        %v3487 = vpop.f32.mrf.mxu0
        %v3488 = vadd.f32 %v3475, %v3487
        %v3489 = vpop.f32.mrf.mxu0
        %3490 = vdwg.mxu0
        %3491 = vmatpush.bf16.msra.mxu0 %v1502
        %3492 = vmatpush.bf16.msra.mxu0 %v1494
        %3493 = vmatpush.bf16.msra.mxu0 %v1486
        %3494 = vmatpush.bf16.msra.mxu0 %v1478
        %3495 = vmatpush.bf16.msra.mxu0 %v1470
        %3496 = vmatpush.bf16.msra.mxu0 %v1462
        %3497 = vmatpush.bf16.msra.mxu0 %v1454
        %3498 = vmatpush.bf16.msra.mxu0 %v1446
        %3499 = vmatmul.bf16.gmra.mxu0 %v3307
        %v3500 = vpop.f32.mrf.mxu0
        %v3501 = vadd.f32 0.0, %v3500
        %v3502 = vpop.f32.mrf.mxu0
        %3503 = vdwg.mxu0
        %3504 = vmatpush.bf16.msra.mxu0 %v1566
        %3505 = vmatpush.bf16.msra.mxu0 %v1558
        %3506 = vmatpush.bf16.msra.mxu0 %v1550
        %3507 = vmatpush.bf16.msra.mxu0 %v1542
        %3508 = vmatpush.bf16.msra.mxu0 %v1534
        %3509 = vmatpush.bf16.msra.mxu0 %v1526
        %3510 = vmatpush.bf16.msra.mxu0 %v1518
        %3511 = vmatpush.bf16.msra.mxu0 %v1510
        %3512 = vmatmul.bf16.gmra.mxu0 %v3308
        %v3513 = vpop.f32.mrf.mxu0
        %v3514 = vadd.f32 %v3501, %v3513
        %v3515 = vpop.f32.mrf.mxu0
        %3516 = vdwg.mxu0
        %v3517 = vadd.f32 %v3332, %v993
        %v3518 = vadd.f32 %v3358, %v994
        %v3519 = vadd.f32 %v3384, %v995
        %v3520 = vadd.f32 %v3410, %v996
        %v3521 = vmul.f32 %v3517, 0.5
        %v3522 = vtanh.pop %v3521
        %v3523 = vmul.f32 %v3522, 0.5
        %v3524 = vadd.f32 %v3523, 0.5
        %v3525 = vmul.f32 %v3518, 0.5
        %v3526 = vtanh.pop %v3525
        %v3527 = vmul.f32 %v3526, 0.5
        %v3528 = vadd.f32 %v3527, 0.5
        %v3529 = vtanh.pop %v3519
        %v3530 = vmul.f32 %v3520, 0.5
        %v3531 = vtanh.pop %v3530
        %v3532 = vmul.f32 %v3531, 0.5
        %v3533 = vadd.f32 %v3532, 0.5
        %v3534 = vmul.f32 %v3528, %v3267
        %v3535 = vmul.f32 %v3524, %v3529
        %v3536 = vadd.f32 %v3534, %v3535
        %v3537 = vtanh.pop %v3536
        %v3538 = vmul.f32 %v3533, %v3537
        %s3539 = scalar_lea.vmem %s338, 64 [#allocation3]
        %v3540 = vld [vmem:[%s3539] sm:$0xff]
        %3542 = vset.pattern.permute.xlu0 0
        %3543 = vperm.xlu0 %3542, %v3540
        %v3544 = vpop.permute.xlu0 %3543
        %v3546 = vmul.f32 %v3544, %v506
        %v3547 = vmul.f32 %v3544, %v507
        %v3548 = vmul.f32 %v3544, %v508
        %v3549 = vmul.f32 %v3544, %v509
        %v3550 = vadd.f32 %v3546, %v516
        %v3551 = vadd.f32 %v3547, %v517
        %v3552 = vadd.f32 %v3548, %v518
        %v3553 = vadd.f32 %v3549, %v519
        %v3554 = vadd.f32 %v3550, %v3436
        %v3555 = vadd.f32 %v3551, %v3462
        %v3556 = vadd.f32 %v3552, %v3488
        %v3557 = vadd.f32 %v3553, %v3514
        %v3558 = vmul.f32 %v3554, 0.5
        %v3559 = vtanh.pop %v3558
        %v3560 = vmul.f32 %v3559, 0.5
        %v3561 = vadd.f32 %v3560, 0.5
        %v3562 = vmul.f32 %v3555, 0.5
        %v3563 = vtanh.pop %v3562
        %v3564 = vmul.f32 %v3563, 0.5
        %v3565 = vadd.f32 %v3564, 0.5
        %v3566 = vtanh.pop %v3556
        %v3567 = vmul.f32 %v3557, 0.5
        %v3568 = vtanh.pop %v3567
        %v3569 = vmul.f32 %v3568, 0.5
        %v3570 = vadd.f32 %v3569, 0.5
        %v3571 = vmul.f32 %v3565, %v3304
        %v3572 = vmul.f32 %v3561, %v3566
        %v3573 = vadd.f32 %v3571, %v3572
        %v3574 = vtanh.pop %v3573
        %v3575 = vmul.f32 %v3570, %v3574
        %v3576 = vpack.c.bf16 %v3575, %v3575
        %v3577 = vpack.c.bf16 %v3538, %v3538
        %3578 = vmatpush.bf16.msra.mxu0 %v1495
        %3579 = vmatpush.bf16.msra.mxu0 %v1487
        %3580 = vmatpush.bf16.msra.mxu0 %v1479
        %3581 = vmatpush.bf16.msra.mxu0 %v1471
        %3582 = vmatpush.bf16.msra.mxu0 %v1463
        %3583 = vmatpush.bf16.msra.mxu0 %v1455
        %3584 = vmatpush.bf16.msra.mxu0 %v1447
        %3585 = vmatpush.bf16.msra.mxu0 %v1439
        %3586 = vmatmul.bf16.gmra.mxu0 %v3576
        %v3587 = vpop.f32.mrf.mxu0
        %v3588 = vadd.f32 0.0, %v3587
        %v3589 = vpop.f32.mrf.mxu0
        %3590 = vdwg.mxu0
        %3591 = vmatpush.bf16.msra.mxu0 %v1559
        %3592 = vmatpush.bf16.msra.mxu0 %v1551
        %3593 = vmatpush.bf16.msra.mxu0 %v1543
        %3594 = vmatpush.bf16.msra.mxu0 %v1535
        %3595 = vmatpush.bf16.msra.mxu0 %v1527
        %3596 = vmatpush.bf16.msra.mxu0 %v1519
        %3597 = vmatpush.bf16.msra.mxu0 %v1511
        %3598 = vmatpush.bf16.msra.mxu0 %v1503
        %3599 = vmatmul.bf16.gmra.mxu0 %v3577
        %v3600 = vpop.f32.mrf.mxu0
        %v3601 = vadd.f32 %v3588, %v3600
        %v3602 = vpop.f32.mrf.mxu0
        %3603 = vdwg.mxu0
        %3604 = vmatpush.bf16.msra.mxu0 %v1496
        %3605 = vmatpush.bf16.msra.mxu0 %v1488
        %3606 = vmatpush.bf16.msra.mxu0 %v1480
        %3607 = vmatpush.bf16.msra.mxu0 %v1472
        %3608 = vmatpush.bf16.msra.mxu0 %v1464
        %3609 = vmatpush.bf16.msra.mxu0 %v1456
        %3610 = vmatpush.bf16.msra.mxu0 %v1448
        %3611 = vmatpush.bf16.msra.mxu0 %v1440
        %3612 = vmatmul.bf16.gmra.mxu0 %v3576
        %v3613 = vpop.f32.mrf.mxu0
        %v3614 = vadd.f32 0.0, %v3613
        %v3615 = vpop.f32.mrf.mxu0
        %3616 = vdwg.mxu0
        %3617 = vmatpush.bf16.msra.mxu0 %v1560
        %3618 = vmatpush.bf16.msra.mxu0 %v1552
        %3619 = vmatpush.bf16.msra.mxu0 %v1544
        %3620 = vmatpush.bf16.msra.mxu0 %v1536
        %3621 = vmatpush.bf16.msra.mxu0 %v1528
        %3622 = vmatpush.bf16.msra.mxu0 %v1520
        %3623 = vmatpush.bf16.msra.mxu0 %v1512
        %3624 = vmatpush.bf16.msra.mxu0 %v1504
        %3625 = vmatmul.bf16.gmra.mxu0 %v3577
        %v3626 = vpop.f32.mrf.mxu0
        %v3627 = vadd.f32 %v3614, %v3626
        %v3628 = vpop.f32.mrf.mxu0
        %3629 = vdwg.mxu0
        %3630 = vmatpush.bf16.msra.mxu0 %v1497
        %3631 = vmatpush.bf16.msra.mxu0 %v1489
        %3632 = vmatpush.bf16.msra.mxu0 %v1481
        %3633 = vmatpush.bf16.msra.mxu0 %v1473
        %3634 = vmatpush.bf16.msra.mxu0 %v1465
        %3635 = vmatpush.bf16.msra.mxu0 %v1457
        %3636 = vmatpush.bf16.msra.mxu0 %v1449
        %3637 = vmatpush.bf16.msra.mxu0 %v1441
        %3638 = vmatmul.bf16.gmra.mxu0 %v3576
        %v3639 = vpop.f32.mrf.mxu0
        %v3640 = vadd.f32 0.0, %v3639
        %v3641 = vpop.f32.mrf.mxu0
        %3642 = vdwg.mxu0
        %3643 = vmatpush.bf16.msra.mxu0 %v1561
        %3644 = vmatpush.bf16.msra.mxu0 %v1553
        %3645 = vmatpush.bf16.msra.mxu0 %v1545
        %3646 = vmatpush.bf16.msra.mxu0 %v1537
        %3647 = vmatpush.bf16.msra.mxu0 %v1529
        %3648 = vmatpush.bf16.msra.mxu0 %v1521
        %3649 = vmatpush.bf16.msra.mxu0 %v1513
        %3650 = vmatpush.bf16.msra.mxu0 %v1505
        %3651 = vmatmul.bf16.gmra.mxu0 %v3577
        %v3652 = vpop.f32.mrf.mxu0
        %v3653 = vadd.f32 %v3640, %v3652
        %v3654 = vpop.f32.mrf.mxu0
        %3655 = vdwg.mxu0
        %3656 = vmatpush.bf16.msra.mxu0 %v1498
        %3657 = vmatpush.bf16.msra.mxu0 %v1490
        %3658 = vmatpush.bf16.msra.mxu0 %v1482
        %3659 = vmatpush.bf16.msra.mxu0 %v1474
        %3660 = vmatpush.bf16.msra.mxu0 %v1466
        %3661 = vmatpush.bf16.msra.mxu0 %v1458
        %3662 = vmatpush.bf16.msra.mxu0 %v1450
        %3663 = vmatpush.bf16.msra.mxu0 %v1442
        %3664 = vmatmul.bf16.gmra.mxu0 %v3576
        %v3665 = vpop.f32.mrf.mxu0
        %v3666 = vadd.f32 0.0, %v3665
        %v3667 = vpop.f32.mrf.mxu0
        %3668 = vdwg.mxu0
        %3669 = vmatpush.bf16.msra.mxu0 %v1562
        %3670 = vmatpush.bf16.msra.mxu0 %v1554
        %3671 = vmatpush.bf16.msra.mxu0 %v1546
        %3672 = vmatpush.bf16.msra.mxu0 %v1538
        %3673 = vmatpush.bf16.msra.mxu0 %v1530
        %3674 = vmatpush.bf16.msra.mxu0 %v1522
        %3675 = vmatpush.bf16.msra.mxu0 %v1514
        %3676 = vmatpush.bf16.msra.mxu0 %v1506
        %3677 = vmatmul.bf16.gmra.mxu0 %v3577
        %v3678 = vpop.f32.mrf.mxu0
        %v3679 = vadd.f32 %v3666, %v3678
        %v3680 = vpop.f32.mrf.mxu0
        %3681 = vdwg.mxu0
        %3682 = vmatpush.bf16.msra.mxu0 %v1499
        %3683 = vmatpush.bf16.msra.mxu0 %v1491
        %3684 = vmatpush.bf16.msra.mxu0 %v1483
        %3685 = vmatpush.bf16.msra.mxu0 %v1475
        %3686 = vmatpush.bf16.msra.mxu0 %v1467
        %3687 = vmatpush.bf16.msra.mxu0 %v1459
        %3688 = vmatpush.bf16.msra.mxu0 %v1451
        %3689 = vmatpush.bf16.msra.mxu0 %v1443
        %3690 = vmatmul.bf16.gmra.mxu0 %v3576
        %v3691 = vpop.f32.mrf.mxu0
        %v3692 = vadd.f32 0.0, %v3691
        %v3693 = vpop.f32.mrf.mxu0
        %3694 = vdwg.mxu0
        %3695 = vmatpush.bf16.msra.mxu0 %v1563
        %3696 = vmatpush.bf16.msra.mxu0 %v1555
        %3697 = vmatpush.bf16.msra.mxu0 %v1547
        %3698 = vmatpush.bf16.msra.mxu0 %v1539
        %3699 = vmatpush.bf16.msra.mxu0 %v1531
        %3700 = vmatpush.bf16.msra.mxu0 %v1523
        %3701 = vmatpush.bf16.msra.mxu0 %v1515
        %3702 = vmatpush.bf16.msra.mxu0 %v1507
        %3703 = vmatmul.bf16.gmra.mxu0 %v3577
        %v3704 = vpop.f32.mrf.mxu0
        %v3705 = vadd.f32 %v3692, %v3704
        %v3706 = vpop.f32.mrf.mxu0
        %3707 = vdwg.mxu0
        %3708 = vmatpush.bf16.msra.mxu0 %v1500
        %3709 = vmatpush.bf16.msra.mxu0 %v1492
        %3710 = vmatpush.bf16.msra.mxu0 %v1484
        %3711 = vmatpush.bf16.msra.mxu0 %v1476
        %3712 = vmatpush.bf16.msra.mxu0 %v1468
        %3713 = vmatpush.bf16.msra.mxu0 %v1460
        %3714 = vmatpush.bf16.msra.mxu0 %v1452
        %3715 = vmatpush.bf16.msra.mxu0 %v1444
        %3716 = vmatmul.bf16.gmra.mxu0 %v3576
        %v3717 = vpop.f32.mrf.mxu0
        %v3718 = vadd.f32 0.0, %v3717
        %v3719 = vpop.f32.mrf.mxu0
        %3720 = vdwg.mxu0
        %3721 = vmatpush.bf16.msra.mxu0 %v1564
        %3722 = vmatpush.bf16.msra.mxu0 %v1556
        %3723 = vmatpush.bf16.msra.mxu0 %v1548
        %3724 = vmatpush.bf16.msra.mxu0 %v1540
        %3725 = vmatpush.bf16.msra.mxu0 %v1532
        %3726 = vmatpush.bf16.msra.mxu0 %v1524
        %3727 = vmatpush.bf16.msra.mxu0 %v1516
        %3728 = vmatpush.bf16.msra.mxu0 %v1508
        %3729 = vmatmul.bf16.gmra.mxu0 %v3577
        %v3730 = vpop.f32.mrf.mxu0
        %v3731 = vadd.f32 %v3718, %v3730
        %v3732 = vpop.f32.mrf.mxu0
        %3733 = vdwg.mxu0
        %3734 = vmatpush.bf16.msra.mxu0 %v1501
        %3735 = vmatpush.bf16.msra.mxu0 %v1493
        %3736 = vmatpush.bf16.msra.mxu0 %v1485
        %3737 = vmatpush.bf16.msra.mxu0 %v1477
        %3738 = vmatpush.bf16.msra.mxu0 %v1469
        %3739 = vmatpush.bf16.msra.mxu0 %v1461
        %3740 = vmatpush.bf16.msra.mxu0 %v1453
        %3741 = vmatpush.bf16.msra.mxu0 %v1445
        %3742 = vmatmul.bf16.gmra.mxu0 %v3576
        %v3743 = vpop.f32.mrf.mxu0
        %v3744 = vadd.f32 0.0, %v3743
        %v3745 = vpop.f32.mrf.mxu0
        %3746 = vdwg.mxu0
        %3747 = vmatpush.bf16.msra.mxu0 %v1565
        %3748 = vmatpush.bf16.msra.mxu0 %v1557
        %3749 = vmatpush.bf16.msra.mxu0 %v1549
        %3750 = vmatpush.bf16.msra.mxu0 %v1541
        %3751 = vmatpush.bf16.msra.mxu0 %v1533
        %3752 = vmatpush.bf16.msra.mxu0 %v1525
        %3753 = vmatpush.bf16.msra.mxu0 %v1517
        %3754 = vmatpush.bf16.msra.mxu0 %v1509
        %3755 = vmatmul.bf16.gmra.mxu0 %v3577
        %v3756 = vpop.f32.mrf.mxu0
        %v3757 = vadd.f32 %v3744, %v3756
        %v3758 = vpop.f32.mrf.mxu0
        %3759 = vdwg.mxu0
        %3760 = vmatpush.bf16.msra.mxu0 %v1502
        %3761 = vmatpush.bf16.msra.mxu0 %v1494
        %3762 = vmatpush.bf16.msra.mxu0 %v1486
        %3763 = vmatpush.bf16.msra.mxu0 %v1478
        %3764 = vmatpush.bf16.msra.mxu0 %v1470
        %3765 = vmatpush.bf16.msra.mxu0 %v1462
        %3766 = vmatpush.bf16.msra.mxu0 %v1454
        %3767 = vmatpush.bf16.msra.mxu0 %v1446
        %3768 = vmatmul.bf16.gmra.mxu0 %v3576
        %v3769 = vpop.f32.mrf.mxu0
        %v3770 = vadd.f32 0.0, %v3769
        %v3771 = vpop.f32.mrf.mxu0
        %3772 = vdwg.mxu0
        %3773 = vmatpush.bf16.msra.mxu0 %v1566
        %3774 = vmatpush.bf16.msra.mxu0 %v1558
        %3775 = vmatpush.bf16.msra.mxu0 %v1550
        %3776 = vmatpush.bf16.msra.mxu0 %v1542
        %3777 = vmatpush.bf16.msra.mxu0 %v1534
        %3778 = vmatpush.bf16.msra.mxu0 %v1526
        %3779 = vmatpush.bf16.msra.mxu0 %v1518
        %3780 = vmatpush.bf16.msra.mxu0 %v1510
        %3781 = vmatmul.bf16.gmra.mxu0 %v3577
        %v3782 = vpop.f32.mrf.mxu0
        %v3783 = vadd.f32 %v3770, %v3782
        %v3784 = vpop.f32.mrf.mxu0
        %3785 = vdwg.mxu0
        %v3786 = vadd.f32 %v3601, %v993
        %v3787 = vadd.f32 %v3627, %v994
        %v3788 = vadd.f32 %v3653, %v995
        %v3789 = vadd.f32 %v3679, %v996
        %v3790 = vmul.f32 %v3786, 0.5
        %v3791 = vtanh.pop %v3790
        %v3792 = vmul.f32 %v3791, 0.5
        %v3793 = vadd.f32 %v3792, 0.5
        %v3794 = vmul.f32 %v3787, 0.5
        %v3795 = vtanh.pop %v3794
        %v3796 = vmul.f32 %v3795, 0.5
        %v3797 = vadd.f32 %v3796, 0.5
        %v3798 = vtanh.pop %v3788
        %v3799 = vmul.f32 %v3789, 0.5
        %v3800 = vtanh.pop %v3799
        %v3801 = vmul.f32 %v3800, 0.5
        %v3802 = vadd.f32 %v3801, 0.5
        %v3803 = vmul.f32 %v3797, %v3536
        %v3804 = vmul.f32 %v3793, %v3798
        %v3805 = vadd.f32 %v3803, %v3804
        %v3806 = vtanh.pop %v3805
        %v3807 = vmul.f32 %v3802, %v3806
        %s3808 = scalar_lea.vmem %s338, 72 [#allocation3]
        %v3809 = vld [vmem:[%s3808] sm:$0xff]
        %3811 = vset.pattern.permute.xlu0 0
        %3812 = vperm.xlu0 %3811, %v3809
        %v3813 = vpop.permute.xlu0 %3812
        %v3815 = vmul.f32 %v3813, %v506
        %v3816 = vmul.f32 %v3813, %v507
        %v3817 = vmul.f32 %v3813, %v508
        %v3818 = vmul.f32 %v3813, %v509
        %v3819 = vadd.f32 %v3815, %v516
        %v3820 = vadd.f32 %v3816, %v517
        %v3821 = vadd.f32 %v3817, %v518
        %v3822 = vadd.f32 %v3818, %v519
        %v3823 = vadd.f32 %v3819, %v3705
        %v3824 = vadd.f32 %v3820, %v3731
        %v3825 = vadd.f32 %v3821, %v3757
        %v3826 = vadd.f32 %v3822, %v3783
        %v3827 = vmul.f32 %v3823, 0.5
        %v3828 = vtanh.pop %v3827
        %v3829 = vmul.f32 %v3828, 0.5
        %v3830 = vadd.f32 %v3829, 0.5
        %v3831 = vmul.f32 %v3824, 0.5
        %v3832 = vtanh.pop %v3831
        %v3833 = vmul.f32 %v3832, 0.5
        %v3834 = vadd.f32 %v3833, 0.5
        %v3835 = vtanh.pop %v3825
        %v3836 = vmul.f32 %v3826, 0.5
        %v3837 = vtanh.pop %v3836
        %v3838 = vmul.f32 %v3837, 0.5
        %v3839 = vadd.f32 %v3838, 0.5
        %v3840 = vmul.f32 %v3834, %v3573
        %v3841 = vmul.f32 %v3830, %v3835
        %v3842 = vadd.f32 %v3840, %v3841
        %v3843 = vtanh.pop %v3842
        %v3844 = vmul.f32 %v3839, %v3843
        %v3845 = vpack.c.bf16 %v3844, %v3844
        %v3846 = vpack.c.bf16 %v3807, %v3807
        %3847 = vmatpush.bf16.msra.mxu0 %v1495
        %3848 = vmatpush.bf16.msra.mxu0 %v1487
        %3849 = vmatpush.bf16.msra.mxu0 %v1479
        %3850 = vmatpush.bf16.msra.mxu0 %v1471
        %3851 = vmatpush.bf16.msra.mxu0 %v1463
        %3852 = vmatpush.bf16.msra.mxu0 %v1455
        %3853 = vmatpush.bf16.msra.mxu0 %v1447
        %3854 = vmatpush.bf16.msra.mxu0 %v1439
        %3855 = vmatmul.bf16.gmra.mxu0 %v3845
        %v3856 = vpop.f32.mrf.mxu0
        %v3857 = vadd.f32 0.0, %v3856
        %v3858 = vpop.f32.mrf.mxu0
        %3859 = vdwg.mxu0
        %3860 = vmatpush.bf16.msra.mxu0 %v1559
        %3861 = vmatpush.bf16.msra.mxu0 %v1551
        %3862 = vmatpush.bf16.msra.mxu0 %v1543
        %3863 = vmatpush.bf16.msra.mxu0 %v1535
        %3864 = vmatpush.bf16.msra.mxu0 %v1527
        %3865 = vmatpush.bf16.msra.mxu0 %v1519
        %3866 = vmatpush.bf16.msra.mxu0 %v1511
        %3867 = vmatpush.bf16.msra.mxu0 %v1503
        %3868 = vmatmul.bf16.gmra.mxu0 %v3846
        %v3869 = vpop.f32.mrf.mxu0
        %v3870 = vadd.f32 %v3857, %v3869
        %v3871 = vpop.f32.mrf.mxu0
        %3872 = vdwg.mxu0
        %3873 = vmatpush.bf16.msra.mxu0 %v1496
        %3874 = vmatpush.bf16.msra.mxu0 %v1488
        %3875 = vmatpush.bf16.msra.mxu0 %v1480
        %3876 = vmatpush.bf16.msra.mxu0 %v1472
        %3877 = vmatpush.bf16.msra.mxu0 %v1464
        %3878 = vmatpush.bf16.msra.mxu0 %v1456
        %3879 = vmatpush.bf16.msra.mxu0 %v1448
        %3880 = vmatpush.bf16.msra.mxu0 %v1440
        %3881 = vmatmul.bf16.gmra.mxu0 %v3845
        %v3882 = vpop.f32.mrf.mxu0
        %v3883 = vadd.f32 0.0, %v3882
        %v3884 = vpop.f32.mrf.mxu0
        %3885 = vdwg.mxu0
        %3886 = vmatpush.bf16.msra.mxu0 %v1560
        %3887 = vmatpush.bf16.msra.mxu0 %v1552
        %3888 = vmatpush.bf16.msra.mxu0 %v1544
        %3889 = vmatpush.bf16.msra.mxu0 %v1536
        %3890 = vmatpush.bf16.msra.mxu0 %v1528
        %3891 = vmatpush.bf16.msra.mxu0 %v1520
        %3892 = vmatpush.bf16.msra.mxu0 %v1512
        %3893 = vmatpush.bf16.msra.mxu0 %v1504
        %3894 = vmatmul.bf16.gmra.mxu0 %v3846
        %v3895 = vpop.f32.mrf.mxu0
        %v3896 = vadd.f32 %v3883, %v3895
        %v3897 = vpop.f32.mrf.mxu0
        %3898 = vdwg.mxu0
        %3899 = vmatpush.bf16.msra.mxu0 %v1497
        %3900 = vmatpush.bf16.msra.mxu0 %v1489
        %3901 = vmatpush.bf16.msra.mxu0 %v1481
        %3902 = vmatpush.bf16.msra.mxu0 %v1473
        %3903 = vmatpush.bf16.msra.mxu0 %v1465
        %3904 = vmatpush.bf16.msra.mxu0 %v1457
        %3905 = vmatpush.bf16.msra.mxu0 %v1449
        %3906 = vmatpush.bf16.msra.mxu0 %v1441
        %3907 = vmatmul.bf16.gmra.mxu0 %v3845
        %v3908 = vpop.f32.mrf.mxu0
        %v3909 = vadd.f32 0.0, %v3908
        %v3910 = vpop.f32.mrf.mxu0
        %3911 = vdwg.mxu0
        %3912 = vmatpush.bf16.msra.mxu0 %v1561
        %3913 = vmatpush.bf16.msra.mxu0 %v1553
        %3914 = vmatpush.bf16.msra.mxu0 %v1545
        %3915 = vmatpush.bf16.msra.mxu0 %v1537
        %3916 = vmatpush.bf16.msra.mxu0 %v1529
        %3917 = vmatpush.bf16.msra.mxu0 %v1521
        %3918 = vmatpush.bf16.msra.mxu0 %v1513
        %3919 = vmatpush.bf16.msra.mxu0 %v1505
        %3920 = vmatmul.bf16.gmra.mxu0 %v3846
        %v3921 = vpop.f32.mrf.mxu0
        %v3922 = vadd.f32 %v3909, %v3921
        %v3923 = vpop.f32.mrf.mxu0
        %3924 = vdwg.mxu0
        %3925 = vmatpush.bf16.msra.mxu0 %v1498
        %3926 = vmatpush.bf16.msra.mxu0 %v1490
        %3927 = vmatpush.bf16.msra.mxu0 %v1482
        %3928 = vmatpush.bf16.msra.mxu0 %v1474
        %3929 = vmatpush.bf16.msra.mxu0 %v1466
        %3930 = vmatpush.bf16.msra.mxu0 %v1458
        %3931 = vmatpush.bf16.msra.mxu0 %v1450
        %3932 = vmatpush.bf16.msra.mxu0 %v1442
        %3933 = vmatmul.bf16.gmra.mxu0 %v3845
        %v3934 = vpop.f32.mrf.mxu0
        %v3935 = vadd.f32 0.0, %v3934
        %v3936 = vpop.f32.mrf.mxu0
        %3937 = vdwg.mxu0
        %3938 = vmatpush.bf16.msra.mxu0 %v1562
        %3939 = vmatpush.bf16.msra.mxu0 %v1554
        %3940 = vmatpush.bf16.msra.mxu0 %v1546
        %3941 = vmatpush.bf16.msra.mxu0 %v1538
        %3942 = vmatpush.bf16.msra.mxu0 %v1530
        %3943 = vmatpush.bf16.msra.mxu0 %v1522
        %3944 = vmatpush.bf16.msra.mxu0 %v1514
        %3945 = vmatpush.bf16.msra.mxu0 %v1506
        %3946 = vmatmul.bf16.gmra.mxu0 %v3846
        %v3947 = vpop.f32.mrf.mxu0
        %v3948 = vadd.f32 %v3935, %v3947
        %v3949 = vpop.f32.mrf.mxu0
        %3950 = vdwg.mxu0
        %3951 = vmatpush.bf16.msra.mxu0 %v1499
        %3952 = vmatpush.bf16.msra.mxu0 %v1491
        %3953 = vmatpush.bf16.msra.mxu0 %v1483
        %3954 = vmatpush.bf16.msra.mxu0 %v1475
        %3955 = vmatpush.bf16.msra.mxu0 %v1467
        %3956 = vmatpush.bf16.msra.mxu0 %v1459
        %3957 = vmatpush.bf16.msra.mxu0 %v1451
        %3958 = vmatpush.bf16.msra.mxu0 %v1443
        %3959 = vmatmul.bf16.gmra.mxu0 %v3845
        %v3960 = vpop.f32.mrf.mxu0
        %v3961 = vadd.f32 0.0, %v3960
        %v3962 = vpop.f32.mrf.mxu0
        %3963 = vdwg.mxu0
        %3964 = vmatpush.bf16.msra.mxu0 %v1563
        %3965 = vmatpush.bf16.msra.mxu0 %v1555
        %3966 = vmatpush.bf16.msra.mxu0 %v1547
        %3967 = vmatpush.bf16.msra.mxu0 %v1539
        %3968 = vmatpush.bf16.msra.mxu0 %v1531
        %3969 = vmatpush.bf16.msra.mxu0 %v1523
        %3970 = vmatpush.bf16.msra.mxu0 %v1515
        %3971 = vmatpush.bf16.msra.mxu0 %v1507
        %3972 = vmatmul.bf16.gmra.mxu0 %v3846
        %v3973 = vpop.f32.mrf.mxu0
        %v3974 = vadd.f32 %v3961, %v3973
        %v3975 = vpop.f32.mrf.mxu0
        %3976 = vdwg.mxu0
        %3977 = vmatpush.bf16.msra.mxu0 %v1500
        %3978 = vmatpush.bf16.msra.mxu0 %v1492
        %3979 = vmatpush.bf16.msra.mxu0 %v1484
        %3980 = vmatpush.bf16.msra.mxu0 %v1476
        %3981 = vmatpush.bf16.msra.mxu0 %v1468
        %3982 = vmatpush.bf16.msra.mxu0 %v1460
        %3983 = vmatpush.bf16.msra.mxu0 %v1452
        %3984 = vmatpush.bf16.msra.mxu0 %v1444
        %3985 = vmatmul.bf16.gmra.mxu0 %v3845
        %v3986 = vpop.f32.mrf.mxu0
        %v3987 = vadd.f32 0.0, %v3986
        %v3988 = vpop.f32.mrf.mxu0
        %3989 = vdwg.mxu0
        %3990 = vmatpush.bf16.msra.mxu0 %v1564
        %3991 = vmatpush.bf16.msra.mxu0 %v1556
        %3992 = vmatpush.bf16.msra.mxu0 %v1548
        %3993 = vmatpush.bf16.msra.mxu0 %v1540
        %3994 = vmatpush.bf16.msra.mxu0 %v1532
        %3995 = vmatpush.bf16.msra.mxu0 %v1524
        %3996 = vmatpush.bf16.msra.mxu0 %v1516
        %3997 = vmatpush.bf16.msra.mxu0 %v1508
        %3998 = vmatmul.bf16.gmra.mxu0 %v3846
        %v3999 = vpop.f32.mrf.mxu0
        %v4000 = vadd.f32 %v3987, %v3999
        %v4001 = vpop.f32.mrf.mxu0
        %4002 = vdwg.mxu0
        %4003 = vmatpush.bf16.msra.mxu0 %v1501
        %4004 = vmatpush.bf16.msra.mxu0 %v1493
        %4005 = vmatpush.bf16.msra.mxu0 %v1485
        %4006 = vmatpush.bf16.msra.mxu0 %v1477
        %4007 = vmatpush.bf16.msra.mxu0 %v1469
        %4008 = vmatpush.bf16.msra.mxu0 %v1461
        %4009 = vmatpush.bf16.msra.mxu0 %v1453
        %4010 = vmatpush.bf16.msra.mxu0 %v1445
        %4011 = vmatmul.bf16.gmra.mxu0 %v3845
        %v4012 = vpop.f32.mrf.mxu0
        %v4013 = vadd.f32 0.0, %v4012
        %v4014 = vpop.f32.mrf.mxu0
        %4015 = vdwg.mxu0
        %4016 = vmatpush.bf16.msra.mxu0 %v1565
        %4017 = vmatpush.bf16.msra.mxu0 %v1557
        %4018 = vmatpush.bf16.msra.mxu0 %v1549
        %4019 = vmatpush.bf16.msra.mxu0 %v1541
        %4020 = vmatpush.bf16.msra.mxu0 %v1533
        %4021 = vmatpush.bf16.msra.mxu0 %v1525
        %4022 = vmatpush.bf16.msra.mxu0 %v1517
        %4023 = vmatpush.bf16.msra.mxu0 %v1509
        %4024 = vmatmul.bf16.gmra.mxu0 %v3846
        %v4025 = vpop.f32.mrf.mxu0
        %v4026 = vadd.f32 %v4013, %v4025
        %v4027 = vpop.f32.mrf.mxu0
        %4028 = vdwg.mxu0
        %4029 = vmatpush.bf16.msra.mxu0 %v1502
        %4030 = vmatpush.bf16.msra.mxu0 %v1494
        %4031 = vmatpush.bf16.msra.mxu0 %v1486
        %4032 = vmatpush.bf16.msra.mxu0 %v1478
        %4033 = vmatpush.bf16.msra.mxu0 %v1470
        %4034 = vmatpush.bf16.msra.mxu0 %v1462
        %4035 = vmatpush.bf16.msra.mxu0 %v1454
        %4036 = vmatpush.bf16.msra.mxu0 %v1446
        %4037 = vmatmul.bf16.gmra.mxu0 %v3845
        %v4038 = vpop.f32.mrf.mxu0
        %v4039 = vadd.f32 0.0, %v4038
        %v4040 = vpop.f32.mrf.mxu0
        %4041 = vdwg.mxu0
        %4042 = vmatpush.bf16.msra.mxu0 %v1566
        %4043 = vmatpush.bf16.msra.mxu0 %v1558
        %4044 = vmatpush.bf16.msra.mxu0 %v1550
        %4045 = vmatpush.bf16.msra.mxu0 %v1542
        %4046 = vmatpush.bf16.msra.mxu0 %v1534
        %4047 = vmatpush.bf16.msra.mxu0 %v1526
        %4048 = vmatpush.bf16.msra.mxu0 %v1518
        %4049 = vmatpush.bf16.msra.mxu0 %v1510
        %4050 = vmatmul.bf16.gmra.mxu0 %v3846
        %v4051 = vpop.f32.mrf.mxu0
        %v4052 = vadd.f32 %v4039, %v4051
        %v4053 = vpop.f32.mrf.mxu0
        %4054 = vdwg.mxu0
        %v4055 = vadd.f32 %v3870, %v993
        %v4056 = vadd.f32 %v3896, %v994
        %v4057 = vadd.f32 %v3922, %v995
        %v4058 = vadd.f32 %v3948, %v996
        %v4059 = vmul.f32 %v4055, 0.5
        %v4060 = vtanh.pop %v4059
        %v4061 = vmul.f32 %v4060, 0.5
        %v4062 = vadd.f32 %v4061, 0.5
        %v4063 = vmul.f32 %v4056, 0.5
        %v4064 = vtanh.pop %v4063
        %v4065 = vmul.f32 %v4064, 0.5
        %v4066 = vadd.f32 %v4065, 0.5
        %v4067 = vtanh.pop %v4057
        %v4068 = vmul.f32 %v4058, 0.5
        %v4069 = vtanh.pop %v4068
        %v4070 = vmul.f32 %v4069, 0.5
        %v4071 = vadd.f32 %v4070, 0.5
        %v4072 = vmul.f32 %v4066, %v3805
        %v4073 = vmul.f32 %v4062, %v4067
        %v4074 = vadd.f32 %v4072, %v4073
        %v4075 = vtanh.pop %v4074
        %v4076 = vmul.f32 %v4071, %v4075
        %s4077 = scalar_lea.vmem %s338, 80 [#allocation3]
        %v4078 = vld [vmem:[%s4077] sm:$0xff]
        %4080 = vset.pattern.permute.xlu0 0
        %4081 = vperm.xlu0 %4080, %v4078
        %v4082 = vpop.permute.xlu0 %4081
        %v4084 = vmul.f32 %v4082, %v506
        %v4085 = vmul.f32 %v4082, %v507
        %v4086 = vmul.f32 %v4082, %v508
        %v4087 = vmul.f32 %v4082, %v509
        %v4088 = vadd.f32 %v4084, %v516
        %v4089 = vadd.f32 %v4085, %v517
        %v4090 = vadd.f32 %v4086, %v518
        %v4091 = vadd.f32 %v4087, %v519
        %v4092 = vadd.f32 %v4088, %v3974
        %v4093 = vadd.f32 %v4089, %v4000
        %v4094 = vadd.f32 %v4090, %v4026
        %v4095 = vadd.f32 %v4091, %v4052
        %v4096 = vmul.f32 %v4092, 0.5
        %v4097 = vtanh.pop %v4096
        %v4098 = vmul.f32 %v4097, 0.5
        %v4099 = vadd.f32 %v4098, 0.5
        %v4100 = vmul.f32 %v4093, 0.5
        %v4101 = vtanh.pop %v4100
        %v4102 = vmul.f32 %v4101, 0.5
        %v4103 = vadd.f32 %v4102, 0.5
        %v4104 = vtanh.pop %v4094
        %v4105 = vmul.f32 %v4095, 0.5
        %v4106 = vtanh.pop %v4105
        %v4107 = vmul.f32 %v4106, 0.5
        %v4108 = vadd.f32 %v4107, 0.5
        %v4109 = vmul.f32 %v4103, %v3842
        %v4110 = vmul.f32 %v4099, %v4104
        %v4111 = vadd.f32 %v4109, %v4110
        %v4112 = vtanh.pop %v4111
        %v4113 = vmul.f32 %v4108, %v4112
        %v4114 = vpack.c.bf16 %v4113, %v4113
        %v4115 = vpack.c.bf16 %v4076, %v4076
        %4116 = vmatpush.bf16.msra.mxu0 %v1495
        %4117 = vmatpush.bf16.msra.mxu0 %v1487
        %4118 = vmatpush.bf16.msra.mxu0 %v1479
        %4119 = vmatpush.bf16.msra.mxu0 %v1471
        %4120 = vmatpush.bf16.msra.mxu0 %v1463
        %4121 = vmatpush.bf16.msra.mxu0 %v1455
        %4122 = vmatpush.bf16.msra.mxu0 %v1447
        %4123 = vmatpush.bf16.msra.mxu0 %v1439
        %4124 = vmatmul.bf16.gmra.mxu0 %v4114
        %v4125 = vpop.f32.mrf.mxu0
        %v4126 = vadd.f32 0.0, %v4125
        %v4127 = vpop.f32.mrf.mxu0
        %4128 = vdwg.mxu0
        %4129 = vmatpush.bf16.msra.mxu0 %v1559
        %4130 = vmatpush.bf16.msra.mxu0 %v1551
        %4131 = vmatpush.bf16.msra.mxu0 %v1543
        %4132 = vmatpush.bf16.msra.mxu0 %v1535
        %4133 = vmatpush.bf16.msra.mxu0 %v1527
        %4134 = vmatpush.bf16.msra.mxu0 %v1519
        %4135 = vmatpush.bf16.msra.mxu0 %v1511
        %4136 = vmatpush.bf16.msra.mxu0 %v1503
        %4137 = vmatmul.bf16.gmra.mxu0 %v4115
        %v4138 = vpop.f32.mrf.mxu0
        %v4139 = vadd.f32 %v4126, %v4138
        %v4140 = vpop.f32.mrf.mxu0
        %4141 = vdwg.mxu0
        %4142 = vmatpush.bf16.msra.mxu0 %v1496
        %4143 = vmatpush.bf16.msra.mxu0 %v1488
        %4144 = vmatpush.bf16.msra.mxu0 %v1480
        %4145 = vmatpush.bf16.msra.mxu0 %v1472
        %4146 = vmatpush.bf16.msra.mxu0 %v1464
        %4147 = vmatpush.bf16.msra.mxu0 %v1456
        %4148 = vmatpush.bf16.msra.mxu0 %v1448
        %4149 = vmatpush.bf16.msra.mxu0 %v1440
        %4150 = vmatmul.bf16.gmra.mxu0 %v4114
        %v4151 = vpop.f32.mrf.mxu0
        %v4152 = vadd.f32 0.0, %v4151
        %v4153 = vpop.f32.mrf.mxu0
        %4154 = vdwg.mxu0
        %4155 = vmatpush.bf16.msra.mxu0 %v1560
        %4156 = vmatpush.bf16.msra.mxu0 %v1552
        %4157 = vmatpush.bf16.msra.mxu0 %v1544
        %4158 = vmatpush.bf16.msra.mxu0 %v1536
        %4159 = vmatpush.bf16.msra.mxu0 %v1528
        %4160 = vmatpush.bf16.msra.mxu0 %v1520
        %4161 = vmatpush.bf16.msra.mxu0 %v1512
        %4162 = vmatpush.bf16.msra.mxu0 %v1504
        %4163 = vmatmul.bf16.gmra.mxu0 %v4115
        %v4164 = vpop.f32.mrf.mxu0
        %v4165 = vadd.f32 %v4152, %v4164
        %v4166 = vpop.f32.mrf.mxu0
        %4167 = vdwg.mxu0
        %4168 = vmatpush.bf16.msra.mxu0 %v1497
        %4169 = vmatpush.bf16.msra.mxu0 %v1489
        %4170 = vmatpush.bf16.msra.mxu0 %v1481
        %4171 = vmatpush.bf16.msra.mxu0 %v1473
        %4172 = vmatpush.bf16.msra.mxu0 %v1465
        %4173 = vmatpush.bf16.msra.mxu0 %v1457
        %4174 = vmatpush.bf16.msra.mxu0 %v1449
        %4175 = vmatpush.bf16.msra.mxu0 %v1441
        %4176 = vmatmul.bf16.gmra.mxu0 %v4114
        %v4177 = vpop.f32.mrf.mxu0
        %v4178 = vadd.f32 0.0, %v4177
        %v4179 = vpop.f32.mrf.mxu0
        %4180 = vdwg.mxu0
        %4181 = vmatpush.bf16.msra.mxu0 %v1561
        %4182 = vmatpush.bf16.msra.mxu0 %v1553
        %4183 = vmatpush.bf16.msra.mxu0 %v1545
        %4184 = vmatpush.bf16.msra.mxu0 %v1537
        %4185 = vmatpush.bf16.msra.mxu0 %v1529
        %4186 = vmatpush.bf16.msra.mxu0 %v1521
        %4187 = vmatpush.bf16.msra.mxu0 %v1513
        %4188 = vmatpush.bf16.msra.mxu0 %v1505
        %4189 = vmatmul.bf16.gmra.mxu0 %v4115
        %v4190 = vpop.f32.mrf.mxu0
        %v4191 = vadd.f32 %v4178, %v4190
        %v4192 = vpop.f32.mrf.mxu0
        %4193 = vdwg.mxu0
        %4194 = vmatpush.bf16.msra.mxu0 %v1498
        %4195 = vmatpush.bf16.msra.mxu0 %v1490
        %4196 = vmatpush.bf16.msra.mxu0 %v1482
        %4197 = vmatpush.bf16.msra.mxu0 %v1474
        %4198 = vmatpush.bf16.msra.mxu0 %v1466
        %4199 = vmatpush.bf16.msra.mxu0 %v1458
        %4200 = vmatpush.bf16.msra.mxu0 %v1450
        %4201 = vmatpush.bf16.msra.mxu0 %v1442
        %4202 = vmatmul.bf16.gmra.mxu0 %v4114
        %v4203 = vpop.f32.mrf.mxu0
        %v4204 = vadd.f32 0.0, %v4203
        %v4205 = vpop.f32.mrf.mxu0
        %4206 = vdwg.mxu0
        %4207 = vmatpush.bf16.msra.mxu0 %v1562
        %4208 = vmatpush.bf16.msra.mxu0 %v1554
        %4209 = vmatpush.bf16.msra.mxu0 %v1546
        %4210 = vmatpush.bf16.msra.mxu0 %v1538
        %4211 = vmatpush.bf16.msra.mxu0 %v1530
        %4212 = vmatpush.bf16.msra.mxu0 %v1522
        %4213 = vmatpush.bf16.msra.mxu0 %v1514
        %4214 = vmatpush.bf16.msra.mxu0 %v1506
        %4215 = vmatmul.bf16.gmra.mxu0 %v4115
        %v4216 = vpop.f32.mrf.mxu0
        %v4217 = vadd.f32 %v4204, %v4216
        %v4218 = vpop.f32.mrf.mxu0
        %4219 = vdwg.mxu0
        %4220 = vmatpush.bf16.msra.mxu0 %v1499
        %4221 = vmatpush.bf16.msra.mxu0 %v1491
        %4222 = vmatpush.bf16.msra.mxu0 %v1483
        %4223 = vmatpush.bf16.msra.mxu0 %v1475
        %4224 = vmatpush.bf16.msra.mxu0 %v1467
        %4225 = vmatpush.bf16.msra.mxu0 %v1459
        %4226 = vmatpush.bf16.msra.mxu0 %v1451
        %4227 = vmatpush.bf16.msra.mxu0 %v1443
        %4228 = vmatmul.bf16.gmra.mxu0 %v4114
        %v4229 = vpop.f32.mrf.mxu0
        %v4230 = vadd.f32 0.0, %v4229
        %v4231 = vpop.f32.mrf.mxu0
        %4232 = vdwg.mxu0
        %4233 = vmatpush.bf16.msra.mxu0 %v1563
        %4234 = vmatpush.bf16.msra.mxu0 %v1555
        %4235 = vmatpush.bf16.msra.mxu0 %v1547
        %4236 = vmatpush.bf16.msra.mxu0 %v1539
        %4237 = vmatpush.bf16.msra.mxu0 %v1531
        %4238 = vmatpush.bf16.msra.mxu0 %v1523
        %4239 = vmatpush.bf16.msra.mxu0 %v1515
        %4240 = vmatpush.bf16.msra.mxu0 %v1507
        %4241 = vmatmul.bf16.gmra.mxu0 %v4115
        %v4242 = vpop.f32.mrf.mxu0
        %v4243 = vadd.f32 %v4230, %v4242
        %v4244 = vpop.f32.mrf.mxu0
        %4245 = vdwg.mxu0
        %4246 = vmatpush.bf16.msra.mxu0 %v1500
        %4247 = vmatpush.bf16.msra.mxu0 %v1492
        %4248 = vmatpush.bf16.msra.mxu0 %v1484
        %4249 = vmatpush.bf16.msra.mxu0 %v1476
        %4250 = vmatpush.bf16.msra.mxu0 %v1468
        %4251 = vmatpush.bf16.msra.mxu0 %v1460
        %4252 = vmatpush.bf16.msra.mxu0 %v1452
        %4253 = vmatpush.bf16.msra.mxu0 %v1444
        %4254 = vmatmul.bf16.gmra.mxu0 %v4114
        %v4255 = vpop.f32.mrf.mxu0
        %v4256 = vadd.f32 0.0, %v4255
        %v4257 = vpop.f32.mrf.mxu0
        %4258 = vdwg.mxu0
        %4259 = vmatpush.bf16.msra.mxu0 %v1564
        %4260 = vmatpush.bf16.msra.mxu0 %v1556
        %4261 = vmatpush.bf16.msra.mxu0 %v1548
        %4262 = vmatpush.bf16.msra.mxu0 %v1540
        %4263 = vmatpush.bf16.msra.mxu0 %v1532
        %4264 = vmatpush.bf16.msra.mxu0 %v1524
        %4265 = vmatpush.bf16.msra.mxu0 %v1516
        %4266 = vmatpush.bf16.msra.mxu0 %v1508
        %4267 = vmatmul.bf16.gmra.mxu0 %v4115
        %v4268 = vpop.f32.mrf.mxu0
        %v4269 = vadd.f32 %v4256, %v4268
        %v4270 = vpop.f32.mrf.mxu0
        %4271 = vdwg.mxu0
        %4272 = vmatpush.bf16.msra.mxu0 %v1501
        %4273 = vmatpush.bf16.msra.mxu0 %v1493
        %4274 = vmatpush.bf16.msra.mxu0 %v1485
        %4275 = vmatpush.bf16.msra.mxu0 %v1477
        %4276 = vmatpush.bf16.msra.mxu0 %v1469
        %4277 = vmatpush.bf16.msra.mxu0 %v1461
        %4278 = vmatpush.bf16.msra.mxu0 %v1453
        %4279 = vmatpush.bf16.msra.mxu0 %v1445
        %4280 = vmatmul.bf16.gmra.mxu0 %v4114
        %v4281 = vpop.f32.mrf.mxu0
        %v4282 = vadd.f32 0.0, %v4281
        %v4283 = vpop.f32.mrf.mxu0
        %4284 = vdwg.mxu0
        %4285 = vmatpush.bf16.msra.mxu0 %v1565
        %4286 = vmatpush.bf16.msra.mxu0 %v1557
        %4287 = vmatpush.bf16.msra.mxu0 %v1549
        %4288 = vmatpush.bf16.msra.mxu0 %v1541
        %4289 = vmatpush.bf16.msra.mxu0 %v1533
        %4290 = vmatpush.bf16.msra.mxu0 %v1525
        %4291 = vmatpush.bf16.msra.mxu0 %v1517
        %4292 = vmatpush.bf16.msra.mxu0 %v1509
        %4293 = vmatmul.bf16.gmra.mxu0 %v4115
        %v4294 = vpop.f32.mrf.mxu0
        %v4295 = vadd.f32 %v4282, %v4294
        %v4296 = vpop.f32.mrf.mxu0
        %4297 = vdwg.mxu0
        %4298 = vmatpush.bf16.msra.mxu0 %v1502
        %4299 = vmatpush.bf16.msra.mxu0 %v1494
        %4300 = vmatpush.bf16.msra.mxu0 %v1486
        %4301 = vmatpush.bf16.msra.mxu0 %v1478
        %4302 = vmatpush.bf16.msra.mxu0 %v1470
        %4303 = vmatpush.bf16.msra.mxu0 %v1462
        %4304 = vmatpush.bf16.msra.mxu0 %v1454
        %4305 = vmatpush.bf16.msra.mxu0 %v1446
        %4306 = vmatmul.bf16.gmra.mxu0 %v4114
        %v4307 = vpop.f32.mrf.mxu0
        %v4308 = vadd.f32 0.0, %v4307
        %v4309 = vpop.f32.mrf.mxu0
        %4310 = vdwg.mxu0
        %4311 = vmatpush.bf16.msra.mxu0 %v1566
        %4312 = vmatpush.bf16.msra.mxu0 %v1558
        %4313 = vmatpush.bf16.msra.mxu0 %v1550
        %4314 = vmatpush.bf16.msra.mxu0 %v1542
        %4315 = vmatpush.bf16.msra.mxu0 %v1534
        %4316 = vmatpush.bf16.msra.mxu0 %v1526
        %4317 = vmatpush.bf16.msra.mxu0 %v1518
        %4318 = vmatpush.bf16.msra.mxu0 %v1510
        %4319 = vmatmul.bf16.gmra.mxu0 %v4115
        %v4320 = vpop.f32.mrf.mxu0
        %v4321 = vadd.f32 %v4308, %v4320
        %v4322 = vpop.f32.mrf.mxu0
        %4323 = vdwg.mxu0
        %v4324 = vadd.f32 %v4139, %v993
        %v4325 = vadd.f32 %v4165, %v994
        %v4326 = vadd.f32 %v4191, %v995
        %v4327 = vadd.f32 %v4217, %v996
        %v4328 = vmul.f32 %v4324, 0.5
        %v4329 = vtanh.pop %v4328
        %v4330 = vmul.f32 %v4329, 0.5
        %v4331 = vadd.f32 %v4330, 0.5
        %v4332 = vmul.f32 %v4325, 0.5
        %v4333 = vtanh.pop %v4332
        %v4334 = vmul.f32 %v4333, 0.5
        %v4335 = vadd.f32 %v4334, 0.5
        %v4336 = vtanh.pop %v4326
        %v4337 = vmul.f32 %v4327, 0.5
        %v4338 = vtanh.pop %v4337
        %v4339 = vmul.f32 %v4338, 0.5
        %v4340 = vadd.f32 %v4339, 0.5
        %v4341 = vmul.f32 %v4335, %v4074
        %v4342 = vmul.f32 %v4331, %v4336
        %v4343 = vadd.f32 %v4341, %v4342
        %v4344 = vtanh.pop %v4343
        %v4345 = vmul.f32 %v4340, %v4344
        %s4346 = scalar_lea.vmem %s338, 88 [#allocation3]
        %v4347 = vld [vmem:[%s4346] sm:$0xff]
        %4349 = vset.pattern.permute.xlu0 0
        %4350 = vperm.xlu0 %4349, %v4347
        %v4351 = vpop.permute.xlu0 %4350
        %v4353 = vmul.f32 %v4351, %v506
        %v4354 = vmul.f32 %v4351, %v507
        %v4355 = vmul.f32 %v4351, %v508
        %v4356 = vmul.f32 %v4351, %v509
        %v4357 = vadd.f32 %v4353, %v516
        %v4358 = vadd.f32 %v4354, %v517
        %v4359 = vadd.f32 %v4355, %v518
        %v4360 = vadd.f32 %v4356, %v519
        %v4361 = vadd.f32 %v4357, %v4243
        %v4362 = vadd.f32 %v4358, %v4269
        %v4363 = vadd.f32 %v4359, %v4295
        %v4364 = vadd.f32 %v4360, %v4321
        %v4365 = vmul.f32 %v4361, 0.5
        %v4366 = vtanh.pop %v4365
        %v4367 = vmul.f32 %v4366, 0.5
        %v4368 = vadd.f32 %v4367, 0.5
        %v4369 = vmul.f32 %v4362, 0.5
        %v4370 = vtanh.pop %v4369
        %v4371 = vmul.f32 %v4370, 0.5
        %v4372 = vadd.f32 %v4371, 0.5
        %v4373 = vtanh.pop %v4363
        %v4374 = vmul.f32 %v4364, 0.5
        %v4375 = vtanh.pop %v4374
        %v4376 = vmul.f32 %v4375, 0.5
        %v4377 = vadd.f32 %v4376, 0.5
        %v4378 = vmul.f32 %v4372, %v4111
        %v4379 = vmul.f32 %v4368, %v4373
        %v4380 = vadd.f32 %v4378, %v4379
        %v4381 = vtanh.pop %v4380
        %v4382 = vmul.f32 %v4377, %v4381
        %v4383 = vpack.c.bf16 %v4382, %v4382
        %v4384 = vpack.c.bf16 %v4345, %v4345
        %4385 = vmatpush.bf16.msra.mxu0 %v1495
        %4386 = vmatpush.bf16.msra.mxu0 %v1487
        %4387 = vmatpush.bf16.msra.mxu0 %v1479
        %4388 = vmatpush.bf16.msra.mxu0 %v1471
        %4389 = vmatpush.bf16.msra.mxu0 %v1463
        %4390 = vmatpush.bf16.msra.mxu0 %v1455
        %4391 = vmatpush.bf16.msra.mxu0 %v1447
        %4392 = vmatpush.bf16.msra.mxu0 %v1439
        %4393 = vmatmul.bf16.gmra.mxu0 %v4383
        %v4394 = vpop.f32.mrf.mxu0
        %v4395 = vadd.f32 0.0, %v4394
        %v4396 = vpop.f32.mrf.mxu0
        %4397 = vdwg.mxu0
        %4398 = vmatpush.bf16.msra.mxu0 %v1559
        %4399 = vmatpush.bf16.msra.mxu0 %v1551
        %4400 = vmatpush.bf16.msra.mxu0 %v1543
        %4401 = vmatpush.bf16.msra.mxu0 %v1535
        %4402 = vmatpush.bf16.msra.mxu0 %v1527
        %4403 = vmatpush.bf16.msra.mxu0 %v1519
        %4404 = vmatpush.bf16.msra.mxu0 %v1511
        %4405 = vmatpush.bf16.msra.mxu0 %v1503
        %4406 = vmatmul.bf16.gmra.mxu0 %v4384
        %v4407 = vpop.f32.mrf.mxu0
        %v4408 = vadd.f32 %v4395, %v4407
        %v4409 = vpop.f32.mrf.mxu0
        %4410 = vdwg.mxu0
        %4411 = vmatpush.bf16.msra.mxu0 %v1496
        %4412 = vmatpush.bf16.msra.mxu0 %v1488
        %4413 = vmatpush.bf16.msra.mxu0 %v1480
        %4414 = vmatpush.bf16.msra.mxu0 %v1472
        %4415 = vmatpush.bf16.msra.mxu0 %v1464
        %4416 = vmatpush.bf16.msra.mxu0 %v1456
        %4417 = vmatpush.bf16.msra.mxu0 %v1448
        %4418 = vmatpush.bf16.msra.mxu0 %v1440
        %4419 = vmatmul.bf16.gmra.mxu0 %v4383
        %v4420 = vpop.f32.mrf.mxu0
        %v4421 = vadd.f32 0.0, %v4420
        %v4422 = vpop.f32.mrf.mxu0
        %4423 = vdwg.mxu0
        %4424 = vmatpush.bf16.msra.mxu0 %v1560
        %4425 = vmatpush.bf16.msra.mxu0 %v1552
        %4426 = vmatpush.bf16.msra.mxu0 %v1544
        %4427 = vmatpush.bf16.msra.mxu0 %v1536
        %4428 = vmatpush.bf16.msra.mxu0 %v1528
        %4429 = vmatpush.bf16.msra.mxu0 %v1520
        %4430 = vmatpush.bf16.msra.mxu0 %v1512
        %4431 = vmatpush.bf16.msra.mxu0 %v1504
        %4432 = vmatmul.bf16.gmra.mxu0 %v4384
        %v4433 = vpop.f32.mrf.mxu0
        %v4434 = vadd.f32 %v4421, %v4433
        %v4435 = vpop.f32.mrf.mxu0
        %4436 = vdwg.mxu0
        %4437 = vmatpush.bf16.msra.mxu0 %v1497
        %4438 = vmatpush.bf16.msra.mxu0 %v1489
        %4439 = vmatpush.bf16.msra.mxu0 %v1481
        %4440 = vmatpush.bf16.msra.mxu0 %v1473
        %4441 = vmatpush.bf16.msra.mxu0 %v1465
        %4442 = vmatpush.bf16.msra.mxu0 %v1457
        %4443 = vmatpush.bf16.msra.mxu0 %v1449
        %4444 = vmatpush.bf16.msra.mxu0 %v1441
        %4445 = vmatmul.bf16.gmra.mxu0 %v4383
        %v4446 = vpop.f32.mrf.mxu0
        %v4447 = vadd.f32 0.0, %v4446
        %v4448 = vpop.f32.mrf.mxu0
        %4449 = vdwg.mxu0
        %4450 = vmatpush.bf16.msra.mxu0 %v1561
        %4451 = vmatpush.bf16.msra.mxu0 %v1553
        %4452 = vmatpush.bf16.msra.mxu0 %v1545
        %4453 = vmatpush.bf16.msra.mxu0 %v1537
        %4454 = vmatpush.bf16.msra.mxu0 %v1529
        %4455 = vmatpush.bf16.msra.mxu0 %v1521
        %4456 = vmatpush.bf16.msra.mxu0 %v1513
        %4457 = vmatpush.bf16.msra.mxu0 %v1505
        %4458 = vmatmul.bf16.gmra.mxu0 %v4384
        %v4459 = vpop.f32.mrf.mxu0
        %v4460 = vadd.f32 %v4447, %v4459
        %v4461 = vpop.f32.mrf.mxu0
        %4462 = vdwg.mxu0
        %4463 = vmatpush.bf16.msra.mxu0 %v1498
        %4464 = vmatpush.bf16.msra.mxu0 %v1490
        %4465 = vmatpush.bf16.msra.mxu0 %v1482
        %4466 = vmatpush.bf16.msra.mxu0 %v1474
        %4467 = vmatpush.bf16.msra.mxu0 %v1466
        %4468 = vmatpush.bf16.msra.mxu0 %v1458
        %4469 = vmatpush.bf16.msra.mxu0 %v1450
        %4470 = vmatpush.bf16.msra.mxu0 %v1442
        %4471 = vmatmul.bf16.gmra.mxu0 %v4383
        %v4472 = vpop.f32.mrf.mxu0
        %v4473 = vadd.f32 0.0, %v4472
        %v4474 = vpop.f32.mrf.mxu0
        %4475 = vdwg.mxu0
        %4476 = vmatpush.bf16.msra.mxu0 %v1562
        %4477 = vmatpush.bf16.msra.mxu0 %v1554
        %4478 = vmatpush.bf16.msra.mxu0 %v1546
        %4479 = vmatpush.bf16.msra.mxu0 %v1538
        %4480 = vmatpush.bf16.msra.mxu0 %v1530
        %4481 = vmatpush.bf16.msra.mxu0 %v1522
        %4482 = vmatpush.bf16.msra.mxu0 %v1514
        %4483 = vmatpush.bf16.msra.mxu0 %v1506
        %4484 = vmatmul.bf16.gmra.mxu0 %v4384
        %v4485 = vpop.f32.mrf.mxu0
        %v4486 = vadd.f32 %v4473, %v4485
        %v4487 = vpop.f32.mrf.mxu0
        %4488 = vdwg.mxu0
        %v4489 = vadd.f32 %v4408, %v993
        %v4490 = vadd.f32 %v4434, %v994
        %v4491 = vadd.f32 %v4460, %v995
        %v4492 = vadd.f32 %v4486, %v996
        %v4493 = vmul.f32 %v4489, 0.5
        %v4494 = vtanh.pop %v4493
        %v4495 = vmul.f32 %v4494, 0.5
        %v4496 = vadd.f32 %v4495, 0.5
        %v4497 = vmul.f32 %v4490, 0.5
        %v4498 = vtanh.pop %v4497
        %v4499 = vmul.f32 %v4498, 0.5
        %v4500 = vadd.f32 %v4499, 0.5
        %v4501 = vtanh.pop %v4491
        %v4502 = vmul.f32 %v4492, 0.5
        %v4503 = vtanh.pop %v4502
        %v4504 = vmul.f32 %v4503, 0.5
        %v4505 = vadd.f32 %v4504, 0.5
        %v4506 = vmul.f32 %v4500, %v4343
        %v4507 = vmul.f32 %v4496, %v4501
        %v4508 = vadd.f32 %v4506, %v4507
        %v4509 = vtanh.pop %v4508
        %v4510 = vmul.f32 %v4505, %v4509
        %v4511 = vld [vmem:[%s5] sm:$0x1]
        %v4513 = vperm.slane %v4511, 0
        %v4515 = vmul.f32 %v4510, %v4513
        %4516 = vadd.xlane.f32.xlu0 %v4515
        %v4517 = vpop.xlane.xlu0 %4516
        %v4518 = vld [vmem:[#allocation2] sm:$0x1]
        %v4520 = vperm.slane %v4518, 0
        %v4522 = vadd.f32 %v4517, %v4520
        %vm4523 = vcmask 7168
        %4524 = vst.msk [vmem:[%s374] sm:$0xff] %vm4523, %v4522
        %p4525 = scmp.lt.s32.totalorder %s21, 1
        %s4526 = scalar_select %p4525, %s21, 1
        %s4527 = smul.addr %s4526, 8
        %s4528 = scalar_lea.vmem %s7, %s4527
        // Predicated region
        $region91: #{tpu_custom_call.1} parent=81 // pred_check
          %p4529 = pneg %p191
        $region92: #{tpu_custom_call.1} parent=81 // pred_check_branch
          %4531 = sbr.rel (%p4529) target = $region94
        $region93: #{tpu_custom_call.1} parent=81 // pred_region
          _
        $region94: #{tpu_custom_call.1} parent=81 // pred_fallthru
          _
      $region82: #{tpu_custom_call.1} parent=5 // pred_fallthru
        _
      %p4532 = scmp.le.s32.totalorder 2, %s16
      // Predicated region
      $region95: #{tpu_custom_call.1} parent=5 // pred_check
        %p4533 = pneg %p4532
      $region96: #{tpu_custom_call.1} parent=5 // pred_check_branch
        %4535 = sbr.rel (%p4533) target = $region98
      $region97: #{tpu_custom_call.1} parent=5 // pred_region
        %s4536 = ssub.s32 %s16, 2
        // Predicated region
        $region99: #{tpu_custom_call.1} parent=97 // pred_check
          %p4537 = pneg %p197
        $region100: #{tpu_custom_call.1} parent=97 // pred_check_branch
          %4539 = sbr.rel (%p4537) target = $region102
        $region101: #{tpu_custom_call.1} parent=97 // pred_region
          %p4540 = scmp.lt.s32.totalorder %s22, 1
          %s4541 = scalar_select %p4540, %s22, 1
          %s4542 = smul.addr %s4541, 8
          %s4543 = scalar_lea.vmem %s7, %s4542
        $region102: #{tpu_custom_call.1} parent=97 // pred_fallthru
          _
      $region98: #{tpu_custom_call.1} parent=5 // pred_fallthru
        _
    $region6: #{tpu_custom_call.1} parent=1 // loop_footer
      %s20 = sadd.s32 1, %s16
    $region7: #{tpu_custom_call.1} parent=1 // loop_footer_branch
      %15 = sbr.rel target = $region3
    $region8: #{tpu_custom_call.1} parent=1 // loop_exit
      _
    %4544 = vsyncpa [#allocation5], 1
    %s4545 = scalar_lea.sflag [#allocation5], 1
    %4546 = vsyncpa %s4545, 1

</llo_original>
